<compile_context>
chip_gen: v7x
topology: tpu7x:2x2x1
jax: 0.10.0
libtpu: 0.0.40
codegen_flags: <defaults>
</compile_context>

<pallas_src>
import functools

import jax
import jax.numpy as jnp
from jax.experimental import pallas as pl
from jax.experimental.pallas import tpu as pltpu


def _erf(z):
    # Abramowitz & Stegun 7.1.26 polynomial erf (max abs err ~1.5e-7).
    # Used instead of lax.erf to guarantee a clean Mosaic lowering while
    # matching nn.GELU()'s exact (erf-based) semantics to float precision.
    a1, a2, a3, a4, a5 = (0.254829592, -0.284496736, 1.421413741,
                          -1.453152027, 1.061405429)
    p = 0.3275911
    za = jnp.abs(z)
    t = 1.0 / (1.0 + p * za)
    poly = ((((a5 * t + a4) * t + a3) * t + a2) * t + a1) * t
    e = 1.0 - poly * jnp.exp(-za * za)
    return jnp.where(z < 0.0, -e, e)


def _gelu_exact(x):
    return 0.5 * x * (1.0 + _erf(x * 0.7071067811865476))


def _block_kernel(x_ref, g1_ref, b1_ref, wqkv_ref, wproj_ref, bproj_ref,
                  g2_ref, b2_ref, wfc1_ref, bfc1_ref, wfc2_ref, bfc2_ref,
                  out_ref, *, num_heads, ln_eps):
    x = x_ref[0]                                   # (N, C) f32
    N, C = x.shape
    D = C // num_heads
    scale = D ** -0.5

    def layer_norm(v, g, b):
        mu = jnp.mean(v, axis=-1, keepdims=True)
        ctr = v - mu
        var = jnp.mean(ctr * ctr, axis=-1, keepdims=True)
        return ctr * jax.lax.rsqrt(var + ln_eps) * g + b

    def mm(a_f32, w_bf16):                         # bf16 MXU matmul, f32 acc
        return jnp.dot(a_f32.astype(jnp.bfloat16), w_bf16,
                       preferred_element_type=jnp.float32)

    # ---------------- attention branch ----------------
    xn = layer_norm(x, g1_ref[...], b1_ref[...])
    qkv = mm(xn, wqkv_ref[...])                    # (N, 3C) f32

    attn_out = jnp.zeros((N, C), dtype=jnp.float32)
    for h in range(num_heads):                     # static unrolled loop
        qh = qkv[:, h * D:(h + 1) * D]
        kh = qkv[:, C + h * D:C + (h + 1) * D]
        vh = qkv[:, 2 * C + h * D:2 * C + (h + 1) * D]
        # scores: q @ k^T  (contraction on last dims -> no explicit transpose)
        s = jax.lax.dot_general(
            qh.astype(jnp.bfloat16), kh.astype(jnp.bfloat16),
            dimension_numbers=(((1,), (1,)), ((), ())),
            preferred_element_type=jnp.float32) * scale        # (N, N)
        m = jnp.max(s, axis=-1, keepdims=True)
        p = jnp.exp(s - m)
        l = jnp.sum(p, axis=-1, keepdims=True)
        p = p * pl.reciprocal(l, approx=True)
        # TODO(synk): attn_drop is Dropout(0.0) -> identity.
        oh = mm(p, vh.astype(jnp.bfloat16))                    # (N, D)
        # fold the head concat into the proj matmul
        attn_out = attn_out + mm(oh, wproj_ref[h * D:(h + 1) * D, :])

    x1 = x + attn_out + bproj_ref[...]             # residual (proj_drop = id)

    # ---------------- MLP branch ----------------
    xn2 = layer_norm(x1, g2_ref[...], b2_ref[...])
    h1 = mm(xn2, wfc1_ref[...]) + bfc1_ref[...]    # (N, hidden)
    h1 = _gelu_exact(h1)
    # TODO(synk): MLP Dropout(0.1) is identity in eval mode (training would
    # use pltpu.prng_seed + pltpu.stateful_bernoulli here).
    h2 = mm(h1, wfc2_ref[...]) + bfc2_ref[...]     # (N, C)
    h2 = _gelu_exact(h2)

    out_ref[0] = (x1 + h2).astype(out_ref.dtype)   # second residual


def block_forward(x, params, num_heads):
    """x: (B, N, C). params hold PyTorch-layout tensors. Returns (B, N, C)."""
    B, N, C = x.shape
    hid = params["w_fc1"].shape[0]

    # PyTorch Linear weight is (out, in): transpose to (in, out) and pre-cast
    # the matmul operands to bf16 (halves weight DMA bytes, MXU-native).
    w_qkv = params["w_qkv"].T.astype(jnp.bfloat16)     # (C, 3C)
    w_proj = params["w_proj"].T.astype(jnp.bfloat16)   # (C, C)
    w_fc1 = params["w_fc1"].T.astype(jnp.bfloat16)     # (C, hid)
    w_fc2 = params["w_fc2"].T.astype(jnp.bfloat16)     # (hid, C)

    g1 = params["ln1_g"].reshape(1, C).astype(jnp.float32)
    b1 = params["ln1_b"].reshape(1, C).astype(jnp.float32)
    g2 = params["ln2_g"].reshape(1, C).astype(jnp.float32)
    b2 = params["ln2_b"].reshape(1, C).astype(jnp.float32)
    b_proj = params["b_proj"].reshape(1, C).astype(jnp.float32)
    b_fc1 = params["b_fc1"].reshape(1, hid).astype(jnp.float32)
    b_fc2 = params["b_fc2"].reshape(1, C).astype(jnp.float32)

    kernel = functools.partial(_block_kernel, num_heads=num_heads, ln_eps=1e-5)
    const = lambda b: (0, 0)                # weights/biases resident across grid

    return pl.pallas_call(
        kernel,
        out_shape=jax.ShapeDtypeStruct((B, N, C), x.dtype),
        grid_spec=pltpu.PrefetchScalarGridSpec(
            num_scalar_prefetch=0,
            grid=(B,),
            in_specs=[
                pl.BlockSpec((1, N, C), lambda b: (b, 0, 0)),   # x
                pl.BlockSpec((1, C), const),                    # ln1 gamma
                pl.BlockSpec((1, C), const),                    # ln1 beta
                pl.BlockSpec((C, 3 * C), const),                # w_qkv
                pl.BlockSpec((C, C), const),                    # w_proj
                pl.BlockSpec((1, C), const),                    # b_proj
                pl.BlockSpec((1, C), const),                    # ln2 gamma
                pl.BlockSpec((1, C), const),                    # ln2 beta
                pl.BlockSpec((C, hid), const),                  # w_fc1
                pl.BlockSpec((1, hid), const),                  # b_fc1
                pl.BlockSpec((hid, C), const),                  # w_fc2
                pl.BlockSpec((1, C), const),                    # b_fc2
            ],
            out_specs=pl.BlockSpec((1, N, C), lambda b: (b, 0, 0)),
        ),
        compiler_params=pltpu.CompilerParams(
            dimension_semantics=("parallel",)),
    )(x, g1, b1, w_qkv, w_proj, b_proj, g2, b2, w_fc1, b_fc1, w_fc2, b_fc2)


def _reference(x, params, num_heads):
    # Pure-JAX reference of Block.forward (eval mode). Matmul operands are
    # rounded to bf16 with f32 accumulation, mirroring the kernel's precision.
    B, N, C = x.shape
    D = C // num_heads
    scale = D ** -0.5
    eps = 1e-5

    def ln(v, g, b):
        mu = v.mean(-1, keepdims=True)
        var = ((v - mu) ** 2).mean(-1, keepdims=True)
        return (v - mu) * jax.lax.rsqrt(var + eps) * g + b

    def mm(a, w_torch):   # torch-layout weight (out, in)
        return jnp.dot(a.astype(jnp.bfloat16), w_torch.T.astype(jnp.bfloat16),
                       preferred_element_type=jnp.float32)

    xn = ln(x, params["ln1_g"], params["ln1_b"])
    qkv = mm(xn, params["w_qkv"]).reshape(B, N, 3, num_heads, D)
    qkv = qkv.transpose(2, 0, 3, 1, 4)                       # (3, B, H, N, D)
    q, k, v = qkv[0], qkv[1], qkv[2]
    attn = jnp.einsum("bhqd,bhkd->bhqk",
                      q.astype(jnp.bfloat16), k.astype(jnp.bfloat16),
                      preferred_element_type=jnp.float32) * scale
    attn = jax.nn.softmax(attn, axis=-1)
    o = jnp.einsum("bhqk,bhkd->bhqd",
                   attn.astype(jnp.bfloat16), v.astype(jnp.bfloat16),
                   preferred_element_type=jnp.float32)
    o = o.transpose(0, 2, 1, 3).reshape(B, N, C)
    x1 = x + mm(o, params["w_proj"]) + params["b_proj"]

    xn2 = ln(x1, params["ln2_g"], params["ln2_b"])
    h1 = jax.nn.gelu(mm(xn2, params["w_fc1"]) + params["b_fc1"], approximate=False)
    h2 = jax.nn.gelu(mm(h1, params["w_fc2"]) + params["b_fc2"], approximate=False)
    return x1 + h2


if __name__ == "__main__":
    # Small, TPU-friendly shapes: dim multiple of 128 (lane-dense stores),
    # head_dim = 128 (lane-aligned head slices), batch 2 (>=2 parallel steps).
    B, N, C = 2, 32, 256
    num_heads = 2
    hid = int(C * 4.0)          # mlp_ratio = 4.0

    key = jax.random.PRNGKey(0)
    ks = jax.random.split(key, 12)
    sC = C ** -0.5
    sH = hid ** -0.5
    x = jax.random.normal(ks[0], (B, N, C), dtype=jnp.float32)
    params = dict(
        ln1_g=1.0 + 0.1 * jax.random.normal(ks[1], (C,), dtype=jnp.float32),
        ln1_b=0.1 * jax.random.normal(ks[2], (C,), dtype=jnp.float32),
        w_qkv=sC * jax.random.normal(ks[3], (3 * C, C), dtype=jnp.float32),
        w_proj=sC * jax.random.normal(ks[4], (C, C), dtype=jnp.float32),
        b_proj=0.02 * jax.random.normal(ks[5], (C,), dtype=jnp.float32),
        ln2_g=1.0 + 0.1 * jax.random.normal(ks[6], (C,), dtype=jnp.float32),
        ln2_b=0.1 * jax.random.normal(ks[7], (C,), dtype=jnp.float32),
        w_fc1=sC * jax.random.normal(ks[8], (hid, C), dtype=jnp.float32),
        b_fc1=0.02 * jax.random.normal(ks[9], (hid,), dtype=jnp.float32),
        w_fc2=sH * jax.random.normal(ks[10], (C, hid), dtype=jnp.float32),
        b_fc2=0.02 * jax.random.normal(ks[11], (C,), dtype=jnp.float32),
    )

    out = block_forward(x, params, num_heads)
    out = jax.block_until_ready(out)

    ref = _reference(x, params, num_heads)
    assert out.shape == (B, N, C), out.shape
    assert jnp.allclose(out, ref, atol=1e-2, rtol=1e-2), (
        "mismatch vs reference; max abs diff = %f"
        % float(jnp.max(jnp.abs(out - ref))))

    print("KERNEL_OK")
</pallas_src>

<mosaic_0001>
module attributes {stable_mosaic.version = 11 : i64} {
  func.func @_block_kernel(%arg0: i32, %arg1: memref<1x32x256xf32, #tpu.memory_space<vmem>>, %arg2: memref<1x256xf32, #tpu.memory_space<vmem>>, %arg3: memref<1x256xf32, #tpu.memory_space<vmem>>, %arg4: memref<256x768xbf16, #tpu.memory_space<vmem>>, %arg5: memref<256x256xbf16, #tpu.memory_space<vmem>>, %arg6: memref<1x256xf32, #tpu.memory_space<vmem>>, %arg7: memref<1x256xf32, #tpu.memory_space<vmem>>, %arg8: memref<1x256xf32, #tpu.memory_space<vmem>>, %arg9: memref<256x1024xbf16, #tpu.memory_space<vmem>>, %arg10: memref<1x1024xf32, #tpu.memory_space<vmem>>, %arg11: memref<1024x256xbf16, #tpu.memory_space<vmem>>, %arg12: memref<1x256xf32, #tpu.memory_space<vmem>>, %arg13: memref<1x32x256xf32, #tpu.memory_space<vmem>>) attributes {dimension_semantics = [#tpu.dimension_semantics<parallel>], iteration_bounds = array<i64: 2>, scalar_prefetch = 0 : i64, scratch_operands = 0 : i64, tpu.core_type = #tpu.core_type<tc>, window_params = [{transform_indices = @transform_0, window_bounds = array<i64: 1, 32, 256>}, {pipeline_mode = #tpu.pipeline_mode<synchronous>, transform_indices = @transform_1, window_bounds = array<i64: 1, 256>}, {pipeline_mode = #tpu.pipeline_mode<synchronous>, transform_indices = @transform_2, window_bounds = array<i64: 1, 256>}, {pipeline_mode = #tpu.pipeline_mode<synchronous>, transform_indices = @transform_3, window_bounds = array<i64: 256, 768>}, {pipeline_mode = #tpu.pipeline_mode<synchronous>, transform_indices = @transform_4, window_bounds = array<i64: 256, 256>}, {pipeline_mode = #tpu.pipeline_mode<synchronous>, transform_indices = @transform_5, window_bounds = array<i64: 1, 256>}, {pipeline_mode = #tpu.pipeline_mode<synchronous>, transform_indices = @transform_6, window_bounds = array<i64: 1, 256>}, {pipeline_mode = #tpu.pipeline_mode<synchronous>, transform_indices = @transform_7, window_bounds = array<i64: 1, 256>}, {pipeline_mode = #tpu.pipeline_mode<synchronous>, transform_indices = @transform_8, window_bounds = array<i64: 256, 1024>}, {pipeline_mode = #tpu.pipeline_mode<synchronous>, transform_indices = @transform_9, window_bounds = array<i64: 1, 1024>}, {pipeline_mode = #tpu.pipeline_mode<synchronous>, transform_indices = @transform_10, window_bounds = array<i64: 1024, 256>}, {pipeline_mode = #tpu.pipeline_mode<synchronous>, transform_indices = @transform_11, window_bounds = array<i64: 1, 256>}, {transform_indices = @transform_12, window_bounds = array<i64: 1, 32, 256>}]} {
    %c0 = arith.constant 0 : index
    %c0_0 = arith.constant 0 : index
    %c0_1 = arith.constant 0 : index
    %0 = vector.load %arg1[%c0, %c0_0, %c0_1] : memref<1x32x256xf32, #tpu.memory_space<vmem>>, vector<1x32x256xf32>
    %1 = vector.shape_cast %0 : vector<1x32x256xf32> to vector<32x256xf32>
    %c0_2 = arith.constant 0 : index
    %c0_3 = arith.constant 0 : index
    %2 = vector.load %arg2[%c0_2, %c0_3] : memref<1x256xf32, #tpu.memory_space<vmem>>, vector<1x256xf32>
    %c0_4 = arith.constant 0 : index
    %c0_5 = arith.constant 0 : index
    %3 = vector.load %arg3[%c0_4, %c0_5] : memref<1x256xf32, #tpu.memory_space<vmem>>, vector<1x256xf32>
    %cst = arith.constant dense<0.000000e+00> : vector<32xf32>
    %4 = vector.multi_reduction <add>, %1, %cst [1] : vector<32x256xf32> to vector<32xf32>
    %5 = vector.shape_cast %4 : vector<32xf32> to vector<32x1xf32>
    %cst_6 = arith.constant 2.560000e+02 : f32
    %6 = vector.broadcast %cst_6 : f32 to vector<32x1xf32>
    %7 = arith.divf %5, %6 : vector<32x1xf32>
    %8 = vector.broadcast %7 : vector<32x1xf32> to vector<32x256xf32>
    %9 = arith.subf %1, %8 : vector<32x256xf32>
    %10 = arith.mulf %9, %9 : vector<32x256xf32>
    %cst_7 = arith.constant dense<0.000000e+00> : vector<32xf32>
    %11 = vector.multi_reduction <add>, %10, %cst_7 [1] : vector<32x256xf32> to vector<32xf32>
    %12 = vector.shape_cast %11 : vector<32xf32> to vector<32x1xf32>
    %cst_8 = arith.constant 2.560000e+02 : f32
    %13 = vector.broadcast %cst_8 : f32 to vector<32x1xf32>
    %14 = arith.divf %12, %13 : vector<32x1xf32>
    %cst_9 = arith.constant 9.99999974E-6 : f32
    %15 = vector.broadcast %cst_9 : f32 to vector<32x1xf32>
    %16 = arith.addf %14, %15 : vector<32x1xf32>
    %17 = math.rsqrt %16 : vector<32x1xf32>
    %18 = vector.broadcast %17 : vector<32x1xf32> to vector<32x256xf32>
    %19 = arith.mulf %9, %18 : vector<32x256xf32>
    %20 = vector.broadcast %2 : vector<1x256xf32> to vector<32x256xf32>
    %21 = arith.mulf %19, %20 : vector<32x256xf32>
    %22 = vector.broadcast %3 : vector<1x256xf32> to vector<32x256xf32>
    %23 = arith.addf %21, %22 : vector<32x256xf32>
    %c0_10 = arith.constant 0 : index
    %c0_11 = arith.constant 0 : index
    %24 = vector.load %arg4[%c0_10, %c0_11] : memref<256x768xbf16, #tpu.memory_space<vmem>>, vector<256x768xbf16>
    %25 = arith.truncf %23 : vector<32x256xf32> to vector<32x256xbf16>
    %cst_12 = arith.constant dense<0.000000e+00> : vector<32x768xf32>
    %26 = tpu.matmul %25, %24, %cst_12 {dimension_numbers = #tpu.dot_dimension_numbers<[1], [0], [0], [1], [0, 0, 1, 1], [], []>} : vector<32x256xbf16>, vector<256x768xbf16>, vector<32x768xf32> -> vector<32x768xf32>
    %cst_13 = arith.constant 0.000000e+00 : f32
    %27 = vector.broadcast %cst_13 : f32 to vector<32x256xf32>
    %28 = vector.extract_strided_slice %26 {offsets = [0, 0], sizes = [32, 128], strides = [1, 1]} : vector<32x768xf32> to vector<32x128xf32>
    %29 = vector.extract_strided_slice %26 {offsets = [0, 256], sizes = [32, 128], strides = [1, 1]} : vector<32x768xf32> to vector<32x128xf32>
    %30 = vector.extract_strided_slice %26 {offsets = [0, 512], sizes = [32, 128], strides = [1, 1]} : vector<32x768xf32> to vector<32x128xf32>
    %31 = arith.truncf %28 : vector<32x128xf32> to vector<32x128xbf16>
    %32 = arith.truncf %29 : vector<32x128xf32> to vector<32x128xbf16>
    %cst_14 = arith.constant dense<0.000000e+00> : vector<32x32xf32>
    %33 = tpu.matmul %31, %32, %cst_14 {dimension_numbers = #tpu.dot_dimension_numbers<[1], [1], [0], [0], [0, 0, 1, 0], [], []>} : vector<32x128xbf16>, vector<32x128xbf16>, vector<32x32xf32> -> vector<32x32xf32>
    %cst_15 = arith.constant 0.0883883461 : f32
    %34 = vector.broadcast %cst_15 : f32 to vector<32x32xf32>
    %35 = arith.mulf %33, %34 : vector<32x32xf32>
    %cst_16 = arith.constant dense<0xFF800000> : vector<32xf32>
    %36 = vector.multi_reduction <maximumf>, %35, %cst_16 [1] : vector<32x32xf32> to vector<32xf32>
    %37 = vector.shape_cast %36 : vector<32xf32> to vector<32x1xf32>
    %38 = vector.broadcast %37 : vector<32x1xf32> to vector<32x32xf32>
    %39 = arith.subf %35, %38 : vector<32x32xf32>
    %40 = math.exp %39 : vector<32x32xf32>
    %cst_17 = arith.constant dense<0.000000e+00> : vector<32xf32>
    %41 = vector.multi_reduction <add>, %40, %cst_17 [1] : vector<32x32xf32> to vector<32xf32>
    %42 = vector.shape_cast %41 : vector<32xf32> to vector<32x1xf32>
    %43 = tpu.reciprocal %42 {approx = true} : vector<32x1xf32> -> vector<32x1xf32>
    %44 = vector.broadcast %43 : vector<32x1xf32> to vector<32x32xf32>
    %45 = arith.mulf %40, %44 : vector<32x32xf32>
    %46 = arith.truncf %30 : vector<32x128xf32> to vector<32x128xbf16>
    %47 = arith.truncf %45 : vector<32x32xf32> to vector<32x32xbf16>
    %cst_18 = arith.constant dense<0.000000e+00> : vector<32x128xf32>
    %48 = tpu.matmul %47, %46, %cst_18 {dimension_numbers = #tpu.dot_dimension_numbers<[1], [0], [0], [1], [0, 0, 1, 1], [], []>} : vector<32x32xbf16>, vector<32x128xbf16>, vector<32x128xf32> -> vector<32x128xf32>
    %c0_19 = arith.constant 0 : index
    %c0_20 = arith.constant 0 : index
    %49 = vector.load %arg5[%c0_19, %c0_20] : memref<256x256xbf16, #tpu.memory_space<vmem>>, vector<128x256xbf16>
    %50 = arith.truncf %48 : vector<32x128xf32> to vector<32x128xbf16>
    %cst_21 = arith.constant dense<0.000000e+00> : vector<32x256xf32>
    %51 = tpu.matmul %50, %49, %cst_21 {dimension_numbers = #tpu.dot_dimension_numbers<[1], [0], [0], [1], [0, 0, 1, 1], [], []>} : vector<32x128xbf16>, vector<128x256xbf16>, vector<32x256xf32> -> vector<32x256xf32>
    %52 = arith.addf %27, %51 : vector<32x256xf32>
    %53 = vector.extract_strided_slice %26 {offsets = [0, 128], sizes = [32, 128], strides = [1, 1]} : vector<32x768xf32> to vector<32x128xf32>
    %54 = vector.extract_strided_slice %26 {offsets = [0, 384], sizes = [32, 128], strides = [1, 1]} : vector<32x768xf32> to vector<32x128xf32>
    %55 = vector.extract_strided_slice %26 {offsets = [0, 640], sizes = [32, 128], strides = [1, 1]} : vector<32x768xf32> to vector<32x128xf32>
    %56 = arith.truncf %53 : vector<32x128xf32> to vector<32x128xbf16>
    %57 = arith.truncf %54 : vector<32x128xf32> to vector<32x128xbf16>
    %cst_22 = arith.constant dense<0.000000e+00> : vector<32x32xf32>
    %58 = tpu.matmul %56, %57, %cst_22 {dimension_numbers = #tpu.dot_dimension_numbers<[1], [1], [0], [0], [0, 0, 1, 0], [], []>} : vector<32x128xbf16>, vector<32x128xbf16>, vector<32x32xf32> -> vector<32x32xf32>
    %cst_23 = arith.constant 0.0883883461 : f32
    %59 = vector.broadcast %cst_23 : f32 to vector<32x32xf32>
    %60 = arith.mulf %58, %59 : vector<32x32xf32>
    %cst_24 = arith.constant dense<0xFF800000> : vector<32xf32>
    %61 = vector.multi_reduction <maximumf>, %60, %cst_24 [1] : vector<32x32xf32> to vector<32xf32>
    %62 = vector.shape_cast %61 : vector<32xf32> to vector<32x1xf32>
    %63 = vector.broadcast %62 : vector<32x1xf32> to vector<32x32xf32>
    %64 = arith.subf %60, %63 : vector<32x32xf32>
    %65 = math.exp %64 : vector<32x32xf32>
    %cst_25 = arith.constant dense<0.000000e+00> : vector<32xf32>
    %66 = vector.multi_reduction <add>, %65, %cst_25 [1] : vector<32x32xf32> to vector<32xf32>
    %67 = vector.shape_cast %66 : vector<32xf32> to vector<32x1xf32>
    %68 = tpu.reciprocal %67 {approx = true} : vector<32x1xf32> -> vector<32x1xf32>
    %69 = vector.broadcast %68 : vector<32x1xf32> to vector<32x32xf32>
    %70 = arith.mulf %65, %69 : vector<32x32xf32>
    %71 = arith.truncf %55 : vector<32x128xf32> to vector<32x128xbf16>
    %72 = arith.truncf %70 : vector<32x32xf32> to vector<32x32xbf16>
    %cst_26 = arith.constant dense<0.000000e+00> : vector<32x128xf32>
    %73 = tpu.matmul %72, %71, %cst_26 {dimension_numbers = #tpu.dot_dimension_numbers<[1], [0], [0], [1], [0, 0, 1, 1], [], []>} : vector<32x32xbf16>, vector<32x128xbf16>, vector<32x128xf32> -> vector<32x128xf32>
    %c128 = arith.constant 128 : index
    %c0_27 = arith.constant 0 : index
    %74 = vector.load %arg5[%c128, %c0_27] : memref<256x256xbf16, #tpu.memory_space<vmem>>, vector<128x256xbf16>
    %75 = arith.truncf %73 : vector<32x128xf32> to vector<32x128xbf16>
    %cst_28 = arith.constant dense<0.000000e+00> : vector<32x256xf32>
    %76 = tpu.matmul %75, %74, %cst_28 {dimension_numbers = #tpu.dot_dimension_numbers<[1], [0], [0], [1], [0, 0, 1, 1], [], []>} : vector<32x128xbf16>, vector<128x256xbf16>, vector<32x256xf32> -> vector<32x256xf32>
    %77 = arith.addf %52, %76 : vector<32x256xf32>
    %78 = arith.addf %1, %77 : vector<32x256xf32>
    %c0_29 = arith.constant 0 : index
    %c0_30 = arith.constant 0 : index
    %79 = vector.load %arg6[%c0_29, %c0_30] : memref<1x256xf32, #tpu.memory_space<vmem>>, vector<1x256xf32>
    %80 = vector.broadcast %79 : vector<1x256xf32> to vector<32x256xf32>
    %81 = arith.addf %78, %80 : vector<32x256xf32>
    %c0_31 = arith.constant 0 : index
    %c0_32 = arith.constant 0 : index
    %82 = vector.load %arg7[%c0_31, %c0_32] : memref<1x256xf32, #tpu.memory_space<vmem>>, vector<1x256xf32>
    %c0_33 = arith.constant 0 : index
    %c0_34 = arith.constant 0 : index
    %83 = vector.load %arg8[%c0_33, %c0_34] : memref<1x256xf32, #tpu.memory_space<vmem>>, vector<1x256xf32>
    %cst_35 = arith.constant dense<0.000000e+00> : vector<32xf32>
    %84 = vector.multi_reduction <add>, %81, %cst_35 [1] : vector<32x256xf32> to vector<32xf32>
    %85 = vector.shape_cast %84 : vector<32xf32> to vector<32x1xf32>
    %cst_36 = arith.constant 2.560000e+02 : f32
    %86 = vector.broadcast %cst_36 : f32 to vector<32x1xf32>
    %87 = arith.divf %85, %86 : vector<32x1xf32>
    %88 = vector.broadcast %87 : vector<32x1xf32> to vector<32x256xf32>
    %89 = arith.subf %81, %88 : vector<32x256xf32>
    %90 = arith.mulf %89, %89 : vector<32x256xf32>
    %cst_37 = arith.constant dense<0.000000e+00> : vector<32xf32>
    %91 = vector.multi_reduction <add>, %90, %cst_37 [1] : vector<32x256xf32> to vector<32xf32>
    %92 = vector.shape_cast %91 : vector<32xf32> to vector<32x1xf32>
    %cst_38 = arith.constant 2.560000e+02 : f32
    %93 = vector.broadcast %cst_38 : f32 to vector<32x1xf32>
    %94 = arith.divf %92, %93 : vector<32x1xf32>
    %cst_39 = arith.constant 9.99999974E-6 : f32
    %95 = vector.broadcast %cst_39 : f32 to vector<32x1xf32>
    %96 = arith.addf %94, %95 : vector<32x1xf32>
    %97 = math.rsqrt %96 : vector<32x1xf32>
    %98 = vector.broadcast %97 : vector<32x1xf32> to vector<32x256xf32>
    %99 = arith.mulf %89, %98 : vector<32x256xf32>
    %100 = vector.broadcast %82 : vector<1x256xf32> to vector<32x256xf32>
    %101 = arith.mulf %99, %100 : vector<32x256xf32>
    %102 = vector.broadcast %83 : vector<1x256xf32> to vector<32x256xf32>
    %103 = arith.addf %101, %102 : vector<32x256xf32>
    %c0_40 = arith.constant 0 : index
    %c0_41 = arith.constant 0 : index
    %104 = vector.load %arg9[%c0_40, %c0_41] : memref<256x1024xbf16, #tpu.memory_space<vmem>>, vector<256x1024xbf16>
    %105 = arith.truncf %103 : vector<32x256xf32> to vector<32x256xbf16>
    %cst_42 = arith.constant dense<0.000000e+00> : vector<32x1024xf32>
    %106 = tpu.matmul %105, %104, %cst_42 {dimension_numbers = #tpu.dot_dimension_numbers<[1], [0], [0], [1], [0, 0, 1, 1], [], []>} : vector<32x256xbf16>, vector<256x1024xbf16>, vector<32x1024xf32> -> vector<32x1024xf32>
    %c0_43 = arith.constant 0 : index
    %c0_44 = arith.constant 0 : index
    %107 = vector.load %arg10[%c0_43, %c0_44] : memref<1x1024xf32, #tpu.memory_space<vmem>>, vector<1x1024xf32>
    %108 = vector.broadcast %107 : vector<1x1024xf32> to vector<32x1024xf32>
    %109 = arith.addf %106, %108 : vector<32x1024xf32>
    %cst_45 = arith.constant 5.000000e-01 : f32
    %110 = vector.broadcast %cst_45 : f32 to vector<32x1024xf32>
    %111 = arith.mulf %110, %109 : vector<32x1024xf32>
    %cst_46 = arith.constant 0.707106769 : f32
    %112 = vector.broadcast %cst_46 : f32 to vector<32x1024xf32>
    %113 = arith.mulf %109, %112 : vector<32x1024xf32>
    %114 = math.absf %113 : vector<32x1024xf32>
    %cst_47 = arith.constant 0.327591091 : f32
    %115 = vector.broadcast %cst_47 : f32 to vector<32x1024xf32>
    %116 = arith.mulf %115, %114 : vector<32x1024xf32>
    %cst_48 = arith.constant 1.000000e+00 : f32
    %117 = vector.broadcast %cst_48 : f32 to vector<32x1024xf32>
    %118 = arith.addf %117, %116 : vector<32x1024xf32>
    %cst_49 = arith.constant 1.000000e+00 : f32
    %119 = vector.broadcast %cst_49 : f32 to vector<32x1024xf32>
    %120 = arith.divf %119, %118 : vector<32x1024xf32>
    %cst_50 = arith.constant 1.06140542 : f32
    %121 = vector.broadcast %cst_50 : f32 to vector<32x1024xf32>
    %122 = arith.mulf %121, %120 : vector<32x1024xf32>
    %cst_51 = arith.constant -1.45315206 : f32
    %123 = vector.broadcast %cst_51 : f32 to vector<32x1024xf32>
    %124 = arith.addf %122, %123 : vector<32x1024xf32>
    %125 = arith.mulf %124, %120 : vector<32x1024xf32>
    %cst_52 = arith.constant 1.42141378 : f32
    %126 = vector.broadcast %cst_52 : f32 to vector<32x1024xf32>
    %127 = arith.addf %125, %126 : vector<32x1024xf32>
    %128 = arith.mulf %127, %120 : vector<32x1024xf32>
    %cst_53 = arith.constant -0.284496725 : f32
    %129 = vector.broadcast %cst_53 : f32 to vector<32x1024xf32>
    %130 = arith.addf %128, %129 : vector<32x1024xf32>
    %131 = arith.mulf %130, %120 : vector<32x1024xf32>
    %cst_54 = arith.constant 0.254829586 : f32
    %132 = vector.broadcast %cst_54 : f32 to vector<32x1024xf32>
    %133 = arith.addf %131, %132 : vector<32x1024xf32>
    %134 = arith.mulf %133, %120 : vector<32x1024xf32>
    %cst_55 = arith.constant 0.000000e+00 : f32
    %135 = vector.broadcast %cst_55 : f32 to vector<32x1024xf32>
    %136 = arith.subf %135, %114 : vector<32x1024xf32>
    %137 = arith.mulf %136, %114 : vector<32x1024xf32>
    %138 = math.exp %137 : vector<32x1024xf32>
    %139 = arith.mulf %134, %138 : vector<32x1024xf32>
    %cst_56 = arith.constant 1.000000e+00 : f32
    %140 = vector.broadcast %cst_56 : f32 to vector<32x1024xf32>
    %141 = arith.subf %140, %139 : vector<32x1024xf32>
    %cst_57 = arith.constant 0.000000e+00 : f32
    %142 = vector.broadcast %cst_57 : f32 to vector<32x1024xf32>
    %143 = arith.cmpf olt, %113, %142 : vector<32x1024xf32>
    %cst_58 = arith.constant 0.000000e+00 : f32
    %144 = vector.broadcast %cst_58 : f32 to vector<32x1024xf32>
    %145 = arith.subf %144, %141 : vector<32x1024xf32>
    %146 = arith.select %143, %145, %141 : vector<32x1024xi1>, vector<32x1024xf32>
    %cst_59 = arith.constant 1.000000e+00 : f32
    %147 = vector.broadcast %cst_59 : f32 to vector<32x1024xf32>
    %148 = arith.addf %147, %146 : vector<32x1024xf32>
    %149 = arith.mulf %111, %148 : vector<32x1024xf32>
    %c0_60 = arith.constant 0 : index
    %c0_61 = arith.constant 0 : index
    %150 = vector.load %arg11[%c0_60, %c0_61] : memref<1024x256xbf16, #tpu.memory_space<vmem>>, vector<1024x256xbf16>
    %151 = arith.truncf %149 : vector<32x1024xf32> to vector<32x1024xbf16>
    %cst_62 = arith.constant dense<0.000000e+00> : vector<32x256xf32>
    %152 = tpu.matmul %151, %150, %cst_62 {dimension_numbers = #tpu.dot_dimension_numbers<[1], [0], [0], [1], [0, 0, 1, 1], [], []>} : vector<32x1024xbf16>, vector<1024x256xbf16>, vector<32x256xf32> -> vector<32x256xf32>
    %c0_63 = arith.constant 0 : index
    %c0_64 = arith.constant 0 : index
    %153 = vector.load %arg12[%c0_63, %c0_64] : memref<1x256xf32, #tpu.memory_space<vmem>>, vector<1x256xf32>
    %154 = vector.broadcast %153 : vector<1x256xf32> to vector<32x256xf32>
    %155 = arith.addf %152, %154 : vector<32x256xf32>
    %cst_65 = arith.constant 5.000000e-01 : f32
    %156 = vector.broadcast %cst_65 : f32 to vector<32x256xf32>
    %157 = arith.mulf %156, %155 : vector<32x256xf32>
    %cst_66 = arith.constant 0.707106769 : f32
    %158 = vector.broadcast %cst_66 : f32 to vector<32x256xf32>
    %159 = arith.mulf %155, %158 : vector<32x256xf32>
    %160 = math.absf %159 : vector<32x256xf32>
    %cst_67 = arith.constant 0.327591091 : f32
    %161 = vector.broadcast %cst_67 : f32 to vector<32x256xf32>
    %162 = arith.mulf %161, %160 : vector<32x256xf32>
    %cst_68 = arith.constant 1.000000e+00 : f32
    %163 = vector.broadcast %cst_68 : f32 to vector<32x256xf32>
    %164 = arith.addf %163, %162 : vector<32x256xf32>
    %cst_69 = arith.constant 1.000000e+00 : f32
    %165 = vector.broadcast %cst_69 : f32 to vector<32x256xf32>
    %166 = arith.divf %165, %164 : vector<32x256xf32>
    %cst_70 = arith.constant 1.06140542 : f32
    %167 = vector.broadcast %cst_70 : f32 to vector<32x256xf32>
    %168 = arith.mulf %167, %166 : vector<32x256xf32>
    %cst_71 = arith.constant -1.45315206 : f32
    %169 = vector.broadcast %cst_71 : f32 to vector<32x256xf32>
    %170 = arith.addf %168, %169 : vector<32x256xf32>
    %171 = arith.mulf %170, %166 : vector<32x256xf32>
    %cst_72 = arith.constant 1.42141378 : f32
    %172 = vector.broadcast %cst_72 : f32 to vector<32x256xf32>
    %173 = arith.addf %171, %172 : vector<32x256xf32>
    %174 = arith.mulf %173, %166 : vector<32x256xf32>
    %cst_73 = arith.constant -0.284496725 : f32
    %175 = vector.broadcast %cst_73 : f32 to vector<32x256xf32>
    %176 = arith.addf %174, %175 : vector<32x256xf32>
    %177 = arith.mulf %176, %166 : vector<32x256xf32>
    %cst_74 = arith.constant 0.254829586 : f32
    %178 = vector.broadcast %cst_74 : f32 to vector<32x256xf32>
    %179 = arith.addf %177, %178 : vector<32x256xf32>
    %180 = arith.mulf %179, %166 : vector<32x256xf32>
    %cst_75 = arith.constant 0.000000e+00 : f32
    %181 = vector.broadcast %cst_75 : f32 to vector<32x256xf32>
    %182 = arith.subf %181, %160 : vector<32x256xf32>
    %183 = arith.mulf %182, %160 : vector<32x256xf32>
    %184 = math.exp %183 : vector<32x256xf32>
    %185 = arith.mulf %180, %184 : vector<32x256xf32>
    %cst_76 = arith.constant 1.000000e+00 : f32
    %186 = vector.broadcast %cst_76 : f32 to vector<32x256xf32>
    %187 = arith.subf %186, %185 : vector<32x256xf32>
    %cst_77 = arith.constant 0.000000e+00 : f32
    %188 = vector.broadcast %cst_77 : f32 to vector<32x256xf32>
    %189 = arith.cmpf olt, %159, %188 : vector<32x256xf32>
    %cst_78 = arith.constant 0.000000e+00 : f32
    %190 = vector.broadcast %cst_78 : f32 to vector<32x256xf32>
    %191 = arith.subf %190, %187 : vector<32x256xf32>
    %192 = arith.select %189, %191, %187 : vector<32x256xi1>, vector<32x256xf32>
    %cst_79 = arith.constant 1.000000e+00 : f32
    %193 = vector.broadcast %cst_79 : f32 to vector<32x256xf32>
    %194 = arith.addf %193, %192 : vector<32x256xf32>
    %195 = arith.mulf %157, %194 : vector<32x256xf32>
    %196 = arith.addf %81, %195 : vector<32x256xf32>
    %c0_80 = arith.constant 0 : index
    %c0_81 = arith.constant 0 : index
    %c0_82 = arith.constant 0 : index
    %197 = vector.load %arg13[%c0_80, %c0_81, %c0_82] : memref<1x32x256xf32, #tpu.memory_space<vmem>>, vector<1x32x256xf32>
    %198 = vector.shape_cast %197 : vector<1x32x256xf32> to vector<32x256xf32>
    %199 = vector.shape_cast %196 : vector<32x256xf32> to vector<1x32x256xf32>
    tpu.vector_store %arg13[%c0_80, %c0_81, %c0_82], %199 {strides = array<i32>} : memref<1x32x256xf32, #tpu.memory_space<vmem>>, vector<1x32x256xf32>,
    return
  }
  func.func @transform_0(%arg0: i32) -> (i32, i32, i32) {
    %c0_i32 = arith.constant 0 : i32
    %c0_i32_0 = arith.constant 0 : i32
    %c0_i32_1 = arith.constant 0 : i32
    return %arg0, %c0_i32, %c0_i32_0 : i32, i32, i32
  }
  func.func @transform_1(%arg0: i32) -> (i32, i32) {
    %c0_i32 = arith.constant 0 : i32
    %c0_i32_0 = arith.constant 0 : i32
    %c0_i32_1 = arith.constant 0 : i32
    return %c0_i32, %c0_i32_0 : i32, i32
  }
  func.func @transform_2(%arg0: i32) -> (i32, i32) {
    %c0_i32 = arith.constant 0 : i32
    %c0_i32_0 = arith.constant 0 : i32
    %c0_i32_1 = arith.constant 0 : i32
    return %c0_i32, %c0_i32_0 : i32, i32
  }
  func.func @transform_3(%arg0: i32) -> (i32, i32) {
    %c0_i32 = arith.constant 0 : i32
    %c0_i32_0 = arith.constant 0 : i32
    %c0_i32_1 = arith.constant 0 : i32
    return %c0_i32, %c0_i32_0 : i32, i32
  }
  func.func @transform_4(%arg0: i32) -> (i32, i32) {
    %c0_i32 = arith.constant 0 : i32
    %c0_i32_0 = arith.constant 0 : i32
    %c0_i32_1 = arith.constant 0 : i32
    return %c0_i32, %c0_i32_0 : i32, i32
  }
  func.func @transform_5(%arg0: i32) -> (i32, i32) {
    %c0_i32 = arith.constant 0 : i32
    %c0_i32_0 = arith.constant 0 : i32
    %c0_i32_1 = arith.constant 0 : i32
    return %c0_i32, %c0_i32_0 : i32, i32
  }
  func.func @transform_6(%arg0: i32) -> (i32, i32) {
    %c0_i32 = arith.constant 0 : i32
    %c0_i32_0 = arith.constant 0 : i32
    %c0_i32_1 = arith.constant 0 : i32
    return %c0_i32, %c0_i32_0 : i32, i32
  }
  func.func @transform_7(%arg0: i32) -> (i32, i32) {
    %c0_i32 = arith.constant 0 : i32
    %c0_i32_0 = arith.constant 0 : i32
    %c0_i32_1 = arith.constant 0 : i32
    return %c0_i32, %c0_i32_0 : i32, i32
  }
  func.func @transform_8(%arg0: i32) -> (i32, i32) {
    %c0_i32 = arith.constant 0 : i32
    %c0_i32_0 = arith.constant 0 : i32
    %c0_i32_1 = arith.constant 0 : i32
    return %c0_i32, %c0_i32_0 : i32, i32
  }
  func.func @transform_9(%arg0: i32) -> (i32, i32) {
    %c0_i32 = arith.constant 0 : i32
    %c0_i32_0 = arith.constant 0 : i32
    %c0_i32_1 = arith.constant 0 : i32
    return %c0_i32, %c0_i32_0 : i32, i32
  }
  func.func @transform_10(%arg0: i32) -> (i32, i32) {
    %c0_i32 = arith.constant 0 : i32
    %c0_i32_0 = arith.constant 0 : i32
    %c0_i32_1 = arith.constant 0 : i32
    return %c0_i32, %c0_i32_0 : i32, i32
  }
  func.func @transform_11(%arg0: i32) -> (i32, i32) {
    %c0_i32 = arith.constant 0 : i32
    %c0_i32_0 = arith.constant 0 : i32
    %c0_i32_1 = arith.constant 0 : i32
    return %c0_i32, %c0_i32_0 : i32, i32
  }
  func.func @transform_12(%arg0: i32) -> (i32, i32, i32) {
    %c0_i32 = arith.constant 0 : i32
    %c0_i32_0 = arith.constant 0 : i32
    %c0_i32_1 = arith.constant 0 : i32
    return %arg0, %c0_i32, %c0_i32_0 : i32, i32, i32
  }
}

</mosaic_0001>

<llo_original>
// kernel: tpu_custom_call.1
$region0: #{tpu_custom_call.1}
  #allocation0 [shape = 'u32[]', space=smem, size = 0x4, offset = 0x4, fixed_abs, tag = 'smem constant byte address 0x4 - core index']
  #allocation1 [shape = 'u32[144,128]{1,0:T(1,128)}', space=vmem, size = 0x12000, scoped, tag = 'internal scratch']
  %s0 = inlined_call_operand.hbm [shape: f32[2,32,256], index: 0, kind: input, shape index: {}]
  %s1 = inlined_call_operand.vmem [shape: f32[1,256], index: 1, kind: input, shape index: {}]
  %s2 = inlined_call_operand.vmem [shape: f32[1,256], index: 2, kind: input, shape index: {}]
  %s3 = inlined_call_operand.hbm [shape: bf16[256,768], index: 3, kind: input, shape index: {}]
  %s4 = inlined_call_operand.hbm [shape: bf16[256,256], index: 4, kind: input, shape index: {}]
  %s5 = inlined_call_operand.vmem [shape: f32[1,256], index: 5, kind: input, shape index: {}]
  %s6 = inlined_call_operand.vmem [shape: f32[1,256], index: 6, kind: input, shape index: {}]
  %s7 = inlined_call_operand.vmem [shape: f32[1,256], index: 7, kind: input, shape index: {}]
  %s8 = inlined_call_operand.hbm [shape: bf16[256,1024], index: 8, kind: input, shape index: {}]
  %s9 = inlined_call_operand.vmem [shape: f32[1,1024], index: 9, kind: input, shape index: {}]
  %s10 = inlined_call_operand.hbm [shape: bf16[1024,256], index: 10, kind: input, shape index: {}]
  %s11 = inlined_call_operand.vmem [shape: f32[1,256], index: 11, kind: input, shape index: {}]
  %s12 = inlined_call_operand.hbm [shape: f32[2,32,256], index: 12, kind: output, shape index: {}]
  %s13 = sld [smem:[#allocation0]]
  $region101: #{tpu_custom_call.1} parent=0
    _
  %s15 = ssub.s32 1, %s13
  %s16 = scalar_select 0, %s15, %s13
  $region1: #{tpu_custom_call.1} parent=0
    #allocation2 [shape = 'u8[65536]{0}', space=vmem, size = 0x10000, scoped, tag = 'input window, operand 0']
    #allocation3 [shape = 's32[2]{0}', space=sflag, size = 0x8, scoped, tag = 'scoped memory for tpu_custom_call.1']
    #allocation4 [shape = 's32[2]{0}', space=sflag, size = 0x8, scoped, tag = 'scoped memory for tpu_custom_call.1']
    #allocation5 [shape = 'u8[393216]{0}', space=vmem, size = 0x60000, scoped, tag = 'input window, operand 3, single buffered']
    #allocation6 [shape = 's32[1]{0}', space=sflag, size = 0x4, scoped, tag = 'scoped memory for tpu_custom_call.1']
    #allocation7 [shape = 'u8[131072]{0}', space=vmem, size = 0x20000, scoped, tag = 'input window, operand 4, single buffered']
    #allocation8 [shape = 'u8[524288]{0}', space=vmem, size = 0x80000, scoped, tag = 'input window, operand 8, single buffered']
    #allocation9 [shape = 's32[1]{0}', space=sflag, size = 0x4, scoped, tag = 'scoped memory for tpu_custom_call.1']
    #allocation10 [shape = 'u8[524288]{0}', space=vmem, size = 0x80000, scoped, tag = 'input window, operand 10, single buffered']
    #allocation11 [shape = 'u8[65536]{0}', space=vmem, size = 0x10000, scoped, tag = 'output window, operand 0']
    %17 = vsyncpa [#allocation3], 0
    %s18 = scalar_lea.sflag [#allocation3], 1
    %19 = vsyncpa %s18, 0
    %20 = vsyncpa [#allocation6], 0
    %21 = vsyncpa [#allocation9], 0
    %22 = vsyncpa [#allocation4], 0
    %s23 = scalar_lea.sflag [#allocation4], 1
    %24 = vsyncpa %s23, 0
    loop: start=0, step=1, limit=4
    $region2: #{tpu_custom_call.1} parent=1 // loop_pre_header
      _
    $region3: #{tpu_custom_call.1} parent=1 // loop_header
      %s26 = sphi 0, %s30
      %p27 = scmp.ge.s32.totalorder %s26, 4
      %s36 = sphi 0, %s38
      %s39 = sphi 0, %s36
      %s40 = sphi 0, %s39
      %s56 = sphi 0, %s40
      %s60 = sphi 0, %s60
      %s62 = sphi 0, %s60
      %s63 = sphi 0, %s62
      %s77 = sphi 0, %s63
      %s81 = sphi 0, %s81
      %s83 = sphi 0, %s81
      %s84 = sphi 0, %s83
      %s98 = sphi 0, %s84
      %s102 = sphi 0, %s102
      %s104 = sphi 0, %s102
      %s105 = sphi 0, %s104
      %s119 = sphi 0, %s105
      %s123 = sphi 0, %s123
      %s125 = sphi 0, %s123
      %s126 = sphi 0, %s125
      %s140 = sphi 0, %s126
      %s144 = sphi 0, %s144
      %s146 = sphi 0, %s144
      %s147 = sphi 0, %s146
      %s161 = sphi 0, %s147
      %s165 = sphi 0, %s165
      %s167 = sphi 0, %s165
      %s168 = sphi 0, %s167
      %s182 = sphi 0, %s168
      %s186 = sphi 0, %s186
      %s188 = sphi 0, %s186
      %s189 = sphi 0, %s188
      %s203 = sphi 0, %s189
      %s207 = sphi 0, %s207
      %s209 = sphi 0, %s207
      %s210 = sphi 0, %s209
      %s224 = sphi 0, %s210
      %s228 = sphi 0, %s228
      %s230 = sphi 0, %s228
      %s231 = sphi 0, %s230
      %s245 = sphi 0, %s231
      %s249 = sphi 0, %s249
      %s251 = sphi 0, %s249
      %s252 = sphi 0, %s251
      %s266 = sphi 0, %s252
      %s270 = sphi 0, %s270
      %s272 = sphi 0, %s270
      %s273 = sphi 0, %s272
      %s287 = sphi 0, %s273
      %s293 = sphi 0, %s295
      %s296 = sphi 0, %s293
      %s297 = sphi 0, %s296
      %s313 = sphi 0, %s297
    $region4: #{tpu_custom_call.1} parent=1 // loop_header_branch
      %29 = sbr.rel (%p27) target = $region8
    $region5: #{tpu_custom_call.1} parent=1 // loop_body
      %s31 = ssub.s32 %s26, 1
      %s32 = ssub.s32 %s26, 2
      %s33 = sadd.s32 %s26, 1
      %s34 = ssub.s32 %s26, %s33
      %p35 = scmp.eq.s32.totalorder %s34, 0
      %s37 = sadd.s32 %s36, 1
      %s38 = scalar_select %p35, %s36, %s37
      %p41 = pneg %p35
      %p42 = scmp.eq.s32.totalorder %s26, 1
      %p43 = por %p41, %p42
      %p44 = scmp.ne.s32.totalorder %s36, %s39
      %p45 = scmp.eq.s32.totalorder %s26, 0
      %p46 = por %p44, %p45
      %p47 = scmp.ne.s32.totalorder %s36, %s39
      %p48 = scmp.eq.s32.totalorder %s31, 1
      %p49 = por %p47, %p48
      %p50 = scmp.ne.s32.totalorder %s39, %s40
      %p51 = scmp.eq.s32.totalorder %s31, 0
      %p52 = por %p50, %p51
      %p53 = scmp.ne.s32.totalorder %s39, %s40
      %p54 = scmp.eq.s32.totalorder %s32, 1
      %p55 = por %p53, %p54
      %p57 = scmp.ne.s32.totalorder %s40, %s56
      %p58 = scmp.eq.s32.totalorder %s32, 0
      %p59 = por %p57, %p58
      %s61 = sadd.s32 %s60, 1
      %p64 = scmp.eq.s32.totalorder %s26, 1
      %p65 = scmp.ne.s32.totalorder %s60, %s62
      %p66 = scmp.eq.s32.totalorder %s26, 0
      %p67 = por %p65, %p66
      %p68 = scmp.ne.s32.totalorder %s60, %s62
      %p69 = scmp.eq.s32.totalorder %s31, 1
      %p70 = por %p68, %p69
      %p71 = scmp.ne.s32.totalorder %s62, %s63
      %p72 = scmp.eq.s32.totalorder %s31, 0
      %p73 = por %p71, %p72
      %p74 = scmp.ne.s32.totalorder %s62, %s63
      %p75 = scmp.eq.s32.totalorder %s32, 1
      %p76 = por %p74, %p75
      %p78 = scmp.ne.s32.totalorder %s63, %s77
      %p79 = scmp.eq.s32.totalorder %s32, 0
      %p80 = por %p78, %p79
      %s82 = sadd.s32 %s81, 1
      %p85 = scmp.eq.s32.totalorder %s26, 1
      %p86 = scmp.ne.s32.totalorder %s81, %s83
      %p87 = scmp.eq.s32.totalorder %s26, 0
      %p88 = por %p86, %p87
      %p89 = scmp.ne.s32.totalorder %s81, %s83
      %p90 = scmp.eq.s32.totalorder %s31, 1
      %p91 = por %p89, %p90
      %p92 = scmp.ne.s32.totalorder %s83, %s84
      %p93 = scmp.eq.s32.totalorder %s31, 0
      %p94 = por %p92, %p93
      %p95 = scmp.ne.s32.totalorder %s83, %s84
      %p96 = scmp.eq.s32.totalorder %s32, 1
      %p97 = por %p95, %p96
      %p99 = scmp.ne.s32.totalorder %s84, %s98
      %p100 = scmp.eq.s32.totalorder %s32, 0
      %p101 = por %p99, %p100
      %s103 = sadd.s32 %s102, 1
      %p106 = scmp.eq.s32.totalorder %s26, 1
      %p107 = scmp.ne.s32.totalorder %s102, %s104
      %p108 = scmp.eq.s32.totalorder %s26, 0
      %p109 = por %p107, %p108
      %p110 = scmp.ne.s32.totalorder %s102, %s104
      %p111 = scmp.eq.s32.totalorder %s31, 1
      %p112 = por %p110, %p111
      %p113 = scmp.ne.s32.totalorder %s104, %s105
      %p114 = scmp.eq.s32.totalorder %s31, 0
      %p115 = por %p113, %p114
      %p116 = scmp.ne.s32.totalorder %s104, %s105
      %p117 = scmp.eq.s32.totalorder %s32, 1
      %p118 = por %p116, %p117
      %p120 = scmp.ne.s32.totalorder %s105, %s119
      %p121 = scmp.eq.s32.totalorder %s32, 0
      %p122 = por %p120, %p121
      %s124 = sadd.s32 %s123, 1
      %p127 = scmp.eq.s32.totalorder %s26, 1
      %p128 = scmp.ne.s32.totalorder %s123, %s125
      %p129 = scmp.eq.s32.totalorder %s26, 0
      %p130 = por %p128, %p129
      %p131 = scmp.ne.s32.totalorder %s123, %s125
      %p132 = scmp.eq.s32.totalorder %s31, 1
      %p133 = por %p131, %p132
      %p134 = scmp.ne.s32.totalorder %s125, %s126
      %p135 = scmp.eq.s32.totalorder %s31, 0
      %p136 = por %p134, %p135
      %p137 = scmp.ne.s32.totalorder %s125, %s126
      %p138 = scmp.eq.s32.totalorder %s32, 1
      %p139 = por %p137, %p138
      %p141 = scmp.ne.s32.totalorder %s126, %s140
      %p142 = scmp.eq.s32.totalorder %s32, 0
      %p143 = por %p141, %p142
      %s145 = sadd.s32 %s144, 1
      %p148 = scmp.eq.s32.totalorder %s26, 1
      %p149 = scmp.ne.s32.totalorder %s144, %s146
      %p150 = scmp.eq.s32.totalorder %s26, 0
      %p151 = por %p149, %p150
      %p152 = scmp.ne.s32.totalorder %s144, %s146
      %p153 = scmp.eq.s32.totalorder %s31, 1
      %p154 = por %p152, %p153
      %p155 = scmp.ne.s32.totalorder %s146, %s147
      %p156 = scmp.eq.s32.totalorder %s31, 0
      %p157 = por %p155, %p156
      %p158 = scmp.ne.s32.totalorder %s146, %s147
      %p159 = scmp.eq.s32.totalorder %s32, 1
      %p160 = por %p158, %p159
      %p162 = scmp.ne.s32.totalorder %s147, %s161
      %p163 = scmp.eq.s32.totalorder %s32, 0
      %p164 = por %p162, %p163
      %s166 = sadd.s32 %s165, 1
      %p169 = scmp.eq.s32.totalorder %s26, 1
      %p170 = scmp.ne.s32.totalorder %s165, %s167
      %p171 = scmp.eq.s32.totalorder %s26, 0
      %p172 = por %p170, %p171
      %p173 = scmp.ne.s32.totalorder %s165, %s167
      %p174 = scmp.eq.s32.totalorder %s31, 1
      %p175 = por %p173, %p174
      %p176 = scmp.ne.s32.totalorder %s167, %s168
      %p177 = scmp.eq.s32.totalorder %s31, 0
      %p178 = por %p176, %p177
      %p179 = scmp.ne.s32.totalorder %s167, %s168
      %p180 = scmp.eq.s32.totalorder %s32, 1
      %p181 = por %p179, %p180
      %p183 = scmp.ne.s32.totalorder %s168, %s182
      %p184 = scmp.eq.s32.totalorder %s32, 0
      %p185 = por %p183, %p184
      %s187 = sadd.s32 %s186, 1
      %p190 = scmp.eq.s32.totalorder %s26, 1
      %p191 = scmp.ne.s32.totalorder %s186, %s188
      %p192 = scmp.eq.s32.totalorder %s26, 0
      %p193 = por %p191, %p192
      %p194 = scmp.ne.s32.totalorder %s186, %s188
      %p195 = scmp.eq.s32.totalorder %s31, 1
      %p196 = por %p194, %p195
      %p197 = scmp.ne.s32.totalorder %s188, %s189
      %p198 = scmp.eq.s32.totalorder %s31, 0
      %p199 = por %p197, %p198
      %p200 = scmp.ne.s32.totalorder %s188, %s189
      %p201 = scmp.eq.s32.totalorder %s32, 1
      %p202 = por %p200, %p201
      %p204 = scmp.ne.s32.totalorder %s189, %s203
      %p205 = scmp.eq.s32.totalorder %s32, 0
      %p206 = por %p204, %p205
      %s208 = sadd.s32 %s207, 1
      %p211 = scmp.eq.s32.totalorder %s26, 1
      %p212 = scmp.ne.s32.totalorder %s207, %s209
      %p213 = scmp.eq.s32.totalorder %s26, 0
      %p214 = por %p212, %p213
      %p215 = scmp.ne.s32.totalorder %s207, %s209
      %p216 = scmp.eq.s32.totalorder %s31, 1
      %p217 = por %p215, %p216
      %p218 = scmp.ne.s32.totalorder %s209, %s210
      %p219 = scmp.eq.s32.totalorder %s31, 0
      %p220 = por %p218, %p219
      %p221 = scmp.ne.s32.totalorder %s209, %s210
      %p222 = scmp.eq.s32.totalorder %s32, 1
      %p223 = por %p221, %p222
      %p225 = scmp.ne.s32.totalorder %s210, %s224
      %p226 = scmp.eq.s32.totalorder %s32, 0
      %p227 = por %p225, %p226
      %s229 = sadd.s32 %s228, 1
      %p232 = scmp.eq.s32.totalorder %s26, 1
      %p233 = scmp.ne.s32.totalorder %s228, %s230
      %p234 = scmp.eq.s32.totalorder %s26, 0
      %p235 = por %p233, %p234
      %p236 = scmp.ne.s32.totalorder %s228, %s230
      %p237 = scmp.eq.s32.totalorder %s31, 1
      %p238 = por %p236, %p237
      %p239 = scmp.ne.s32.totalorder %s230, %s231
      %p240 = scmp.eq.s32.totalorder %s31, 0
      %p241 = por %p239, %p240
      %p242 = scmp.ne.s32.totalorder %s230, %s231
      %p243 = scmp.eq.s32.totalorder %s32, 1
      %p244 = por %p242, %p243
      %p246 = scmp.ne.s32.totalorder %s231, %s245
      %p247 = scmp.eq.s32.totalorder %s32, 0
      %p248 = por %p246, %p247
      %s250 = sadd.s32 %s249, 1
      %p253 = scmp.eq.s32.totalorder %s26, 1
      %p254 = scmp.ne.s32.totalorder %s249, %s251
      %p255 = scmp.eq.s32.totalorder %s26, 0
      %p256 = por %p254, %p255
      %p257 = scmp.ne.s32.totalorder %s249, %s251
      %p258 = scmp.eq.s32.totalorder %s31, 1
      %p259 = por %p257, %p258
      %p260 = scmp.ne.s32.totalorder %s251, %s252
      %p261 = scmp.eq.s32.totalorder %s31, 0
      %p262 = por %p260, %p261
      %p263 = scmp.ne.s32.totalorder %s251, %s252
      %p264 = scmp.eq.s32.totalorder %s32, 1
      %p265 = por %p263, %p264
      %p267 = scmp.ne.s32.totalorder %s252, %s266
      %p268 = scmp.eq.s32.totalorder %s32, 0
      %p269 = por %p267, %p268
      %s271 = sadd.s32 %s270, 1
      %p274 = scmp.eq.s32.totalorder %s26, 1
      %p275 = scmp.ne.s32.totalorder %s270, %s272
      %p276 = scmp.eq.s32.totalorder %s26, 0
      %p277 = por %p275, %p276
      %p278 = scmp.ne.s32.totalorder %s270, %s272
      %p279 = scmp.eq.s32.totalorder %s31, 1
      %p280 = por %p278, %p279
      %p281 = scmp.ne.s32.totalorder %s272, %s273
      %p282 = scmp.eq.s32.totalorder %s31, 0
      %p283 = por %p281, %p282
      %p284 = scmp.ne.s32.totalorder %s272, %s273
      %p285 = scmp.eq.s32.totalorder %s32, 1
      %p286 = por %p284, %p285
      %p288 = scmp.ne.s32.totalorder %s273, %s287
      %p289 = scmp.eq.s32.totalorder %s32, 0
      %p290 = por %p288, %p289
      %s291 = ssub.s32 %s26, %s33
      %p292 = scmp.eq.s32.totalorder %s291, 0
      %s294 = sadd.s32 %s293, 1
      %s295 = scalar_select %p292, %s293, %s294
      %p298 = pneg %p292
      %p299 = scmp.eq.s32.totalorder %s26, 1
      %p300 = por %p298, %p299
      %p301 = scmp.ne.s32.totalorder %s293, %s296
      %p302 = scmp.eq.s32.totalorder %s26, 0
      %p303 = por %p301, %p302
      %p304 = scmp.ne.s32.totalorder %s293, %s296
      %p305 = scmp.eq.s32.totalorder %s31, 1
      %p306 = por %p304, %p305
      %p307 = scmp.ne.s32.totalorder %s296, %s297
      %p308 = scmp.eq.s32.totalorder %s31, 0
      %p309 = por %p307, %p308
      %p310 = scmp.ne.s32.totalorder %s296, %s297
      %p311 = scmp.eq.s32.totalorder %s32, 1
      %p312 = por %p310, %p311
      %p314 = scmp.ne.s32.totalorder %s297, %s313
      %p315 = scmp.eq.s32.totalorder %s32, 0
      %p316 = por %p314, %p315
      %p317 = scmp.le.s32.totalorder 1, %s26
      %p318 = scmp.lt.s32.totalorder %s26, 3
      %p319 = pnand %p317, %p318
      %p320 = pneg %p319
      // Predicated region
      $region9: #{tpu_custom_call.1} parent=5 // pred_check
        _
      $region10: #{tpu_custom_call.1} parent=5 // pred_check_branch
        %322 = sbr.rel (%p319) target = $region12
      $region11: #{tpu_custom_call.1} parent=5 // pred_region
        %s323 = ssub.s32 %s26, 1
        // Predicated region
        $region13: #{tpu_custom_call.1} parent=11 // pred_check
          %p324 = pneg %p73
        $region14: #{tpu_custom_call.1} parent=11 // pred_check_branch
          %326 = sbr.rel (%p324) target = $region16
        $region15: #{tpu_custom_call.1} parent=11 // pred_region
          _
        $region16: #{tpu_custom_call.1} parent=11 // pred_fallthru
          _
        // Predicated region
        $region17: #{tpu_custom_call.1} parent=11 // pred_check
          %p327 = pneg %p94
        $region18: #{tpu_custom_call.1} parent=11 // pred_check_branch
          %329 = sbr.rel (%p327) target = $region20
        $region19: #{tpu_custom_call.1} parent=11 // pred_region
          _
        $region20: #{tpu_custom_call.1} parent=11 // pred_fallthru
          _
        // Predicated region
        $region21: #{tpu_custom_call.1} parent=11 // pred_check
          %p330 = pneg %p115
        $region22: #{tpu_custom_call.1} parent=11 // pred_check_branch
          %332 = sbr.rel (%p330) target = $region24
        $region23: #{tpu_custom_call.1} parent=11 // pred_region
          %s334 = ssub.s32 12288, 12288
          %335 = vsyncadd [#allocation6], %s334
          %s336 = sshll.u32 [#allocation5], 4
          %s337 = int_to_ptr.vmem [resolvable:$true] %s336
          %342 = dma.hbm_to_vmem [thread:$0]  %s3, 12288, %s337, [#allocation6], 384, 384, 24
        $region24: #{tpu_custom_call.1} parent=11 // pred_fallthru
          _
        // Predicated region
        $region25: #{tpu_custom_call.1} parent=11 // pred_check
          %p343 = pneg %p136
        $region26: #{tpu_custom_call.1} parent=11 // pred_check_branch
          %345 = sbr.rel (%p343) target = $region28
        $region27: #{tpu_custom_call.1} parent=11 // pred_region
          %s347 = ssub.s32 4096, 4096
          %348 = vsyncadd [#allocation6], %s347
          %s349 = sshll.u32 [#allocation7], 4
          %s350 = int_to_ptr.vmem [resolvable:$true] %s349
          %355 = dma.hbm_to_vmem [thread:$0]  %s4, 4096, %s350, [#allocation6], 128, 128, 8
        $region28: #{tpu_custom_call.1} parent=11 // pred_fallthru
          _
        // Predicated region
        $region29: #{tpu_custom_call.1} parent=11 // pred_check
          %p356 = pneg %p157
        $region30: #{tpu_custom_call.1} parent=11 // pred_check_branch
          %358 = sbr.rel (%p356) target = $region32
        $region31: #{tpu_custom_call.1} parent=11 // pred_region
          _
        $region32: #{tpu_custom_call.1} parent=11 // pred_fallthru
          _
        // Predicated region
        $region33: #{tpu_custom_call.1} parent=11 // pred_check
          %p359 = pneg %p178
        $region34: #{tpu_custom_call.1} parent=11 // pred_check_branch
          %361 = sbr.rel (%p359) target = $region36
        $region35: #{tpu_custom_call.1} parent=11 // pred_region
          _
        $region36: #{tpu_custom_call.1} parent=11 // pred_fallthru
          _
        // Predicated region
        $region37: #{tpu_custom_call.1} parent=11 // pred_check
          %p362 = pneg %p199
        $region38: #{tpu_custom_call.1} parent=11 // pred_check_branch
          %364 = sbr.rel (%p362) target = $region40
        $region39: #{tpu_custom_call.1} parent=11 // pred_region
          _
        $region40: #{tpu_custom_call.1} parent=11 // pred_fallthru
          _
        // Predicated region
        $region41: #{tpu_custom_call.1} parent=11 // pred_check
          %p365 = pneg %p220
        $region42: #{tpu_custom_call.1} parent=11 // pred_check_branch
          %367 = sbr.rel (%p365) target = $region44
        $region43: #{tpu_custom_call.1} parent=11 // pred_region
          %s369 = ssub.s32 16384, 16384
          %370 = vsyncadd [#allocation9], %s369
          %s371 = sshll.u32 [#allocation8], 4
          %s372 = int_to_ptr.vmem [resolvable:$true] %s371
          %377 = dma.hbm_to_vmem [thread:$0]  %s8, 16384, %s372, [#allocation9], 512, 512, 32
        $region44: #{tpu_custom_call.1} parent=11 // pred_fallthru
          _
        // Predicated region
        $region45: #{tpu_custom_call.1} parent=11 // pred_check
          %p378 = pneg %p241
        $region46: #{tpu_custom_call.1} parent=11 // pred_check_branch
          %380 = sbr.rel (%p378) target = $region48
        $region47: #{tpu_custom_call.1} parent=11 // pred_region
          _
        $region48: #{tpu_custom_call.1} parent=11 // pred_fallthru
          _
        // Predicated region
        $region49: #{tpu_custom_call.1} parent=11 // pred_check
          %p381 = pneg %p262
        $region50: #{tpu_custom_call.1} parent=11 // pred_check_branch
          %383 = sbr.rel (%p381) target = $region52
        $region51: #{tpu_custom_call.1} parent=11 // pred_region
          %s385 = ssub.s32 16384, 16384
          %386 = vsyncadd [#allocation9], %s385
          %s387 = sshll.u32 [#allocation10], 4
          %s388 = int_to_ptr.vmem [resolvable:$true] %s387
          %393 = dma.hbm_to_vmem [thread:$0]  %s10, 16384, %s388, [#allocation9], 128, 128, 8
        $region52: #{tpu_custom_call.1} parent=11 // pred_fallthru
          _
        // Predicated region
        $region53: #{tpu_custom_call.1} parent=11 // pred_check
          %p394 = pneg %p283
        $region54: #{tpu_custom_call.1} parent=11 // pred_check_branch
          %396 = sbr.rel (%p394) target = $region56
        $region55: #{tpu_custom_call.1} parent=11 // pred_region
          _
        $region56: #{tpu_custom_call.1} parent=11 // pred_fallthru
          _
      $region12: #{tpu_custom_call.1} parent=5 // pred_fallthru
        _
      %p397 = scmp.lt.s32.totalorder %s26, 2
      // Predicated region
      $region57: #{tpu_custom_call.1} parent=5 // pred_check
        %p398 = pneg %p397
      $region58: #{tpu_custom_call.1} parent=5 // pred_check_branch
        %400 = sbr.rel (%p398) target = $region60
      $region59: #{tpu_custom_call.1} parent=5 // pred_region
        // Predicated region
        $region61: #{tpu_custom_call.1} parent=59 // pred_check
          %p401 = pneg %p46
        $region62: #{tpu_custom_call.1} parent=59 // pred_check_branch
          %403 = sbr.rel (%p401) target = $region64
        $region63: #{tpu_custom_call.1} parent=59 // pred_region
          %s404 = sand.u32 %s36, 1
          %s405 = scalar_lea.sflag [#allocation3], %s404
          %s406 = sand.u32 %s36, 1
          %s407 = smul.addr %s406, 64
          %s408 = scalar_lea.vmem [#allocation2], %s407
          %s410 = ssub.s32 1024, 1024
          %411 = vsyncadd %s405, %s410
          %s412 = smul.addr %s26, 8
          %s413 = smul.addr %s412, 128
          %s414 = scalar_lea.hbm %s0, %s413
          %s415 = sshll.u32 %s408, 4
          %s416 = int_to_ptr.vmem [resolvable:$true] %s415
          %421 = dma.hbm_to_vmem [thread:$0]  %s414, 1024, %s416, %s405, 256, 256, 16
        $region64: #{tpu_custom_call.1} parent=59 // pred_fallthru
          _
      $region60: #{tpu_custom_call.1} parent=5 // pred_fallthru
        _
      %p422 = scmp.le.s32.totalorder 1, %s26
      %p423 = scmp.lt.s32.totalorder %s26, 3
      %p424 = pnand %p422, %p423
      %p425 = pneg %p424
      // Predicated region
      $region65: #{tpu_custom_call.1} parent=5 // pred_check
        _
      $region66: #{tpu_custom_call.1} parent=5 // pred_check_branch
        %427 = sbr.rel (%p424) target = $region68
      $region67: #{tpu_custom_call.1} parent=5 // pred_region
        %s428 = ssub.s32 %s26, 1
        %s429 = sand.u32 %s39, 1
        %s430 = scalar_lea.sflag [#allocation3], %s429
        %s431 = sand.u32 %s39, 1
        %s432 = smul.addr %s431, 64
        %s433 = scalar_lea.vmem [#allocation2], %s432
        // Predicated region
        $region69: #{tpu_custom_call.1} parent=67 // pred_check
          %p434 = pneg %p52
        $region70: #{tpu_custom_call.1} parent=67 // pred_check_branch
          %436 = sbr.rel (%p434) target = $region72
        $region71: #{tpu_custom_call.1} parent=67 // pred_region
          %437 = dma.done %s430, 1024
        $region72: #{tpu_custom_call.1} parent=67 // pred_fallthru
          _
        // Predicated region
        $region73: #{tpu_custom_call.1} parent=67 // pred_check
          %p438 = pneg %p115
        $region74: #{tpu_custom_call.1} parent=67 // pred_check_branch
          %440 = sbr.rel (%p438) target = $region76
        $region75: #{tpu_custom_call.1} parent=67 // pred_region
          %441 = dma.done [#allocation6], 12288
        $region76: #{tpu_custom_call.1} parent=67 // pred_fallthru
          _
        // Predicated region
        $region77: #{tpu_custom_call.1} parent=67 // pred_check
          %p442 = pneg %p136
        $region78: #{tpu_custom_call.1} parent=67 // pred_check_branch
          %444 = sbr.rel (%p442) target = $region80
        $region79: #{tpu_custom_call.1} parent=67 // pred_region
          %445 = dma.done [#allocation6], 4096
        $region80: #{tpu_custom_call.1} parent=67 // pred_fallthru
          _
        // Predicated region
        $region81: #{tpu_custom_call.1} parent=67 // pred_check
          %p446 = pneg %p220
        $region82: #{tpu_custom_call.1} parent=67 // pred_check_branch
          %448 = sbr.rel (%p446) target = $region84
        $region83: #{tpu_custom_call.1} parent=67 // pred_region
          %449 = dma.done [#allocation9], 16384
        $region84: #{tpu_custom_call.1} parent=67 // pred_fallthru
          _
        // Predicated region
        $region85: #{tpu_custom_call.1} parent=67 // pred_check
          %p450 = pneg %p262
        $region86: #{tpu_custom_call.1} parent=67 // pred_check_branch
          %452 = sbr.rel (%p450) target = $region88
        $region87: #{tpu_custom_call.1} parent=67 // pred_region
          %453 = dma.done [#allocation9], 16384
        $region88: #{tpu_custom_call.1} parent=67 // pred_fallthru
          _
        %s454 = sand.u32 %s39, 1
        %s455 = scalar_lea.sflag [#allocation3], %s454
        %s456 = sand.u32 %s39, 1
        %s457 = smul.addr %s456, 64
        %s458 = scalar_lea.vmem [#allocation2], %s457
        %p459 = pneg %p52
        %p460 = pneg %p49
        %p461 = pneg %p73
        %p462 = pneg %p70
        %p463 = pneg %p94
        %p464 = pneg %p91
        %p465 = pneg %p115
        %p466 = pneg %p112
        %p467 = pneg %p136
        %p468 = pneg %p133
        %p469 = pneg %p157
        %p470 = pneg %p154
        %p471 = pneg %p178
        %p472 = pneg %p175
        %p473 = pneg %p199
        %p474 = pneg %p196
        %p475 = pneg %p220
        %p476 = pneg %p217
        %p477 = pneg %p241
        %p478 = pneg %p238
        %p479 = pneg %p262
        %p480 = pneg %p259
        %p481 = pneg %p283
        %p482 = pneg %p280
        %p483 = pneg %p309
        %p484 = pneg %p306
        %s485 = sand.u32 %s296, 1
        %s486 = scalar_lea.sflag [#allocation4], %s485
        %s487 = sand.u32 %s296, 1
        %s488 = smul.addr %s487, 64
        %s489 = scalar_lea.vmem [#allocation11], %s488
        %v491 = vld [vmem:[%s433] sm:$0xff]
        %v492 = vld [vmem:[%s433 + $0x8] sm:$0xff]
        %v493 = vld [vmem:[%s433 + $0x10] sm:$0xff]
        %v494 = vld [vmem:[%s433 + $0x18] sm:$0xff]
        %v495 = vld [vmem:[%s433 + $0x20] sm:$0xff]
        %v496 = vld [vmem:[%s433 + $0x28] sm:$0xff]
        %v497 = vld [vmem:[%s433 + $0x30] sm:$0xff]
        %v498 = vld [vmem:[%s433 + $0x38] sm:$0xff]
        %v499 = vld [vmem:[%s1] sm:$0x3]
        %v500 = vld [vmem:[%s2] sm:$0x3]
        %v501 = vadd.f32 %v491, %v492
        %502 = vadd.xlane.f32.xlu0 %v501
        %v503 = vpop.xlane.xlu0 %502
        %v504 = vadd.f32 %v493, %v494
        %505 = vadd.xlane.f32.xlu0 %v504
        %v506 = vpop.xlane.xlu0 %505
        %v507 = vadd.f32 %v495, %v496
        %508 = vadd.xlane.f32.xlu0 %v507
        %v509 = vpop.xlane.xlu0 %508
        %v510 = vadd.f32 %v497, %v498
        %511 = vadd.xlane.f32.xlu0 %v510
        %v512 = vpop.xlane.xlu0 %511
        %v513 = vrcp.pop 256.0
        %v514 = vmul.f32 %v503, %v513
        %v515 = vmul.f32 %v506, %v513
        %v516 = vmul.f32 %v509, %v513
        %v517 = vmul.f32 %v512, %v513
        %v518 = vsub.f32 %v491, %v514
        %v519 = vsub.f32 %v492, %v514
        %v520 = vsub.f32 %v493, %v515
        %v521 = vsub.f32 %v494, %v515
        %v522 = vsub.f32 %v495, %v516
        %v523 = vsub.f32 %v496, %v516
        %v524 = vsub.f32 %v497, %v517
        %v525 = vsub.f32 %v498, %v517
        %v526 = vmul.f32 %v518, %v518
        %v527 = vmul.f32 %v519, %v519
        %v528 = vmul.f32 %v520, %v520
        %v529 = vmul.f32 %v521, %v521
        %v530 = vmul.f32 %v522, %v522
        %v531 = vmul.f32 %v523, %v523
        %v532 = vmul.f32 %v524, %v524
        %v533 = vmul.f32 %v525, %v525
        %v534 = vadd.f32 %v526, %v527
        %535 = vadd.xlane.f32.xlu0 %v534
        %v536 = vpop.xlane.xlu0 %535
        %v537 = vadd.f32 %v528, %v529
        %538 = vadd.xlane.f32.xlu0 %v537
        %v539 = vpop.xlane.xlu0 %538
        %v540 = vadd.f32 %v530, %v531
        %541 = vadd.xlane.f32.xlu0 %v540
        %v542 = vpop.xlane.xlu0 %541
        %v543 = vadd.f32 %v532, %v533
        %544 = vadd.xlane.f32.xlu0 %v543
        %v545 = vpop.xlane.xlu0 %544
        %v546 = vmul.f32 %v536, %v513
        %v547 = vmul.f32 %v539, %v513
        %v548 = vmul.f32 %v542, %v513
        %v549 = vmul.f32 %v545, %v513
        %v550 = vadd.f32 %v546, 1e-05
        %v551 = vadd.f32 %v547, 1e-05
        %v552 = vadd.f32 %v548, 1e-05
        %v553 = vadd.f32 %v549, 1e-05
        %v554 = vrsqrt.pop %v550
        %v555 = vrsqrt.pop %v551
        %v556 = vrsqrt.pop %v552
        %v557 = vrsqrt.pop %v553
        %v558 = vmul.f32 %v518, %v554
        %v559 = vmul.f32 %v519, %v554
        %v560 = vmul.f32 %v520, %v555
        %v561 = vmul.f32 %v521, %v555
        %v562 = vmul.f32 %v522, %v556
        %v563 = vmul.f32 %v523, %v556
        %v564 = vmul.f32 %v524, %v557
        %v565 = vmul.f32 %v525, %v557
        %v567 = vlaneseq
        %v568 = vshrl.u32 %v567, 7
        %v569 = vsub.s32 0, %v568
        %v570 = vrot.slane %v499, %v569
        %v571 = vlaneseq
        %v572 = vshrl.u32 %v571, 7
        %v573 = vsub.s32 1, %v572
        %v574 = vrot.slane %v499, %v573
        %v577 = vmul.f32 %v558, %v570
        %v578 = vmul.f32 %v559, %v574
        %v579 = vmul.f32 %v560, %v570
        %v580 = vmul.f32 %v561, %v574
        %v581 = vmul.f32 %v562, %v570
        %v582 = vmul.f32 %v563, %v574
        %v583 = vmul.f32 %v564, %v570
        %v584 = vmul.f32 %v565, %v574
        %v586 = vlaneseq
        %v587 = vshrl.u32 %v586, 7
        %v588 = vsub.s32 0, %v587
        %v589 = vrot.slane %v500, %v588
        %v590 = vlaneseq
        %v591 = vshrl.u32 %v590, 7
        %v592 = vsub.s32 1, %v591
        %v593 = vrot.slane %v500, %v592
        %v596 = vadd.f32 %v577, %v589
        %v597 = vadd.f32 %v578, %v593
        %v598 = vadd.f32 %v579, %v589
        %v599 = vadd.f32 %v580, %v593
        %v600 = vadd.f32 %v581, %v589
        %v601 = vadd.f32 %v582, %v593
        %v602 = vadd.f32 %v583, %v589
        %v603 = vadd.f32 %v584, %v593
        %v604 = vld [vmem:[#allocation5] sm:$0xff]
        %v605 = vld [vmem:[#allocation5 + $0x8] sm:$0xff]
        %v606 = vld [vmem:[#allocation5 + $0x10] sm:$0xff]
        %v607 = vld [vmem:[#allocation5 + $0x18] sm:$0xff]
        %v608 = vld [vmem:[#allocation5 + $0x20] sm:$0xff]
        %v609 = vld [vmem:[#allocation5 + $0x28] sm:$0xff]
        %v610 = vld [vmem:[#allocation5 + $0x30] sm:$0xff]
        %v611 = vld [vmem:[#allocation5 + $0x38] sm:$0xff]
        %v612 = vld [vmem:[#allocation5 + $0x40] sm:$0xff]
        %v613 = vld [vmem:[#allocation5 + $0x48] sm:$0xff]
        %v614 = vld [vmem:[#allocation5 + $0x50] sm:$0xff]
        %v615 = vld [vmem:[#allocation5 + $0x58] sm:$0xff]
        %v616 = vld [vmem:[#allocation5 + $0x60] sm:$0xff]
        %v617 = vld [vmem:[#allocation5 + $0x68] sm:$0xff]
        %v618 = vld [vmem:[#allocation5 + $0x70] sm:$0xff]
        %v619 = vld [vmem:[#allocation5 + $0x78] sm:$0xff]
        %v620 = vld [vmem:[#allocation5 + $0x80] sm:$0xff]
        %v621 = vld [vmem:[#allocation5 + $0x88] sm:$0xff]
        %v622 = vld [vmem:[#allocation5 + $0x90] sm:$0xff]
        %v623 = vld [vmem:[#allocation5 + $0x98] sm:$0xff]
        %v624 = vld [vmem:[#allocation5 + $0xa0] sm:$0xff]
        %v625 = vld [vmem:[#allocation5 + $0xa8] sm:$0xff]
        %v626 = vld [vmem:[#allocation5 + $0xb0] sm:$0xff]
        %v627 = vld [vmem:[#allocation5 + $0xb8] sm:$0xff]
        %v628 = vld [vmem:[#allocation5 + $0xc0] sm:$0xff]
        %v629 = vld [vmem:[#allocation5 + $0xc8] sm:$0xff]
        %v630 = vld [vmem:[#allocation5 + $0xd0] sm:$0xff]
        %v631 = vld [vmem:[#allocation5 + $0xd8] sm:$0xff]
        %v632 = vld [vmem:[#allocation5 + $0xe0] sm:$0xff]
        %v633 = vld [vmem:[#allocation5 + $0xe8] sm:$0xff]
        %v634 = vld [vmem:[#allocation5 + $0xf0] sm:$0xff]
        %v635 = vld [vmem:[#allocation5 + $0xf8] sm:$0xff]
        %v636 = vld [vmem:[#allocation5 + $0x100] sm:$0xff]
        %v637 = vld [vmem:[#allocation5 + $0x108] sm:$0xff]
        %v638 = vld [vmem:[#allocation5 + $0x110] sm:$0xff]
        %v639 = vld [vmem:[#allocation5 + $0x118] sm:$0xff]
        %v640 = vld [vmem:[#allocation5 + $0x120] sm:$0xff]
        %v641 = vld [vmem:[#allocation5 + $0x128] sm:$0xff]
        %v642 = vld [vmem:[#allocation5 + $0x130] sm:$0xff]
        %v643 = vld [vmem:[#allocation5 + $0x138] sm:$0xff]
        %v644 = vld [vmem:[#allocation5 + $0x140] sm:$0xff]
        %v645 = vld [vmem:[#allocation5 + $0x148] sm:$0xff]
        %v646 = vld [vmem:[#allocation5 + $0x150] sm:$0xff]
        %v647 = vld [vmem:[#allocation5 + $0x158] sm:$0xff]
        %v648 = vld [vmem:[#allocation5 + $0x160] sm:$0xff]
        %v649 = vld [vmem:[#allocation5 + $0x168] sm:$0xff]
        %v650 = vld [vmem:[#allocation5 + $0x170] sm:$0xff]
        %v651 = vld [vmem:[#allocation5 + $0x178] sm:$0xff]
        %v652 = vld [vmem:[#allocation5 + $0x180] sm:$0xff]
        %v653 = vld [vmem:[#allocation5 + $0x188] sm:$0xff]
        %v654 = vld [vmem:[#allocation5 + $0x190] sm:$0xff]
        %v655 = vld [vmem:[#allocation5 + $0x198] sm:$0xff]
        %v656 = vld [vmem:[#allocation5 + $0x1a0] sm:$0xff]
        %v657 = vld [vmem:[#allocation5 + $0x1a8] sm:$0xff]
        %v658 = vld [vmem:[#allocation5 + $0x1b0] sm:$0xff]
        %v659 = vld [vmem:[#allocation5 + $0x1b8] sm:$0xff]
        %v660 = vld [vmem:[#allocation5 + $0x1c0] sm:$0xff]
        %v661 = vld [vmem:[#allocation5 + $0x1c8] sm:$0xff]
        %v662 = vld [vmem:[#allocation5 + $0x1d0] sm:$0xff]
        %v663 = vld [vmem:[#allocation5 + $0x1d8] sm:$0xff]
        %v664 = vld [vmem:[#allocation5 + $0x1e0] sm:$0xff]
        %v665 = vld [vmem:[#allocation5 + $0x1e8] sm:$0xff]
        %v666 = vld [vmem:[#allocation5 + $0x1f0] sm:$0xff]
        %v667 = vld [vmem:[#allocation5 + $0x1f8] sm:$0xff]
        %v668 = vld [vmem:[#allocation5 + $0x200] sm:$0xff]
        %v669 = vld [vmem:[#allocation5 + $0x208] sm:$0xff]
        %v670 = vld [vmem:[#allocation5 + $0x210] sm:$0xff]
        %v671 = vld [vmem:[#allocation5 + $0x218] sm:$0xff]
        %v672 = vld [vmem:[#allocation5 + $0x220] sm:$0xff]
        %v673 = vld [vmem:[#allocation5 + $0x228] sm:$0xff]
        %v674 = vld [vmem:[#allocation5 + $0x230] sm:$0xff]
        %v675 = vld [vmem:[#allocation5 + $0x238] sm:$0xff]
        %v676 = vld [vmem:[#allocation5 + $0x240] sm:$0xff]
        %v677 = vld [vmem:[#allocation5 + $0x248] sm:$0xff]
        %v678 = vld [vmem:[#allocation5 + $0x250] sm:$0xff]
        %v679 = vld [vmem:[#allocation5 + $0x258] sm:$0xff]
        %v680 = vld [vmem:[#allocation5 + $0x260] sm:$0xff]
        %v681 = vld [vmem:[#allocation5 + $0x268] sm:$0xff]
        %v682 = vld [vmem:[#allocation5 + $0x270] sm:$0xff]
        %v683 = vld [vmem:[#allocation5 + $0x278] sm:$0xff]
        %v684 = vld [vmem:[#allocation5 + $0x280] sm:$0xff]
        %v685 = vld [vmem:[#allocation5 + $0x288] sm:$0xff]
        %v686 = vld [vmem:[#allocation5 + $0x290] sm:$0xff]
        %v687 = vld [vmem:[#allocation5 + $0x298] sm:$0xff]
        %v688 = vld [vmem:[#allocation5 + $0x2a0] sm:$0xff]
        %v689 = vld [vmem:[#allocation5 + $0x2a8] sm:$0xff]
        %v690 = vld [vmem:[#allocation5 + $0x2b0] sm:$0xff]
        %v691 = vld [vmem:[#allocation5 + $0x2b8] sm:$0xff]
        %v692 = vld [vmem:[#allocation5 + $0x2c0] sm:$0xff]
        %v693 = vld [vmem:[#allocation5 + $0x2c8] sm:$0xff]
        %v694 = vld [vmem:[#allocation5 + $0x2d0] sm:$0xff]
        %v695 = vld [vmem:[#allocation5 + $0x2d8] sm:$0xff]
        %v696 = vld [vmem:[#allocation5 + $0x2e0] sm:$0xff]
        %v697 = vld [vmem:[#allocation5 + $0x2e8] sm:$0xff]
        %v698 = vld [vmem:[#allocation5 + $0x2f0] sm:$0xff]
        %v699 = vld [vmem:[#allocation5 + $0x2f8] sm:$0xff]
        %v700 = vpack.c.bf16 %v598, %v596
        %v701 = vpack.c.bf16 %v599, %v597
        %v702 = vpack.c.bf16 %v602, %v600
        %v703 = vpack.c.bf16 %v603, %v601
        %v800 = vunpack.c.l.b16 %v604
        %v801 = vunpack.c.h.b16 %v604
        %v802 = vunpack.c.l.b16 %v605
        %v803 = vunpack.c.h.b16 %v605
        %v804 = vunpack.c.l.b16 %v606
        %v805 = vunpack.c.h.b16 %v606
        %v806 = vunpack.c.l.b16 %v607
        %v807 = vunpack.c.h.b16 %v607
        %v808 = vunpack.c.l.b16 %v608
        %v809 = vunpack.c.h.b16 %v608
        %v810 = vunpack.c.l.b16 %v609
        %v811 = vunpack.c.h.b16 %v609
        %v812 = vunpack.c.l.b16 %v610
        %v813 = vunpack.c.h.b16 %v610
        %v814 = vunpack.c.l.b16 %v611
        %v815 = vunpack.c.h.b16 %v611
        %v816 = vunpack.c.l.b16 %v612
        %v817 = vunpack.c.h.b16 %v612
        %v818 = vunpack.c.l.b16 %v613
        %v819 = vunpack.c.h.b16 %v613
        %v820 = vunpack.c.l.b16 %v614
        %v821 = vunpack.c.h.b16 %v614
        %v822 = vunpack.c.l.b16 %v615
        %v823 = vunpack.c.h.b16 %v615
        %v824 = vunpack.c.l.b16 %v616
        %v825 = vunpack.c.h.b16 %v616
        %v826 = vunpack.c.l.b16 %v617
        %v827 = vunpack.c.h.b16 %v617
        %v828 = vunpack.c.l.b16 %v618
        %v829 = vunpack.c.h.b16 %v618
        %v830 = vunpack.c.l.b16 %v619
        %v831 = vunpack.c.h.b16 %v619
        %v832 = vunpack.c.l.b16 %v620
        %v833 = vunpack.c.h.b16 %v620
        %v834 = vunpack.c.l.b16 %v621
        %v835 = vunpack.c.h.b16 %v621
        %v836 = vunpack.c.l.b16 %v622
        %v837 = vunpack.c.h.b16 %v622
        %v838 = vunpack.c.l.b16 %v623
        %v839 = vunpack.c.h.b16 %v623
        %v840 = vunpack.c.l.b16 %v624
        %v841 = vunpack.c.h.b16 %v624
        %v842 = vunpack.c.l.b16 %v625
        %v843 = vunpack.c.h.b16 %v625
        %v844 = vunpack.c.l.b16 %v626
        %v845 = vunpack.c.h.b16 %v626
        %v846 = vunpack.c.l.b16 %v627
        %v847 = vunpack.c.h.b16 %v627
        %v848 = vunpack.c.l.b16 %v628
        %v849 = vunpack.c.h.b16 %v628
        %v850 = vunpack.c.l.b16 %v629
        %v851 = vunpack.c.h.b16 %v629
        %v852 = vunpack.c.l.b16 %v630
        %v853 = vunpack.c.h.b16 %v630
        %v854 = vunpack.c.l.b16 %v631
        %v855 = vunpack.c.h.b16 %v631
        %v856 = vunpack.c.l.b16 %v632
        %v857 = vunpack.c.h.b16 %v632
        %v858 = vunpack.c.l.b16 %v633
        %v859 = vunpack.c.h.b16 %v633
        %v860 = vunpack.c.l.b16 %v634
        %v861 = vunpack.c.h.b16 %v634
        %v862 = vunpack.c.l.b16 %v635
        %v863 = vunpack.c.h.b16 %v635
        %v864 = vunpack.c.l.b16 %v636
        %v865 = vunpack.c.h.b16 %v636
        %v866 = vunpack.c.l.b16 %v637
        %v867 = vunpack.c.h.b16 %v637
        %v868 = vunpack.c.l.b16 %v638
        %v869 = vunpack.c.h.b16 %v638
        %v870 = vunpack.c.l.b16 %v639
        %v871 = vunpack.c.h.b16 %v639
        %v872 = vunpack.c.l.b16 %v640
        %v873 = vunpack.c.h.b16 %v640
        %v874 = vunpack.c.l.b16 %v641
        %v875 = vunpack.c.h.b16 %v641
        %v876 = vunpack.c.l.b16 %v642
        %v877 = vunpack.c.h.b16 %v642
        %v878 = vunpack.c.l.b16 %v643
        %v879 = vunpack.c.h.b16 %v643
        %v880 = vunpack.c.l.b16 %v644
        %v881 = vunpack.c.h.b16 %v644
        %v882 = vunpack.c.l.b16 %v645
        %v883 = vunpack.c.h.b16 %v645
        %v884 = vunpack.c.l.b16 %v646
        %v885 = vunpack.c.h.b16 %v646
        %v886 = vunpack.c.l.b16 %v647
        %v887 = vunpack.c.h.b16 %v647
        %v888 = vunpack.c.l.b16 %v648
        %v889 = vunpack.c.h.b16 %v648
        %v890 = vunpack.c.l.b16 %v649
        %v891 = vunpack.c.h.b16 %v649
        %v892 = vunpack.c.l.b16 %v650
        %v893 = vunpack.c.h.b16 %v650
        %v894 = vunpack.c.l.b16 %v651
        %v895 = vunpack.c.h.b16 %v651
        %v896 = vunpack.c.l.b16 %v652
        %v897 = vunpack.c.h.b16 %v652
        %v898 = vunpack.c.l.b16 %v653
        %v899 = vunpack.c.h.b16 %v653
        %v900 = vunpack.c.l.b16 %v654
        %v901 = vunpack.c.h.b16 %v654
        %v902 = vunpack.c.l.b16 %v655
        %v903 = vunpack.c.h.b16 %v655
        %v904 = vunpack.c.l.b16 %v656
        %v905 = vunpack.c.h.b16 %v656
        %v906 = vunpack.c.l.b16 %v657
        %v907 = vunpack.c.h.b16 %v657
        %v908 = vunpack.c.l.b16 %v658
        %v909 = vunpack.c.h.b16 %v658
        %v910 = vunpack.c.l.b16 %v659
        %v911 = vunpack.c.h.b16 %v659
        %v912 = vunpack.c.l.b16 %v660
        %v913 = vunpack.c.h.b16 %v660
        %v914 = vunpack.c.l.b16 %v661
        %v915 = vunpack.c.h.b16 %v661
        %v916 = vunpack.c.l.b16 %v662
        %v917 = vunpack.c.h.b16 %v662
        %v918 = vunpack.c.l.b16 %v663
        %v919 = vunpack.c.h.b16 %v663
        %v920 = vunpack.c.l.b16 %v664
        %v921 = vunpack.c.h.b16 %v664
        %v922 = vunpack.c.l.b16 %v665
        %v923 = vunpack.c.h.b16 %v665
        %v924 = vunpack.c.l.b16 %v666
        %v925 = vunpack.c.h.b16 %v666
        %v926 = vunpack.c.l.b16 %v667
        %v927 = vunpack.c.h.b16 %v667
        %v928 = vunpack.c.l.b16 %v668
        %v929 = vunpack.c.h.b16 %v668
        %v930 = vunpack.c.l.b16 %v669
        %v931 = vunpack.c.h.b16 %v669
        %v932 = vunpack.c.l.b16 %v670
        %v933 = vunpack.c.h.b16 %v670
        %v934 = vunpack.c.l.b16 %v671
        %v935 = vunpack.c.h.b16 %v671
        %v936 = vunpack.c.l.b16 %v672
        %v937 = vunpack.c.h.b16 %v672
        %v938 = vunpack.c.l.b16 %v673
        %v939 = vunpack.c.h.b16 %v673
        %v940 = vunpack.c.l.b16 %v674
        %v941 = vunpack.c.h.b16 %v674
        %v942 = vunpack.c.l.b16 %v675
        %v943 = vunpack.c.h.b16 %v675
        %v944 = vunpack.c.l.b16 %v676
        %v945 = vunpack.c.h.b16 %v676
        %v946 = vunpack.c.l.b16 %v677
        %v947 = vunpack.c.h.b16 %v677
        %v948 = vunpack.c.l.b16 %v678
        %v949 = vunpack.c.h.b16 %v678
        %v950 = vunpack.c.l.b16 %v679
        %v951 = vunpack.c.h.b16 %v679
        %v952 = vunpack.c.l.b16 %v680
        %v953 = vunpack.c.h.b16 %v680
        %v954 = vunpack.c.l.b16 %v681
        %v955 = vunpack.c.h.b16 %v681
        %v956 = vunpack.c.l.b16 %v682
        %v957 = vunpack.c.h.b16 %v682
        %v958 = vunpack.c.l.b16 %v683
        %v959 = vunpack.c.h.b16 %v683
        %v960 = vunpack.c.l.b16 %v684
        %v961 = vunpack.c.h.b16 %v684
        %v962 = vunpack.c.l.b16 %v685
        %v963 = vunpack.c.h.b16 %v685
        %v964 = vunpack.c.l.b16 %v686
        %v965 = vunpack.c.h.b16 %v686
        %v966 = vunpack.c.l.b16 %v687
        %v967 = vunpack.c.h.b16 %v687
        %v968 = vunpack.c.l.b16 %v688
        %v969 = vunpack.c.h.b16 %v688
        %v970 = vunpack.c.l.b16 %v689
        %v971 = vunpack.c.h.b16 %v689
        %v972 = vunpack.c.l.b16 %v690
        %v973 = vunpack.c.h.b16 %v690
        %v974 = vunpack.c.l.b16 %v691
        %v975 = vunpack.c.h.b16 %v691
        %v976 = vunpack.c.l.b16 %v692
        %v977 = vunpack.c.h.b16 %v692
        %v978 = vunpack.c.l.b16 %v693
        %v979 = vunpack.c.h.b16 %v693
        %v980 = vunpack.c.l.b16 %v694
        %v981 = vunpack.c.h.b16 %v694
        %v982 = vunpack.c.l.b16 %v695
        %v983 = vunpack.c.h.b16 %v695
        %v984 = vunpack.c.l.b16 %v696
        %v985 = vunpack.c.h.b16 %v696
        %v986 = vunpack.c.l.b16 %v697
        %v987 = vunpack.c.h.b16 %v697
        %v988 = vunpack.c.l.b16 %v698
        %v989 = vunpack.c.h.b16 %v698
        %v990 = vunpack.c.l.b16 %v699
        %v991 = vunpack.c.h.b16 %v699
        %v992 = vpack.c.b16 %v806, %v800
        %v993 = vpack.c.b16 %v807, %v801
        %v994 = vpack.c.b16 %v808, %v802
        %v995 = vpack.c.b16 %v809, %v803
        %v996 = vpack.c.b16 %v810, %v804
        %v997 = vpack.c.b16 %v811, %v805
        %v998 = vpack.c.b16 %v818, %v812
        %v999 = vpack.c.b16 %v819, %v813
        %v1000 = vpack.c.b16 %v820, %v814
        %v1001 = vpack.c.b16 %v821, %v815
        %v1002 = vpack.c.b16 %v822, %v816
        %v1003 = vpack.c.b16 %v823, %v817
        %v1004 = vpack.c.b16 %v830, %v824
        %v1005 = vpack.c.b16 %v831, %v825
        %v1006 = vpack.c.b16 %v832, %v826
        %v1007 = vpack.c.b16 %v833, %v827
        %v1008 = vpack.c.b16 %v834, %v828
        %v1009 = vpack.c.b16 %v835, %v829
        %v1010 = vpack.c.b16 %v842, %v836
        %v1011 = vpack.c.b16 %v843, %v837
        %v1012 = vpack.c.b16 %v844, %v838
        %v1013 = vpack.c.b16 %v845, %v839
        %v1014 = vpack.c.b16 %v846, %v840
        %v1015 = vpack.c.b16 %v847, %v841
        %v1016 = vpack.c.b16 %v854, %v848
        %v1017 = vpack.c.b16 %v855, %v849
        %v1018 = vpack.c.b16 %v856, %v850
        %v1019 = vpack.c.b16 %v857, %v851
        %v1020 = vpack.c.b16 %v858, %v852
        %v1021 = vpack.c.b16 %v859, %v853
        %v1022 = vpack.c.b16 %v866, %v860
        %v1023 = vpack.c.b16 %v867, %v861
        %v1024 = vpack.c.b16 %v868, %v862
        %v1025 = vpack.c.b16 %v869, %v863
        %v1026 = vpack.c.b16 %v870, %v864
        %v1027 = vpack.c.b16 %v871, %v865
        %v1028 = vpack.c.b16 %v878, %v872
        %v1029 = vpack.c.b16 %v879, %v873
        %v1030 = vpack.c.b16 %v880, %v874
        %v1031 = vpack.c.b16 %v881, %v875
        %v1032 = vpack.c.b16 %v882, %v876
        %v1033 = vpack.c.b16 %v883, %v877
        %v1034 = vpack.c.b16 %v890, %v884
        %v1035 = vpack.c.b16 %v891, %v885
        %v1036 = vpack.c.b16 %v892, %v886
        %v1037 = vpack.c.b16 %v893, %v887
        %v1038 = vpack.c.b16 %v894, %v888
        %v1039 = vpack.c.b16 %v895, %v889
        %v1040 = vpack.c.b16 %v902, %v896
        %v1041 = vpack.c.b16 %v903, %v897
        %v1042 = vpack.c.b16 %v904, %v898
        %v1043 = vpack.c.b16 %v905, %v899
        %v1044 = vpack.c.b16 %v906, %v900
        %v1045 = vpack.c.b16 %v907, %v901
        %v1046 = vpack.c.b16 %v914, %v908
        %v1047 = vpack.c.b16 %v915, %v909
        %v1048 = vpack.c.b16 %v916, %v910
        %v1049 = vpack.c.b16 %v917, %v911
        %v1050 = vpack.c.b16 %v918, %v912
        %v1051 = vpack.c.b16 %v919, %v913
        %v1052 = vpack.c.b16 %v926, %v920
        %v1053 = vpack.c.b16 %v927, %v921
        %v1054 = vpack.c.b16 %v928, %v922
        %v1055 = vpack.c.b16 %v929, %v923
        %v1056 = vpack.c.b16 %v930, %v924
        %v1057 = vpack.c.b16 %v931, %v925
        %v1058 = vpack.c.b16 %v938, %v932
        %v1059 = vpack.c.b16 %v939, %v933
        %v1060 = vpack.c.b16 %v940, %v934
        %v1061 = vpack.c.b16 %v941, %v935
        %v1062 = vpack.c.b16 %v942, %v936
        %v1063 = vpack.c.b16 %v943, %v937
        %v1064 = vpack.c.b16 %v950, %v944
        %v1065 = vpack.c.b16 %v951, %v945
        %v1066 = vpack.c.b16 %v952, %v946
        %v1067 = vpack.c.b16 %v953, %v947
        %v1068 = vpack.c.b16 %v954, %v948
        %v1069 = vpack.c.b16 %v955, %v949
        %v1070 = vpack.c.b16 %v962, %v956
        %v1071 = vpack.c.b16 %v963, %v957
        %v1072 = vpack.c.b16 %v964, %v958
        %v1073 = vpack.c.b16 %v965, %v959
        %v1074 = vpack.c.b16 %v966, %v960
        %v1075 = vpack.c.b16 %v967, %v961
        %v1076 = vpack.c.b16 %v974, %v968
        %v1077 = vpack.c.b16 %v975, %v969
        %v1078 = vpack.c.b16 %v976, %v970
        %v1079 = vpack.c.b16 %v977, %v971
        %v1080 = vpack.c.b16 %v978, %v972
        %v1081 = vpack.c.b16 %v979, %v973
        %v1082 = vpack.c.b16 %v986, %v980
        %v1083 = vpack.c.b16 %v987, %v981
        %v1084 = vpack.c.b16 %v988, %v982
        %v1085 = vpack.c.b16 %v989, %v983
        %v1086 = vpack.c.b16 %v990, %v984
        %v1087 = vpack.c.b16 %v991, %v985
        %1184 = vmatprep.subr.bf16.mxu0 %v993
        %1185 = vmatpush1.bf16.msra.mxu0 %v992
        %1186 = vmatprep.subr.bf16.mxu0 %v999
        %1187 = vmatpush1.bf16.msra.mxu0 %v998
        %1188 = vmatprep.subr.bf16.mxu0 %v1005
        %1189 = vmatpush1.bf16.msra.mxu0 %v1004
        %1190 = vmatprep.subr.bf16.mxu0 %v1011
        %1191 = vmatpush1.bf16.msra.mxu0 %v1010
        %1192 = vmatprep.subr.bf16.mxu0 %v1017
        %1193 = vmatpush1.bf16.msra.mxu0 %v1016
        %1194 = vmatprep.subr.bf16.mxu0 %v1023
        %1195 = vmatpush1.bf16.msra.mxu0 %v1022
        %1196 = vmatprep.subr.bf16.mxu0 %v1029
        %1197 = vmatpush1.bf16.msra.mxu0 %v1028
        %1198 = vmatprep.subr.bf16.mxu0 %v1035
        %1199 = vmatpush1.bf16.msra.mxu0 %v1034
        %1200 = vmatprep.subr.bf16.mxu0 %v1041
        %1201 = vmatpush1.bf16.msra.mxu0 %v1040
        %1202 = vmatprep.subr.bf16.mxu0 %v1047
        %1203 = vmatpush1.bf16.msra.mxu0 %v1046
        %1204 = vmatprep.subr.bf16.mxu0 %v1053
        %1205 = vmatpush1.bf16.msra.mxu0 %v1052
        %1206 = vmatprep.subr.bf16.mxu0 %v1059
        %1207 = vmatpush1.bf16.msra.mxu0 %v1058
        %1208 = vmatprep.subr.bf16.mxu0 %v1065
        %1209 = vmatpush1.bf16.msra.mxu0 %v1064
        %1210 = vmatprep.subr.bf16.mxu0 %v1071
        %1211 = vmatpush1.bf16.msra.mxu0 %v1070
        %1212 = vmatprep.subr.bf16.mxu0 %v1077
        %1213 = vmatpush1.bf16.msra.mxu0 %v1076
        %1214 = vmatprep.subr.bf16.mxu0 %v1083
        %1215 = vmatpush1.bf16.msra.mxu0 %v1082
        %1216 = vmatprep.mubr.bf16.mxu0 %v701
        %1217 = vmatmul.mubr.bf16.gmra.mrb[0].mxu0 %v700
        %v1218 = vpop.f32.mrb[0].mxu0
        %v1219 = vadd.f32 0.0, %v1218
        %v1220 = vpop.f32.mrb[0].mxu0
        %v1221 = vadd.f32 0.0, %v1220
        %v1222 = vpop.f32.mrb[0].mxu0
        %v1223 = vadd.f32 0.0, %v1222
        %v1224 = vpop.f32.mrb[0].mxu0
        %v1225 = vadd.f32 0.0, %v1224
        %1226 = vmatprep.mubr.bf16.mxu0 %v703
        %1227 = vmatmul.mubr.bf16.gmra.mrb[0].mxu0 %v702
        %v1228 = vpop.f32.mrb[0].mxu0
        %v1229 = vadd.f32 0.0, %v1228
        %v1230 = vpop.f32.mrb[0].mxu0
        %v1231 = vadd.f32 0.0, %v1230
        %v1232 = vpop.f32.mrb[0].mxu0
        %v1233 = vadd.f32 0.0, %v1232
        %v1234 = vpop.f32.mrb[0].mxu0
        %v1235 = vadd.f32 0.0, %v1234
        %1236 = vdwg.mxu0
        %1237 = vmatprep.subr.bf16.mxu0 %v995
        %1238 = vmatpush1.bf16.msra.mxu0 %v994
        %1239 = vmatprep.subr.bf16.mxu0 %v1001
        %1240 = vmatpush1.bf16.msra.mxu0 %v1000
        %1241 = vmatprep.subr.bf16.mxu0 %v1007
        %1242 = vmatpush1.bf16.msra.mxu0 %v1006
        %1243 = vmatprep.subr.bf16.mxu0 %v1013
        %1244 = vmatpush1.bf16.msra.mxu0 %v1012
        %1245 = vmatprep.subr.bf16.mxu0 %v1019
        %1246 = vmatpush1.bf16.msra.mxu0 %v1018
        %1247 = vmatprep.subr.bf16.mxu0 %v1025
        %1248 = vmatpush1.bf16.msra.mxu0 %v1024
        %1249 = vmatprep.subr.bf16.mxu0 %v1031
        %1250 = vmatpush1.bf16.msra.mxu0 %v1030
        %1251 = vmatprep.subr.bf16.mxu0 %v1037
        %1252 = vmatpush1.bf16.msra.mxu0 %v1036
        %1253 = vmatprep.subr.bf16.mxu0 %v1043
        %1254 = vmatpush1.bf16.msra.mxu0 %v1042
        %1255 = vmatprep.subr.bf16.mxu0 %v1049
        %1256 = vmatpush1.bf16.msra.mxu0 %v1048
        %1257 = vmatprep.subr.bf16.mxu0 %v1055
        %1258 = vmatpush1.bf16.msra.mxu0 %v1054
        %1259 = vmatprep.subr.bf16.mxu0 %v1061
        %1260 = vmatpush1.bf16.msra.mxu0 %v1060
        %1261 = vmatprep.subr.bf16.mxu0 %v1067
        %1262 = vmatpush1.bf16.msra.mxu0 %v1066
        %1263 = vmatprep.subr.bf16.mxu0 %v1073
        %1264 = vmatpush1.bf16.msra.mxu0 %v1072
        %1265 = vmatprep.subr.bf16.mxu0 %v1079
        %1266 = vmatpush1.bf16.msra.mxu0 %v1078
        %1267 = vmatprep.subr.bf16.mxu0 %v1085
        %1268 = vmatpush1.bf16.msra.mxu0 %v1084
        %1269 = vmatprep.mubr.bf16.mxu0 %v701
        %1270 = vmatmul.mubr.bf16.gmra.mrb[0].mxu0 %v700
        %v1271 = vpop.f32.mrb[0].mxu0
        %v1272 = vadd.f32 0.0, %v1271
        %v1273 = vpop.f32.mrb[0].mxu0
        %v1274 = vadd.f32 0.0, %v1273
        %v1275 = vpop.f32.mrb[0].mxu0
        %v1276 = vadd.f32 0.0, %v1275
        %v1277 = vpop.f32.mrb[0].mxu0
        %v1278 = vadd.f32 0.0, %v1277
        %1279 = vmatprep.mubr.bf16.mxu0 %v703
        %1280 = vmatmul.mubr.bf16.gmra.mrb[0].mxu0 %v702
        %v1281 = vpop.f32.mrb[0].mxu0
        %v1282 = vadd.f32 0.0, %v1281
        %v1283 = vpop.f32.mrb[0].mxu0
        %v1284 = vadd.f32 0.0, %v1283
        %v1285 = vpop.f32.mrb[0].mxu0
        %v1286 = vadd.f32 0.0, %v1285
        %v1287 = vpop.f32.mrb[0].mxu0
        %v1288 = vadd.f32 0.0, %v1287
        %1289 = vdwg.mxu0
        %1290 = vmatprep.subr.bf16.mxu0 %v997
        %1291 = vmatpush1.bf16.msra.mxu0 %v996
        %1292 = vmatprep.subr.bf16.mxu0 %v1003
        %1293 = vmatpush1.bf16.msra.mxu0 %v1002
        %1294 = vmatprep.subr.bf16.mxu0 %v1009
        %1295 = vmatpush1.bf16.msra.mxu0 %v1008
        %1296 = vmatprep.subr.bf16.mxu0 %v1015
        %1297 = vmatpush1.bf16.msra.mxu0 %v1014
        %1298 = vmatprep.subr.bf16.mxu0 %v1021
        %1299 = vmatpush1.bf16.msra.mxu0 %v1020
        %1300 = vmatprep.subr.bf16.mxu0 %v1027
        %1301 = vmatpush1.bf16.msra.mxu0 %v1026
        %1302 = vmatprep.subr.bf16.mxu0 %v1033
        %1303 = vmatpush1.bf16.msra.mxu0 %v1032
        %1304 = vmatprep.subr.bf16.mxu0 %v1039
        %1305 = vmatpush1.bf16.msra.mxu0 %v1038
        %1306 = vmatprep.subr.bf16.mxu0 %v1045
        %1307 = vmatpush1.bf16.msra.mxu0 %v1044
        %1308 = vmatprep.subr.bf16.mxu0 %v1051
        %1309 = vmatpush1.bf16.msra.mxu0 %v1050
        %1310 = vmatprep.subr.bf16.mxu0 %v1057
        %1311 = vmatpush1.bf16.msra.mxu0 %v1056
        %1312 = vmatprep.subr.bf16.mxu0 %v1063
        %1313 = vmatpush1.bf16.msra.mxu0 %v1062
        %1314 = vmatprep.subr.bf16.mxu0 %v1069
        %1315 = vmatpush1.bf16.msra.mxu0 %v1068
        %1316 = vmatprep.subr.bf16.mxu0 %v1075
        %1317 = vmatpush1.bf16.msra.mxu0 %v1074
        %1318 = vmatprep.subr.bf16.mxu0 %v1081
        %1319 = vmatpush1.bf16.msra.mxu0 %v1080
        %1320 = vmatprep.subr.bf16.mxu0 %v1087
        %1321 = vmatpush1.bf16.msra.mxu0 %v1086
        %1322 = vmatprep.mubr.bf16.mxu0 %v701
        %1323 = vmatmul.mubr.bf16.gmra.mrb[0].mxu0 %v700
        %v1324 = vpop.f32.mrb[0].mxu0
        %v1325 = vadd.f32 0.0, %v1324
        %v1326 = vpop.f32.mrb[0].mxu0
        %v1327 = vadd.f32 0.0, %v1326
        %v1328 = vpop.f32.mrb[0].mxu0
        %v1329 = vadd.f32 0.0, %v1328
        %v1330 = vpop.f32.mrb[0].mxu0
        %v1331 = vadd.f32 0.0, %v1330
        %1332 = vmatprep.mubr.bf16.mxu0 %v703
        %1333 = vmatmul.mubr.bf16.gmra.mrb[0].mxu0 %v702
        %v1334 = vpop.f32.mrb[0].mxu0
        %v1335 = vadd.f32 0.0, %v1334
        %v1336 = vpop.f32.mrb[0].mxu0
        %v1337 = vadd.f32 0.0, %v1336
        %v1338 = vpop.f32.mrb[0].mxu0
        %v1339 = vadd.f32 0.0, %v1338
        %v1340 = vpop.f32.mrb[0].mxu0
        %v1341 = vadd.f32 0.0, %v1340
        %1342 = vdwg.mxu0
        %v1343 = vpack.c.bf16 %v1223, %v1219
        %v1344 = vpack.c.bf16 %v1233, %v1229
        %v1345 = vpack.c.bf16 %v1276, %v1272
        %v1346 = vpack.c.bf16 %v1286, %v1282
        %1347 = vmatprep.subr.bf16.mxu0 0
        %1348 = vmatpush1.bf16.xpose.msra.mxu0 %v1345
        %1349 = vmatprep.subr.bf16.mxu0 0
        %1350 = vmatpush1.bf16.xpose.msra.mxu0 %v1346
        %1351 = vmatprep.subr.bf16.mxu0 0
        %1352 = vmatpush1.bf16.xpose.msra.mxu0 0
        %1353 = vmatprep.subr.bf16.mxu0 0
        %1354 = vmatpush1.bf16.xpose.msra.mxu0 0
        %1355 = vmatprep.subr.bf16.mxu0 0
        %1356 = vmatpush1.bf16.xpose.msra.mxu0 0
        %1357 = vmatprep.subr.bf16.mxu0 0
        %1358 = vmatpush1.bf16.xpose.msra.mxu0 0
        %1359 = vmatprep.subr.bf16.mxu0 0
        %1360 = vmatpush1.bf16.xpose.msra.mxu0 0
        %1361 = vmatprep.subr.bf16.mxu0 0
        %1362 = vmatpush1.bf16.xpose.msra.mxu0 0
        %1363 = vmatprep.subr.bf16.mxu0 0
        %1364 = vmatpush1.bf16.xpose.msra.mxu0 0
        %1365 = vmatprep.subr.bf16.mxu0 0
        %1366 = vmatpush1.bf16.xpose.msra.mxu0 0
        %1367 = vmatprep.subr.bf16.mxu0 0
        %1368 = vmatpush1.bf16.xpose.msra.mxu0 0
        %1369 = vmatprep.subr.bf16.mxu0 0
        %1370 = vmatpush1.bf16.xpose.msra.mxu0 0
        %1371 = vmatprep.subr.bf16.mxu0 0
        %1372 = vmatpush1.bf16.xpose.msra.mxu0 0
        %1373 = vmatprep.subr.bf16.mxu0 0
        %1374 = vmatpush1.bf16.xpose.msra.mxu0 0
        %1375 = vmatprep.subr.bf16.mxu0 0
        %1376 = vmatpush1.bf16.xpose.msra.mxu0 0
        %1377 = vmatprep.subr.bf16.mxu0 0
        %1378 = vmatpush1.bf16.xpose.msra.mxu0 0
        %1379 = vmatprep.mubr.bf16.mxu0 0
        %1380 = vmatmul.mubr.bf16.gmra.mrb[0].mxu0 %v1343
        %v1381 = vpop.f32.mrb[0].mxu0
        %v1382 = vadd.f32 0.0, %v1381
        %v1383 = vpop.f32.mrb[0].mxu0
        %v1384 = vpop.f32.mrb[0].mxu0
        %v1385 = vadd.f32 0.0, %v1384
        %v1386 = vpop.f32.mrb[0].mxu0
        %1387 = vmatprep.mubr.bf16.mxu0 0
        %1388 = vmatmul.mubr.bf16.gmra.mrb[0].mxu0 %v1344
        %v1389 = vpop.f32.mrb[0].mxu0
        %v1390 = vadd.f32 0.0, %v1389
        %v1391 = vpop.f32.mrb[0].mxu0
        %v1392 = vpop.f32.mrb[0].mxu0
        %v1393 = vadd.f32 0.0, %v1392
        %v1394 = vpop.f32.mrb[0].mxu0
        %1395 = vdwg.mxu0
        %v1396 = vmul.f32 %v1382, 0.088388346
        %v1397 = vmul.f32 %v1385, 0.088388346
        %v1398 = vmul.f32 %v1390, 0.088388346
        %v1399 = vmul.f32 %v1393, 0.088388346
        %vm1400 = vcmask 261120
        %v1401 = vsel %vm1400, %v1396, -inf
        %1402 = vmax.xlane.f32.xlu0 %v1401
        %v1403 = vpop.xlane.xlu0 %1402
        %v1404 = vsel %vm1400, %v1397, -inf
        %1405 = vmax.xlane.f32.xlu0 %v1404
        %v1406 = vpop.xlane.xlu0 %1405
        %v1407 = vsel %vm1400, %v1398, -inf
        %1408 = vmax.xlane.f32.xlu0 %v1407
        %v1409 = vpop.xlane.xlu0 %1408
        %v1410 = vsel %vm1400, %v1399, -inf
        %1411 = vmax.xlane.f32.xlu0 %v1410
        %v1412 = vpop.xlane.xlu0 %1411
        %v1413 = vsub.f32 %v1396, %v1403
        %v1414 = vsub.f32 %v1397, %v1406
        %v1415 = vsub.f32 %v1398, %v1409
        %v1416 = vsub.f32 %v1399, %v1412
        %v1417 = vmul.f32 %v1413, 1.442695
        %v1418 = vpow.pop %v1417
        %v1419 = vmul.f32 %v1414, 1.442695
        %v1420 = vpow.pop %v1419
        %v1421 = vmul.f32 %v1415, 1.442695
        %v1422 = vpow.pop %v1421
        %v1423 = vmul.f32 %v1416, 1.442695
        %v1424 = vpow.pop %v1423
        %v1425 = vsel %vm1400, %v1418, 0.0
        %1426 = vadd.xlane.f32.xlu0 %v1425
        %v1427 = vpop.xlane.xlu0 %1426
        %v1428 = vsel %vm1400, %v1420, 0.0
        %1429 = vadd.xlane.f32.xlu0 %v1428
        %v1430 = vpop.xlane.xlu0 %1429
        %v1431 = vsel %vm1400, %v1422, 0.0
        %1432 = vadd.xlane.f32.xlu0 %v1431
        %v1433 = vpop.xlane.xlu0 %1432
        %v1434 = vsel %vm1400, %v1424, 0.0
        %1435 = vadd.xlane.f32.xlu0 %v1434
        %v1436 = vpop.xlane.xlu0 %1435
        %v1437 = vrcp.pop %v1427
        %v1438 = vrcp.pop %v1430
        %v1439 = vrcp.pop %v1433
        %v1440 = vrcp.pop %v1436
        %v1441 = vmul.f32 %v1418, %v1437
        %v1442 = vmul.f32 %v1420, %v1438
        %v1443 = vmul.f32 %v1422, %v1439
        %v1444 = vmul.f32 %v1424, %v1440
        %v1445 = vpack.c.bf16 %v1329, %v1325
        %v1446 = vpack.c.bf16 %v1339, %v1335
        %v1447 = vpack.c.bf16 %v1442, %v1441
        %v1448 = vpack.c.bf16 %v1444, %v1443
        %v1450 = vsel %vm1400, %v1447, 0
        %v1453 = vsel %vm1400, %v1448, 0
        %1455 = vmatprep.subr.bf16.mxu0 0
        %1456 = vmatpush1.bf16.msra.mxu0 %v1445
        %1457 = vmatprep.subr.bf16.mxu0 0
        %1458 = vmatpush1.bf16.msra.mxu0 %v1446
        %1459 = vmatprep.subr.bf16.mxu0 0
        %1460 = vmatpush1.bf16.msra.mxu0 0
        %1461 = vmatprep.subr.bf16.mxu0 0
        %1462 = vmatpush1.bf16.msra.mxu0 0
        %1463 = vmatprep.subr.bf16.mxu0 0
        %1464 = vmatpush1.bf16.msra.mxu0 0
        %1465 = vmatprep.subr.bf16.mxu0 0
        %1466 = vmatpush1.bf16.msra.mxu0 0
        %1467 = vmatprep.subr.bf16.mxu0 0
        %1468 = vmatpush1.bf16.msra.mxu0 0
        %1469 = vmatprep.subr.bf16.mxu0 0
        %1470 = vmatpush1.bf16.msra.mxu0 0
        %1471 = vmatprep.subr.bf16.mxu0 0
        %1472 = vmatpush1.bf16.msra.mxu0 0
        %1473 = vmatprep.subr.bf16.mxu0 0
        %1474 = vmatpush1.bf16.msra.mxu0 0
        %1475 = vmatprep.subr.bf16.mxu0 0
        %1476 = vmatpush1.bf16.msra.mxu0 0
        %1477 = vmatprep.subr.bf16.mxu0 0
        %1478 = vmatpush1.bf16.msra.mxu0 0
        %1479 = vmatprep.subr.bf16.mxu0 0
        %1480 = vmatpush1.bf16.msra.mxu0 0
        %1481 = vmatprep.subr.bf16.mxu0 0
        %1482 = vmatpush1.bf16.msra.mxu0 0
        %1483 = vmatprep.subr.bf16.mxu0 0
        %1484 = vmatpush1.bf16.msra.mxu0 0
        %1485 = vmatprep.subr.bf16.mxu0 0
        %1486 = vmatpush1.bf16.msra.mxu0 0
        %1487 = vmatprep.mubr.bf16.mxu0 0
        %1488 = vmatmul.mubr.bf16.gmra.mrb[0].mxu0 %v1450
        %v1489 = vpop.f32.mrb[0].mxu0
        %v1490 = vadd.f32 0.0, %v1489
        %v1491 = vpop.f32.mrb[0].mxu0
        %v1492 = vpop.f32.mrb[0].mxu0
        %v1493 = vadd.f32 0.0, %v1492
        %v1494 = vpop.f32.mrb[0].mxu0
        %1495 = vmatprep.mubr.bf16.mxu0 0
        %1496 = vmatmul.mubr.bf16.gmra.mrb[0].mxu0 %v1453
        %v1497 = vpop.f32.mrb[0].mxu0
        %v1498 = vadd.f32 0.0, %v1497
        %v1499 = vpop.f32.mrb[0].mxu0
        %v1500 = vpop.f32.mrb[0].mxu0
        %v1501 = vadd.f32 0.0, %v1500
        %v1502 = vpop.f32.mrb[0].mxu0
        %1503 = vdwg.mxu0
        %v1504 = vld [vmem:[#allocation7] sm:$0xff]
        %v1505 = vld [vmem:[#allocation7 + $0x8] sm:$0xff]
        %v1506 = vld [vmem:[#allocation7 + $0x10] sm:$0xff]
        %v1507 = vld [vmem:[#allocation7 + $0x18] sm:$0xff]
        %v1508 = vld [vmem:[#allocation7 + $0x20] sm:$0xff]
        %v1509 = vld [vmem:[#allocation7 + $0x28] sm:$0xff]
        %v1510 = vld [vmem:[#allocation7 + $0x30] sm:$0xff]
        %v1511 = vld [vmem:[#allocation7 + $0x38] sm:$0xff]
        %v1512 = vld [vmem:[#allocation7 + $0x40] sm:$0xff]
        %v1513 = vld [vmem:[#allocation7 + $0x48] sm:$0xff]
        %v1514 = vld [vmem:[#allocation7 + $0x50] sm:$0xff]
        %v1515 = vld [vmem:[#allocation7 + $0x58] sm:$0xff]
        %v1516 = vld [vmem:[#allocation7 + $0x60] sm:$0xff]
        %v1517 = vld [vmem:[#allocation7 + $0x68] sm:$0xff]
        %v1518 = vld [vmem:[#allocation7 + $0x70] sm:$0xff]
        %v1519 = vld [vmem:[#allocation7 + $0x78] sm:$0xff]
        %v1520 = vpack.c.bf16 %v1493, %v1490
        %v1521 = vpack.c.bf16 %v1501, %v1498
        %v1522 = vpack.c.bf16 %v1225, %v1221
        %v1523 = vpack.c.bf16 %v1235, %v1231
        %v1524 = vpack.c.bf16 %v1278, %v1274
        %v1525 = vpack.c.bf16 %v1288, %v1284
        %1526 = vmatprep.subr.bf16.mxu0 0
        %1527 = vmatpush1.bf16.xpose.msra.mxu0 %v1524
        %1528 = vmatprep.subr.bf16.mxu0 0
        %1529 = vmatpush1.bf16.xpose.msra.mxu0 %v1525
        %1530 = vmatprep.subr.bf16.mxu0 0
        %1531 = vmatpush1.bf16.xpose.msra.mxu0 0
        %1532 = vmatprep.subr.bf16.mxu0 0
        %1533 = vmatpush1.bf16.xpose.msra.mxu0 0
        %1534 = vmatprep.subr.bf16.mxu0 0
        %1535 = vmatpush1.bf16.xpose.msra.mxu0 0
        %1536 = vmatprep.subr.bf16.mxu0 0
        %1537 = vmatpush1.bf16.xpose.msra.mxu0 0
        %1538 = vmatprep.subr.bf16.mxu0 0
        %1539 = vmatpush1.bf16.xpose.msra.mxu0 0
        %1540 = vmatprep.subr.bf16.mxu0 0
        %1541 = vmatpush1.bf16.xpose.msra.mxu0 0
        %1542 = vmatprep.subr.bf16.mxu0 0
        %1543 = vmatpush1.bf16.xpose.msra.mxu0 0
        %1544 = vmatprep.subr.bf16.mxu0 0
        %1545 = vmatpush1.bf16.xpose.msra.mxu0 0
        %1546 = vmatprep.subr.bf16.mxu0 0
        %1547 = vmatpush1.bf16.xpose.msra.mxu0 0
        %1548 = vmatprep.subr.bf16.mxu0 0
        %1549 = vmatpush1.bf16.xpose.msra.mxu0 0
        %1550 = vmatprep.subr.bf16.mxu0 0
        %1551 = vmatpush1.bf16.xpose.msra.mxu0 0
        %1552 = vmatprep.subr.bf16.mxu0 0
        %1553 = vmatpush1.bf16.xpose.msra.mxu0 0
        %1554 = vmatprep.subr.bf16.mxu0 0
        %1555 = vmatpush1.bf16.xpose.msra.mxu0 0
        %1556 = vmatprep.subr.bf16.mxu0 0
        %1557 = vmatpush1.bf16.xpose.msra.mxu0 0
        %1558 = vmatprep.mubr.bf16.mxu0 0
        %1559 = vmatmul.mubr.bf16.gmra.mrb[0].mxu0 %v1522
        %v1560 = vpop.f32.mrb[0].mxu0
        %v1561 = vadd.f32 0.0, %v1560
        %v1562 = vpop.f32.mrb[0].mxu0
        %v1563 = vpop.f32.mrb[0].mxu0
        %v1564 = vadd.f32 0.0, %v1563
        %v1565 = vpop.f32.mrb[0].mxu0
        %1566 = vmatprep.mubr.bf16.mxu0 0
        %1567 = vmatmul.mubr.bf16.gmra.mrb[0].mxu0 %v1523
        %v1568 = vpop.f32.mrb[0].mxu0
        %v1569 = vadd.f32 0.0, %v1568
        %v1570 = vpop.f32.mrb[0].mxu0
        %v1571 = vpop.f32.mrb[0].mxu0
        %v1572 = vadd.f32 0.0, %v1571
        %v1573 = vpop.f32.mrb[0].mxu0
        %1574 = vdwg.mxu0
        %v1575 = vmul.f32 %v1561, 0.088388346
        %v1576 = vmul.f32 %v1564, 0.088388346
        %v1577 = vmul.f32 %v1569, 0.088388346
        %v1578 = vmul.f32 %v1572, 0.088388346
        %v1579 = vsel %vm1400, %v1575, -inf
        %1580 = vmax.xlane.f32.xlu0 %v1579
        %v1581 = vpop.xlane.xlu0 %1580
        %v1582 = vsel %vm1400, %v1576, -inf
        %1583 = vmax.xlane.f32.xlu0 %v1582
        %v1584 = vpop.xlane.xlu0 %1583
        %v1585 = vsel %vm1400, %v1577, -inf
        %1586 = vmax.xlane.f32.xlu0 %v1585
        %v1587 = vpop.xlane.xlu0 %1586
        %v1588 = vsel %vm1400, %v1578, -inf
        %1589 = vmax.xlane.f32.xlu0 %v1588
        %v1590 = vpop.xlane.xlu0 %1589
        %v1591 = vsub.f32 %v1575, %v1581
        %v1592 = vsub.f32 %v1576, %v1584
        %v1593 = vsub.f32 %v1577, %v1587
        %v1594 = vsub.f32 %v1578, %v1590
        %v1595 = vmul.f32 %v1591, 1.442695
        %v1596 = vpow.pop %v1595
        %v1597 = vmul.f32 %v1592, 1.442695
        %v1598 = vpow.pop %v1597
        %v1599 = vmul.f32 %v1593, 1.442695
        %v1600 = vpow.pop %v1599
        %v1601 = vmul.f32 %v1594, 1.442695
        %v1602 = vpow.pop %v1601
        %v1603 = vsel %vm1400, %v1596, 0.0
        %1604 = vadd.xlane.f32.xlu0 %v1603
        %v1605 = vpop.xlane.xlu0 %1604
        %v1606 = vsel %vm1400, %v1598, 0.0
        %1607 = vadd.xlane.f32.xlu0 %v1606
        %v1608 = vpop.xlane.xlu0 %1607
        %v1609 = vsel %vm1400, %v1600, 0.0
        %1610 = vadd.xlane.f32.xlu0 %v1609
        %v1611 = vpop.xlane.xlu0 %1610
        %v1612 = vsel %vm1400, %v1602, 0.0
        %1613 = vadd.xlane.f32.xlu0 %v1612
        %v1614 = vpop.xlane.xlu0 %1613
        %v1615 = vrcp.pop %v1605
        %v1616 = vrcp.pop %v1608
        %v1617 = vrcp.pop %v1611
        %v1618 = vrcp.pop %v1614
        %v1619 = vmul.f32 %v1596, %v1615
        %v1620 = vmul.f32 %v1598, %v1616
        %v1621 = vmul.f32 %v1600, %v1617
        %v1622 = vmul.f32 %v1602, %v1618
        %v1623 = vpack.c.bf16 %v1331, %v1327
        %v1624 = vpack.c.bf16 %v1341, %v1337
        %v1625 = vpack.c.bf16 %v1620, %v1619
        %v1626 = vpack.c.bf16 %v1622, %v1621
        %v1628 = vsel %vm1400, %v1625, 0
        %v1631 = vsel %vm1400, %v1626, 0
        %1633 = vmatprep.subr.bf16.mxu0 0
        %1634 = vmatpush1.bf16.msra.mxu0 %v1623
        %1635 = vmatprep.subr.bf16.mxu0 0
        %1636 = vmatpush1.bf16.msra.mxu0 %v1624
        %1637 = vmatprep.subr.bf16.mxu0 0
        %1638 = vmatpush1.bf16.msra.mxu0 0
        %1639 = vmatprep.subr.bf16.mxu0 0
        %1640 = vmatpush1.bf16.msra.mxu0 0
        %1641 = vmatprep.subr.bf16.mxu0 0
        %1642 = vmatpush1.bf16.msra.mxu0 0
        %1643 = vmatprep.subr.bf16.mxu0 0
        %1644 = vmatpush1.bf16.msra.mxu0 0
        %1645 = vmatprep.subr.bf16.mxu0 0
        %1646 = vmatpush1.bf16.msra.mxu0 0
        %1647 = vmatprep.subr.bf16.mxu0 0
        %1648 = vmatpush1.bf16.msra.mxu0 0
        %1649 = vmatprep.subr.bf16.mxu0 0
        %1650 = vmatpush1.bf16.msra.mxu0 0
        %1651 = vmatprep.subr.bf16.mxu0 0
        %1652 = vmatpush1.bf16.msra.mxu0 0
        %1653 = vmatprep.subr.bf16.mxu0 0
        %1654 = vmatpush1.bf16.msra.mxu0 0
        %1655 = vmatprep.subr.bf16.mxu0 0
        %1656 = vmatpush1.bf16.msra.mxu0 0
        %1657 = vmatprep.subr.bf16.mxu0 0
        %1658 = vmatpush1.bf16.msra.mxu0 0
        %1659 = vmatprep.subr.bf16.mxu0 0
        %1660 = vmatpush1.bf16.msra.mxu0 0
        %1661 = vmatprep.subr.bf16.mxu0 0
        %1662 = vmatpush1.bf16.msra.mxu0 0
        %1663 = vmatprep.subr.bf16.mxu0 0
        %1664 = vmatpush1.bf16.msra.mxu0 0
        %1665 = vmatprep.mubr.bf16.mxu0 0
        %1666 = vmatmul.mubr.bf16.gmra.mrb[0].mxu0 %v1628
        %v1667 = vpop.f32.mrb[0].mxu0
        %v1668 = vadd.f32 0.0, %v1667
        %v1669 = vpop.f32.mrb[0].mxu0
        %v1670 = vpop.f32.mrb[0].mxu0
        %v1671 = vadd.f32 0.0, %v1670
        %v1672 = vpop.f32.mrb[0].mxu0
        %1673 = vmatprep.mubr.bf16.mxu0 0
        %1674 = vmatmul.mubr.bf16.gmra.mrb[0].mxu0 %v1631
        %v1675 = vpop.f32.mrb[0].mxu0
        %v1676 = vadd.f32 0.0, %v1675
        %v1677 = vpop.f32.mrb[0].mxu0
        %v1678 = vpop.f32.mrb[0].mxu0
        %v1679 = vadd.f32 0.0, %v1678
        %v1680 = vpop.f32.mrb[0].mxu0
        %1681 = vdwg.mxu0
        %v1682 = vld [vmem:[#allocation7 + $0x80] sm:$0xff]
        %v1683 = vld [vmem:[#allocation7 + $0x88] sm:$0xff]
        %v1684 = vld [vmem:[#allocation7 + $0x90] sm:$0xff]
        %v1685 = vld [vmem:[#allocation7 + $0x98] sm:$0xff]
        %v1686 = vld [vmem:[#allocation7 + $0xa0] sm:$0xff]
        %v1687 = vld [vmem:[#allocation7 + $0xa8] sm:$0xff]
        %v1688 = vld [vmem:[#allocation7 + $0xb0] sm:$0xff]
        %v1689 = vld [vmem:[#allocation7 + $0xb8] sm:$0xff]
        %v1690 = vld [vmem:[#allocation7 + $0xc0] sm:$0xff]
        %v1691 = vld [vmem:[#allocation7 + $0xc8] sm:$0xff]
        %v1692 = vld [vmem:[#allocation7 + $0xd0] sm:$0xff]
        %v1693 = vld [vmem:[#allocation7 + $0xd8] sm:$0xff]
        %v1694 = vld [vmem:[#allocation7 + $0xe0] sm:$0xff]
        %v1695 = vld [vmem:[#allocation7 + $0xe8] sm:$0xff]
        %v1696 = vld [vmem:[#allocation7 + $0xf0] sm:$0xff]
        %v1697 = vld [vmem:[#allocation7 + $0xf8] sm:$0xff]
        %v1698 = vpack.c.bf16 %v1671, %v1668
        %v1699 = vpack.c.bf16 %v1679, %v1676
        %v1716 = vunpack.c.l.b16 %v1682
        %v1717 = vunpack.c.h.b16 %v1682
        %v1718 = vunpack.c.l.b16 %v1683
        %v1719 = vunpack.c.h.b16 %v1683
        %v1720 = vunpack.c.l.b16 %v1684
        %v1721 = vunpack.c.h.b16 %v1684
        %v1722 = vunpack.c.l.b16 %v1685
        %v1723 = vunpack.c.h.b16 %v1685
        %v1724 = vunpack.c.l.b16 %v1686
        %v1725 = vunpack.c.h.b16 %v1686
        %v1726 = vunpack.c.l.b16 %v1687
        %v1727 = vunpack.c.h.b16 %v1687
        %v1728 = vunpack.c.l.b16 %v1688
        %v1729 = vunpack.c.h.b16 %v1688
        %v1730 = vunpack.c.l.b16 %v1689
        %v1731 = vunpack.c.h.b16 %v1689
        %v1732 = vunpack.c.l.b16 %v1690
        %v1733 = vunpack.c.h.b16 %v1690
        %v1734 = vunpack.c.l.b16 %v1691
        %v1735 = vunpack.c.h.b16 %v1691
        %v1736 = vunpack.c.l.b16 %v1692
        %v1737 = vunpack.c.h.b16 %v1692
        %v1738 = vunpack.c.l.b16 %v1693
        %v1739 = vunpack.c.h.b16 %v1693
        %v1740 = vunpack.c.l.b16 %v1694
        %v1741 = vunpack.c.h.b16 %v1694
        %v1742 = vunpack.c.l.b16 %v1695
        %v1743 = vunpack.c.h.b16 %v1695
        %v1744 = vunpack.c.l.b16 %v1696
        %v1745 = vunpack.c.h.b16 %v1696
        %v1746 = vunpack.c.l.b16 %v1697
        %v1747 = vunpack.c.h.b16 %v1697
        %v1748 = vpack.c.b16 %v1718, %v1716
        %v1749 = vpack.c.b16 %v1719, %v1717
        %v1750 = vpack.c.b16 %v1722, %v1720
        %v1751 = vpack.c.b16 %v1723, %v1721
        %v1752 = vpack.c.b16 %v1726, %v1724
        %v1753 = vpack.c.b16 %v1727, %v1725
        %v1754 = vpack.c.b16 %v1730, %v1728
        %v1755 = vpack.c.b16 %v1731, %v1729
        %v1756 = vpack.c.b16 %v1734, %v1732
        %v1757 = vpack.c.b16 %v1735, %v1733
        %v1758 = vpack.c.b16 %v1738, %v1736
        %v1759 = vpack.c.b16 %v1739, %v1737
        %v1760 = vpack.c.b16 %v1742, %v1740
        %v1761 = vpack.c.b16 %v1743, %v1741
        %v1762 = vpack.c.b16 %v1746, %v1744
        %v1763 = vpack.c.b16 %v1747, %v1745
        %1780 = vmatprep.subr.bf16.mxu0 %v1749
        %1781 = vmatpush1.bf16.msra.mxu0 %v1748
        %1782 = vmatprep.subr.bf16.mxu0 %v1751
        %1783 = vmatpush1.bf16.msra.mxu0 %v1750
        %1784 = vmatprep.subr.bf16.mxu0 %v1753
        %1785 = vmatpush1.bf16.msra.mxu0 %v1752
        %1786 = vmatprep.subr.bf16.mxu0 %v1755
        %1787 = vmatpush1.bf16.msra.mxu0 %v1754
        %1788 = vmatprep.subr.bf16.mxu0 %v1757
        %1789 = vmatpush1.bf16.msra.mxu0 %v1756
        %1790 = vmatprep.subr.bf16.mxu0 %v1759
        %1791 = vmatpush1.bf16.msra.mxu0 %v1758
        %1792 = vmatprep.subr.bf16.mxu0 %v1761
        %1793 = vmatpush1.bf16.msra.mxu0 %v1760
        %1794 = vmatprep.subr.bf16.mxu0 %v1763
        %1795 = vmatpush1.bf16.msra.mxu0 %v1762
        %1796 = vmatprep.subr.bf16.mxu0 0
        %1797 = vmatpush1.bf16.msra.mxu0 0
        %1798 = vmatprep.subr.bf16.mxu0 0
        %1799 = vmatpush1.bf16.msra.mxu0 0
        %1800 = vmatprep.subr.bf16.mxu0 0
        %1801 = vmatpush1.bf16.msra.mxu0 0
        %1802 = vmatprep.subr.bf16.mxu0 0
        %1803 = vmatpush1.bf16.msra.mxu0 0
        %1804 = vmatprep.subr.bf16.mxu0 0
        %1805 = vmatpush1.bf16.msra.mxu0 0
        %1806 = vmatprep.subr.bf16.mxu0 0
        %1807 = vmatpush1.bf16.msra.mxu0 0
        %1808 = vmatprep.subr.bf16.mxu0 0
        %1809 = vmatpush1.bf16.msra.mxu0 0
        %1810 = vmatprep.subr.bf16.mxu0 0
        %1811 = vmatpush1.bf16.msra.mxu0 0
        %1812 = vmatprep.mubr.bf16.mxu0 0
        %1813 = vmatmul.mubr.bf16.gmra.mrb[0].mxu0 %v1698
        %v1814 = vpop.f32.mrb[0].mxu0
        %v1815 = vadd.f32 0.0, %v1814
        %v1816 = vpop.f32.mrb[0].mxu0
        %v1817 = vadd.f32 0.0, %v1816
        %v1818 = vpop.f32.mrb[0].mxu0
        %v1819 = vadd.f32 0.0, %v1818
        %v1820 = vpop.f32.mrb[0].mxu0
        %v1821 = vadd.f32 0.0, %v1820
        %1822 = vmatprep.mubr.bf16.mxu0 0
        %1823 = vmatmul.mubr.bf16.gmra.mrb[0].mxu0 %v1699
        %v1824 = vpop.f32.mrb[0].mxu0
        %v1825 = vadd.f32 0.0, %v1824
        %v1826 = vpop.f32.mrb[0].mxu0
        %v1827 = vadd.f32 0.0, %v1826
        %v1828 = vpop.f32.mrb[0].mxu0
        %v1829 = vadd.f32 0.0, %v1828
        %v1830 = vpop.f32.mrb[0].mxu0
        %v1831 = vadd.f32 0.0, %v1830
        %1832 = vdwg.mxu0
        %v1849 = vunpack.c.l.b16 %v1504
        %v1850 = vunpack.c.h.b16 %v1504
        %v1851 = vunpack.c.l.b16 %v1505
        %v1852 = vunpack.c.h.b16 %v1505
        %v1853 = vunpack.c.l.b16 %v1506
        %v1854 = vunpack.c.h.b16 %v1506
        %v1855 = vunpack.c.l.b16 %v1507
        %v1856 = vunpack.c.h.b16 %v1507
        %v1857 = vunpack.c.l.b16 %v1508
        %v1858 = vunpack.c.h.b16 %v1508
        %v1859 = vunpack.c.l.b16 %v1509
        %v1860 = vunpack.c.h.b16 %v1509
        %v1861 = vunpack.c.l.b16 %v1510
        %v1862 = vunpack.c.h.b16 %v1510
        %v1863 = vunpack.c.l.b16 %v1511
        %v1864 = vunpack.c.h.b16 %v1511
        %v1865 = vunpack.c.l.b16 %v1512
        %v1866 = vunpack.c.h.b16 %v1512
        %v1867 = vunpack.c.l.b16 %v1513
        %v1868 = vunpack.c.h.b16 %v1513
        %v1869 = vunpack.c.l.b16 %v1514
        %v1870 = vunpack.c.h.b16 %v1514
        %v1871 = vunpack.c.l.b16 %v1515
        %v1872 = vunpack.c.h.b16 %v1515
        %v1873 = vunpack.c.l.b16 %v1516
        %v1874 = vunpack.c.h.b16 %v1516
        %v1875 = vunpack.c.l.b16 %v1517
        %v1876 = vunpack.c.h.b16 %v1517
        %v1877 = vunpack.c.l.b16 %v1518
        %v1878 = vunpack.c.h.b16 %v1518
        %v1879 = vunpack.c.l.b16 %v1519
        %v1880 = vunpack.c.h.b16 %v1519
        %v1881 = vpack.c.b16 %v1851, %v1849
        %v1882 = vpack.c.b16 %v1852, %v1850
        %v1883 = vpack.c.b16 %v1855, %v1853
        %v1884 = vpack.c.b16 %v1856, %v1854
        %v1885 = vpack.c.b16 %v1859, %v1857
        %v1886 = vpack.c.b16 %v1860, %v1858
        %v1887 = vpack.c.b16 %v1863, %v1861
        %v1888 = vpack.c.b16 %v1864, %v1862
        %v1889 = vpack.c.b16 %v1867, %v1865
        %v1890 = vpack.c.b16 %v1868, %v1866
        %v1891 = vpack.c.b16 %v1871, %v1869
        %v1892 = vpack.c.b16 %v1872, %v1870
        %v1893 = vpack.c.b16 %v1875, %v1873
        %v1894 = vpack.c.b16 %v1876, %v1874
        %v1895 = vpack.c.b16 %v1879, %v1877
        %v1896 = vpack.c.b16 %v1880, %v1878
        %1913 = vmatprep.subr.bf16.mxu0 %v1882
        %1914 = vmatpush1.bf16.msra.mxu0 %v1881
        %1915 = vmatprep.subr.bf16.mxu0 %v1884
        %1916 = vmatpush1.bf16.msra.mxu0 %v1883
        %1917 = vmatprep.subr.bf16.mxu0 %v1886
        %1918 = vmatpush1.bf16.msra.mxu0 %v1885
        %1919 = vmatprep.subr.bf16.mxu0 %v1888
        %1920 = vmatpush1.bf16.msra.mxu0 %v1887
        %1921 = vmatprep.subr.bf16.mxu0 %v1890
        %1922 = vmatpush1.bf16.msra.mxu0 %v1889
        %1923 = vmatprep.subr.bf16.mxu0 %v1892
        %1924 = vmatpush1.bf16.msra.mxu0 %v1891
        %1925 = vmatprep.subr.bf16.mxu0 %v1894
        %1926 = vmatpush1.bf16.msra.mxu0 %v1893
        %1927 = vmatprep.subr.bf16.mxu0 %v1896
        %1928 = vmatpush1.bf16.msra.mxu0 %v1895
        %1929 = vmatprep.subr.bf16.mxu0 0
        %1930 = vmatpush1.bf16.msra.mxu0 0
        %1931 = vmatprep.subr.bf16.mxu0 0
        %1932 = vmatpush1.bf16.msra.mxu0 0
        %1933 = vmatprep.subr.bf16.mxu0 0
        %1934 = vmatpush1.bf16.msra.mxu0 0
        %1935 = vmatprep.subr.bf16.mxu0 0
        %1936 = vmatpush1.bf16.msra.mxu0 0
        %1937 = vmatprep.subr.bf16.mxu0 0
        %1938 = vmatpush1.bf16.msra.mxu0 0
        %1939 = vmatprep.subr.bf16.mxu0 0
        %1940 = vmatpush1.bf16.msra.mxu0 0
        %1941 = vmatprep.subr.bf16.mxu0 0
        %1942 = vmatpush1.bf16.msra.mxu0 0
        %1943 = vmatprep.subr.bf16.mxu0 0
        %1944 = vmatpush1.bf16.msra.mxu0 0
        %1945 = vmatprep.mubr.bf16.mxu0 0
        %1946 = vmatmul.mubr.bf16.gmra.mrb[0].mxu0 %v1520
        %v1947 = vpop.f32.mrb[0].mxu0
        %v1948 = vadd.f32 %v1815, %v1947
        %v1949 = vpop.f32.mrb[0].mxu0
        %v1950 = vadd.f32 %v1817, %v1949
        %v1951 = vpop.f32.mrb[0].mxu0
        %v1952 = vadd.f32 %v1819, %v1951
        %v1953 = vpop.f32.mrb[0].mxu0
        %v1954 = vadd.f32 %v1821, %v1953
        %1955 = vmatprep.mubr.bf16.mxu0 0
        %1956 = vmatmul.mubr.bf16.gmra.mrb[0].mxu0 %v1521
        %v1957 = vpop.f32.mrb[0].mxu0
        %v1958 = vadd.f32 %v1825, %v1957
        %v1959 = vpop.f32.mrb[0].mxu0
        %v1960 = vadd.f32 %v1827, %v1959
        %v1961 = vpop.f32.mrb[0].mxu0
        %v1962 = vadd.f32 %v1829, %v1961
        %v1963 = vpop.f32.mrb[0].mxu0
        %v1964 = vadd.f32 %v1831, %v1963
        %1965 = vdwg.mxu0
        %v1966 = vadd.f32 %v491, %v1948
        %v1967 = vadd.f32 %v492, %v1950
        %v1968 = vadd.f32 %v493, %v1952
        %v1969 = vadd.f32 %v494, %v1954
        %v1970 = vadd.f32 %v495, %v1958
        %v1971 = vadd.f32 %v496, %v1960
        %v1972 = vadd.f32 %v497, %v1962
        %v1973 = vadd.f32 %v498, %v1964
        %v1974 = vld [vmem:[%s5] sm:$0x3]
        %v1976 = vlaneseq
        %v1977 = vshrl.u32 %v1976, 7
        %v1978 = vsub.s32 0, %v1977
        %v1979 = vrot.slane %v1974, %v1978
        %v1980 = vlaneseq
        %v1981 = vshrl.u32 %v1980, 7
        %v1982 = vsub.s32 1, %v1981
        %v1983 = vrot.slane %v1974, %v1982
        %v1986 = vadd.f32 %v1966, %v1979
        %v1987 = vadd.f32 %v1967, %v1983
        %v1988 = vadd.f32 %v1968, %v1979
        %v1989 = vadd.f32 %v1969, %v1983
        %v1990 = vadd.f32 %v1970, %v1979
        %v1991 = vadd.f32 %v1971, %v1983
        %v1992 = vadd.f32 %v1972, %v1979
        %v1993 = vadd.f32 %v1973, %v1983
        %v1994 = vld [vmem:[%s6] sm:$0x3]
        %v1995 = vld [vmem:[%s7] sm:$0x3]
        %v1996 = vadd.f32 %v1986, %v1987
        %1997 = vadd.xlane.f32.xlu0 %v1996
        %v1998 = vpop.xlane.xlu0 %1997
        %v1999 = vadd.f32 %v1988, %v1989
        %2000 = vadd.xlane.f32.xlu0 %v1999
        %v2001 = vpop.xlane.xlu0 %2000
        %v2002 = vadd.f32 %v1990, %v1991
        %2003 = vadd.xlane.f32.xlu0 %v2002
        %v2004 = vpop.xlane.xlu0 %2003
        %v2005 = vadd.f32 %v1992, %v1993
        %2006 = vadd.xlane.f32.xlu0 %v2005
        %v2007 = vpop.xlane.xlu0 %2006
        %v2008 = vmul.f32 %v1998, %v513
        %v2009 = vmul.f32 %v2001, %v513
        %v2010 = vmul.f32 %v2004, %v513
        %v2011 = vmul.f32 %v2007, %v513
        %v2012 = vsub.f32 %v1986, %v2008
        %v2013 = vsub.f32 %v1987, %v2008
        %v2014 = vsub.f32 %v1988, %v2009
        %v2015 = vsub.f32 %v1989, %v2009
        %v2016 = vsub.f32 %v1990, %v2010
        %v2017 = vsub.f32 %v1991, %v2010
        %v2018 = vsub.f32 %v1992, %v2011
        %v2019 = vsub.f32 %v1993, %v2011
        %v2020 = vmul.f32 %v2012, %v2012
        %v2021 = vmul.f32 %v2013, %v2013
        %v2022 = vmul.f32 %v2014, %v2014
        %v2023 = vmul.f32 %v2015, %v2015
        %v2024 = vmul.f32 %v2016, %v2016
        %v2025 = vmul.f32 %v2017, %v2017
        %v2026 = vmul.f32 %v2018, %v2018
        %v2027 = vmul.f32 %v2019, %v2019
        %v2028 = vadd.f32 %v2020, %v2021
        %2029 = vadd.xlane.f32.xlu0 %v2028
        %v2030 = vpop.xlane.xlu0 %2029
        %v2031 = vadd.f32 %v2022, %v2023
        %2032 = vadd.xlane.f32.xlu0 %v2031
        %v2033 = vpop.xlane.xlu0 %2032
        %v2034 = vadd.f32 %v2024, %v2025
        %2035 = vadd.xlane.f32.xlu0 %v2034
        %v2036 = vpop.xlane.xlu0 %2035
        %v2037 = vadd.f32 %v2026, %v2027
        %2038 = vadd.xlane.f32.xlu0 %v2037
        %v2039 = vpop.xlane.xlu0 %2038
        %v2040 = vmul.f32 %v2030, %v513
        %v2041 = vmul.f32 %v2033, %v513
        %v2042 = vmul.f32 %v2036, %v513
        %v2043 = vmul.f32 %v2039, %v513
        %v2044 = vadd.f32 %v2040, 1e-05
        %v2045 = vadd.f32 %v2041, 1e-05
        %v2046 = vadd.f32 %v2042, 1e-05
        %v2047 = vadd.f32 %v2043, 1e-05
        %v2048 = vrsqrt.pop %v2044
        %v2049 = vrsqrt.pop %v2045
        %v2050 = vrsqrt.pop %v2046
        %v2051 = vrsqrt.pop %v2047
        %v2052 = vmul.f32 %v2012, %v2048
        %v2053 = vmul.f32 %v2013, %v2048
        %v2054 = vmul.f32 %v2014, %v2049
        %v2055 = vmul.f32 %v2015, %v2049
        %v2056 = vmul.f32 %v2016, %v2050
        %v2057 = vmul.f32 %v2017, %v2050
        %v2058 = vmul.f32 %v2018, %v2051
        %v2059 = vmul.f32 %v2019, %v2051
        %v2061 = vlaneseq
        %v2062 = vshrl.u32 %v2061, 7
        %v2063 = vsub.s32 0, %v2062
        %v2064 = vrot.slane %v1994, %v2063
        %v2065 = vlaneseq
        %v2066 = vshrl.u32 %v2065, 7
        %v2067 = vsub.s32 1, %v2066
        %v2068 = vrot.slane %v1994, %v2067
        %v2071 = vmul.f32 %v2052, %v2064
        %v2072 = vmul.f32 %v2053, %v2068
        %v2073 = vmul.f32 %v2054, %v2064
        %v2074 = vmul.f32 %v2055, %v2068
        %v2075 = vmul.f32 %v2056, %v2064
        %v2076 = vmul.f32 %v2057, %v2068
        %v2077 = vmul.f32 %v2058, %v2064
        %v2078 = vmul.f32 %v2059, %v2068
        %v2080 = vlaneseq
        %v2081 = vshrl.u32 %v2080, 7
        %v2082 = vsub.s32 0, %v2081
        %v2083 = vrot.slane %v1995, %v2082
        %v2084 = vlaneseq
        %v2085 = vshrl.u32 %v2084, 7
        %v2086 = vsub.s32 1, %v2085
        %v2087 = vrot.slane %v1995, %v2086
        %v2090 = vadd.f32 %v2071, %v2083
        %v2091 = vadd.f32 %v2072, %v2087
        %v2092 = vadd.f32 %v2073, %v2083
        %v2093 = vadd.f32 %v2074, %v2087
        %v2094 = vadd.f32 %v2075, %v2083
        %v2095 = vadd.f32 %v2076, %v2087
        %v2096 = vadd.f32 %v2077, %v2083
        %v2097 = vadd.f32 %v2078, %v2087
        %v2098 = vld [vmem:[#allocation8] sm:$0xff]
        %v2099 = vld [vmem:[#allocation8 + $0x8] sm:$0xff]
        %v2100 = vld [vmem:[#allocation8 + $0x10] sm:$0xff]
        %v2101 = vld [vmem:[#allocation8 + $0x18] sm:$0xff]
        %v2102 = vld [vmem:[#allocation8 + $0x20] sm:$0xff]
        %v2103 = vld [vmem:[#allocation8 + $0x28] sm:$0xff]
        %v2104 = vld [vmem:[#allocation8 + $0x30] sm:$0xff]
        %v2105 = vld [vmem:[#allocation8 + $0x38] sm:$0xff]
        %v2106 = vld [vmem:[#allocation8 + $0x40] sm:$0xff]
        %v2107 = vld [vmem:[#allocation8 + $0x48] sm:$0xff]
        %v2108 = vld [vmem:[#allocation8 + $0x50] sm:$0xff]
        %v2109 = vld [vmem:[#allocation8 + $0x58] sm:$0xff]
        %v2110 = vld [vmem:[#allocation8 + $0x60] sm:$0xff]
        %v2111 = vld [vmem:[#allocation8 + $0x68] sm:$0xff]
        %v2112 = vld [vmem:[#allocation8 + $0x70] sm:$0xff]
        %v2113 = vld [vmem:[#allocation8 + $0x78] sm:$0xff]
        %v2114 = vld [vmem:[#allocation8 + $0x80] sm:$0xff]
        %v2115 = vld [vmem:[#allocation8 + $0x88] sm:$0xff]
        %v2116 = vld [vmem:[#allocation8 + $0x90] sm:$0xff]
        %v2117 = vld [vmem:[#allocation8 + $0x98] sm:$0xff]
        %v2118 = vld [vmem:[#allocation8 + $0xa0] sm:$0xff]
        %v2119 = vld [vmem:[#allocation8 + $0xa8] sm:$0xff]
        %v2120 = vld [vmem:[#allocation8 + $0xb0] sm:$0xff]
        %v2121 = vld [vmem:[#allocation8 + $0xb8] sm:$0xff]
        %v2122 = vld [vmem:[#allocation8 + $0xc0] sm:$0xff]
        %v2123 = vld [vmem:[#allocation8 + $0xc8] sm:$0xff]
        %v2124 = vld [vmem:[#allocation8 + $0xd0] sm:$0xff]
        %v2125 = vld [vmem:[#allocation8 + $0xd8] sm:$0xff]
        %v2126 = vld [vmem:[#allocation8 + $0xe0] sm:$0xff]
        %v2127 = vld [vmem:[#allocation8 + $0xe8] sm:$0xff]
        %v2128 = vld [vmem:[#allocation8 + $0xf0] sm:$0xff]
        %v2129 = vld [vmem:[#allocation8 + $0xf8] sm:$0xff]
        %v2130 = vld [vmem:[#allocation8 + $0x100] sm:$0xff]
        %v2131 = vld [vmem:[#allocation8 + $0x108] sm:$0xff]
        %v2132 = vld [vmem:[#allocation8 + $0x110] sm:$0xff]
        %v2133 = vld [vmem:[#allocation8 + $0x118] sm:$0xff]
        %v2134 = vld [vmem:[#allocation8 + $0x120] sm:$0xff]
        %v2135 = vld [vmem:[#allocation8 + $0x128] sm:$0xff]
        %v2136 = vld [vmem:[#allocation8 + $0x130] sm:$0xff]
        %v2137 = vld [vmem:[#allocation8 + $0x138] sm:$0xff]
        %v2138 = vld [vmem:[#allocation8 + $0x140] sm:$0xff]
        %v2139 = vld [vmem:[#allocation8 + $0x148] sm:$0xff]
        %v2140 = vld [vmem:[#allocation8 + $0x150] sm:$0xff]
        %v2141 = vld [vmem:[#allocation8 + $0x158] sm:$0xff]
        %v2142 = vld [vmem:[#allocation8 + $0x160] sm:$0xff]
        %v2143 = vld [vmem:[#allocation8 + $0x168] sm:$0xff]
        %v2144 = vld [vmem:[#allocation8 + $0x170] sm:$0xff]
        %v2145 = vld [vmem:[#allocation8 + $0x178] sm:$0xff]
        %v2146 = vld [vmem:[#allocation8 + $0x180] sm:$0xff]
        %v2147 = vld [vmem:[#allocation8 + $0x188] sm:$0xff]
        %v2148 = vld [vmem:[#allocation8 + $0x190] sm:$0xff]
        %v2149 = vld [vmem:[#allocation8 + $0x198] sm:$0xff]
        %v2150 = vld [vmem:[#allocation8 + $0x1a0] sm:$0xff]
        %v2151 = vld [vmem:[#allocation8 + $0x1a8] sm:$0xff]
        %v2152 = vld [vmem:[#allocation8 + $0x1b0] sm:$0xff]
        %v2153 = vld [vmem:[#allocation8 + $0x1b8] sm:$0xff]
        %v2154 = vld [vmem:[#allocation8 + $0x1c0] sm:$0xff]
        %v2155 = vld [vmem:[#allocation8 + $0x1c8] sm:$0xff]
        %v2156 = vld [vmem:[#allocation8 + $0x1d0] sm:$0xff]
        %v2157 = vld [vmem:[#allocation8 + $0x1d8] sm:$0xff]
        %v2158 = vld [vmem:[#allocation8 + $0x1e0] sm:$0xff]
        %v2159 = vld [vmem:[#allocation8 + $0x1e8] sm:$0xff]
        %v2160 = vld [vmem:[#allocation8 + $0x1f0] sm:$0xff]
        %v2161 = vld [vmem:[#allocation8 + $0x1f8] sm:$0xff]
        %v2162 = vld [vmem:[#allocation8 + $0x200] sm:$0xff]
        %v2163 = vld [vmem:[#allocation8 + $0x208] sm:$0xff]
        %v2164 = vld [vmem:[#allocation8 + $0x210] sm:$0xff]
        %v2165 = vld [vmem:[#allocation8 + $0x218] sm:$0xff]
        %v2166 = vld [vmem:[#allocation8 + $0x220] sm:$0xff]
        %v2167 = vld [vmem:[#allocation8 + $0x228] sm:$0xff]
        %v2168 = vld [vmem:[#allocation8 + $0x230] sm:$0xff]
        %v2169 = vld [vmem:[#allocation8 + $0x238] sm:$0xff]
        %v2170 = vld [vmem:[#allocation8 + $0x240] sm:$0xff]
        %v2171 = vld [vmem:[#allocation8 + $0x248] sm:$0xff]
        %v2172 = vld [vmem:[#allocation8 + $0x250] sm:$0xff]
        %v2173 = vld [vmem:[#allocation8 + $0x258] sm:$0xff]
        %v2174 = vld [vmem:[#allocation8 + $0x260] sm:$0xff]
        %v2175 = vld [vmem:[#allocation8 + $0x268] sm:$0xff]
        %v2176 = vld [vmem:[#allocation8 + $0x270] sm:$0xff]
        %v2177 = vld [vmem:[#allocation8 + $0x278] sm:$0xff]
        %v2178 = vld [vmem:[#allocation8 + $0x280] sm:$0xff]
        %v2179 = vld [vmem:[#allocation8 + $0x288] sm:$0xff]
        %v2180 = vld [vmem:[#allocation8 + $0x290] sm:$0xff]
        %v2181 = vld [vmem:[#allocation8 + $0x298] sm:$0xff]
        %v2182 = vld [vmem:[#allocation8 + $0x2a0] sm:$0xff]
        %v2183 = vld [vmem:[#allocation8 + $0x2a8] sm:$0xff]
        %v2184 = vld [vmem:[#allocation8 + $0x2b0] sm:$0xff]
        %v2185 = vld [vmem:[#allocation8 + $0x2b8] sm:$0xff]
        %v2186 = vld [vmem:[#allocation8 + $0x2c0] sm:$0xff]
        %v2187 = vld [vmem:[#allocation8 + $0x2c8] sm:$0xff]
        %v2188 = vld [vmem:[#allocation8 + $0x2d0] sm:$0xff]
        %v2189 = vld [vmem:[#allocation8 + $0x2d8] sm:$0xff]
        %v2190 = vld [vmem:[#allocation8 + $0x2e0] sm:$0xff]
        %v2191 = vld [vmem:[#allocation8 + $0x2e8] sm:$0xff]
        %v2192 = vld [vmem:[#allocation8 + $0x2f0] sm:$0xff]
        %v2193 = vld [vmem:[#allocation8 + $0x2f8] sm:$0xff]
        %v2194 = vld [vmem:[#allocation8 + $0x300] sm:$0xff]
        %v2195 = vld [vmem:[#allocation8 + $0x308] sm:$0xff]
        %v2196 = vld [vmem:[#allocation8 + $0x310] sm:$0xff]
        %v2197 = vld [vmem:[#allocation8 + $0x318] sm:$0xff]
        %v2198 = vld [vmem:[#allocation8 + $0x320] sm:$0xff]
        %v2199 = vld [vmem:[#allocation8 + $0x328] sm:$0xff]
        %v2200 = vld [vmem:[#allocation8 + $0x330] sm:$0xff]
        %v2201 = vld [vmem:[#allocation8 + $0x338] sm:$0xff]
        %v2202 = vld [vmem:[#allocation8 + $0x340] sm:$0xff]
        %v2203 = vld [vmem:[#allocation8 + $0x348] sm:$0xff]
        %v2204 = vld [vmem:[#allocation8 + $0x350] sm:$0xff]
        %v2205 = vld [vmem:[#allocation8 + $0x358] sm:$0xff]
        %v2206 = vld [vmem:[#allocation8 + $0x360] sm:$0xff]
        %v2207 = vld [vmem:[#allocation8 + $0x368] sm:$0xff]
        %v2208 = vld [vmem:[#allocation8 + $0x370] sm:$0xff]
        %v2209 = vld [vmem:[#allocation8 + $0x378] sm:$0xff]
        %v2210 = vld [vmem:[#allocation8 + $0x380] sm:$0xff]
        %v2211 = vld [vmem:[#allocation8 + $0x388] sm:$0xff]
        %v2212 = vld [vmem:[#allocation8 + $0x390] sm:$0xff]
        %v2213 = vld [vmem:[#allocation8 + $0x398] sm:$0xff]
        %v2214 = vld [vmem:[#allocation8 + $0x3a0] sm:$0xff]
        %v2215 = vld [vmem:[#allocation8 + $0x3a8] sm:$0xff]
        %v2216 = vld [vmem:[#allocation8 + $0x3b0] sm:$0xff]
        %v2217 = vld [vmem:[#allocation8 + $0x3b8] sm:$0xff]
        %v2218 = vld [vmem:[#allocation8 + $0x3c0] sm:$0xff]
        %v2219 = vld [vmem:[#allocation8 + $0x3c8] sm:$0xff]
        %v2220 = vld [vmem:[#allocation8 + $0x3d0] sm:$0xff]
        %v2221 = vld [vmem:[#allocation8 + $0x3d8] sm:$0xff]
        %v2222 = vld [vmem:[#allocation8 + $0x3e0] sm:$0xff]
        %v2223 = vld [vmem:[#allocation8 + $0x3e8] sm:$0xff]
        %v2224 = vld [vmem:[#allocation8 + $0x3f0] sm:$0xff]
        %v2225 = vld [vmem:[#allocation8 + $0x3f8] sm:$0xff]
        %v2226 = vpack.c.bf16 %v2092, %v2090
        %v2227 = vpack.c.bf16 %v2093, %v2091
        %v2228 = vpack.c.bf16 %v2096, %v2094
        %v2229 = vpack.c.bf16 %v2097, %v2095
        %v2230 = vld [vmem:[%s9] sm:$0xff]
        %v2232 = vlaneseq
        %v2233 = vshrl.u32 %v2232, 7
        %v2234 = vsub.s32 0, %v2233
        %v2235 = vrot.slane %v2230, %v2234
        %v2236 = vlaneseq
        %v2237 = vshrl.u32 %v2236, 7
        %v2238 = vsub.s32 1, %v2237
        %v2239 = vrot.slane %v2230, %v2238
        %v2240 = vlaneseq
        %v2241 = vshrl.u32 %v2240, 7
        %v2242 = vsub.s32 2, %v2241
        %v2243 = vrot.slane %v2230, %v2242
        %v2244 = vlaneseq
        %v2245 = vshrl.u32 %v2244, 7
        %v2246 = vsub.s32 3, %v2245
        %v2247 = vrot.slane %v2230, %v2246
        %v2248 = vlaneseq
        %v2249 = vshrl.u32 %v2248, 7
        %v2250 = vsub.s32 4, %v2249
        %v2251 = vrot.slane %v2230, %v2250
        %v2252 = vlaneseq
        %v2253 = vshrl.u32 %v2252, 7
        %v2254 = vsub.s32 5, %v2253
        %v2255 = vrot.slane %v2230, %v2254
        %v2256 = vlaneseq
        %v2257 = vshrl.u32 %v2256, 7
        %v2258 = vsub.s32 6, %v2257
        %v2259 = vrot.slane %v2230, %v2258
        %v2260 = vlaneseq
        %v2261 = vshrl.u32 %v2260, 7
        %v2262 = vsub.s32 7, %v2261
        %v2263 = vrot.slane %v2230, %v2262
        %v2400 = vunpack.c.l.b16 %v2098
        %v2401 = vunpack.c.h.b16 %v2098
        %v2402 = vunpack.c.l.b16 %v2099
        %v2403 = vunpack.c.h.b16 %v2099
        %v2404 = vunpack.c.l.b16 %v2100
        %v2405 = vunpack.c.h.b16 %v2100
        %v2406 = vunpack.c.l.b16 %v2101
        %v2407 = vunpack.c.h.b16 %v2101
        %v2408 = vunpack.c.l.b16 %v2102
        %v2409 = vunpack.c.h.b16 %v2102
        %v2410 = vunpack.c.l.b16 %v2103
        %v2411 = vunpack.c.h.b16 %v2103
        %v2412 = vunpack.c.l.b16 %v2104
        %v2413 = vunpack.c.h.b16 %v2104
        %v2414 = vunpack.c.l.b16 %v2105
        %v2415 = vunpack.c.h.b16 %v2105
        %v2416 = vunpack.c.l.b16 %v2106
        %v2417 = vunpack.c.h.b16 %v2106
        %v2418 = vunpack.c.l.b16 %v2107
        %v2419 = vunpack.c.h.b16 %v2107
        %v2420 = vunpack.c.l.b16 %v2108
        %v2421 = vunpack.c.h.b16 %v2108
        %v2422 = vunpack.c.l.b16 %v2109
        %v2423 = vunpack.c.h.b16 %v2109
        %v2424 = vunpack.c.l.b16 %v2110
        %v2425 = vunpack.c.h.b16 %v2110
        %v2426 = vunpack.c.l.b16 %v2111
        %v2427 = vunpack.c.h.b16 %v2111
        %v2428 = vunpack.c.l.b16 %v2112
        %v2429 = vunpack.c.h.b16 %v2112
        %v2430 = vunpack.c.l.b16 %v2113
        %v2431 = vunpack.c.h.b16 %v2113
        %v2432 = vunpack.c.l.b16 %v2114
        %v2433 = vunpack.c.h.b16 %v2114
        %v2434 = vunpack.c.l.b16 %v2115
        %v2435 = vunpack.c.h.b16 %v2115
        %v2436 = vunpack.c.l.b16 %v2116
        %v2437 = vunpack.c.h.b16 %v2116
        %v2438 = vunpack.c.l.b16 %v2117
        %v2439 = vunpack.c.h.b16 %v2117
        %v2440 = vunpack.c.l.b16 %v2118
        %v2441 = vunpack.c.h.b16 %v2118
        %v2442 = vunpack.c.l.b16 %v2119
        %v2443 = vunpack.c.h.b16 %v2119
        %v2444 = vunpack.c.l.b16 %v2120
        %v2445 = vunpack.c.h.b16 %v2120
        %v2446 = vunpack.c.l.b16 %v2121
        %v2447 = vunpack.c.h.b16 %v2121
        %v2448 = vunpack.c.l.b16 %v2122
        %v2449 = vunpack.c.h.b16 %v2122
        %v2450 = vunpack.c.l.b16 %v2123
        %v2451 = vunpack.c.h.b16 %v2123
        %v2452 = vunpack.c.l.b16 %v2124
        %v2453 = vunpack.c.h.b16 %v2124
        %v2454 = vunpack.c.l.b16 %v2125
        %v2455 = vunpack.c.h.b16 %v2125
        %v2456 = vunpack.c.l.b16 %v2126
        %v2457 = vunpack.c.h.b16 %v2126
        %v2458 = vunpack.c.l.b16 %v2127
        %v2459 = vunpack.c.h.b16 %v2127
        %v2460 = vunpack.c.l.b16 %v2128
        %v2461 = vunpack.c.h.b16 %v2128
        %v2462 = vunpack.c.l.b16 %v2129
        %v2463 = vunpack.c.h.b16 %v2129
        %v2464 = vunpack.c.l.b16 %v2130
        %v2465 = vunpack.c.h.b16 %v2130
        %v2466 = vunpack.c.l.b16 %v2131
        %v2467 = vunpack.c.h.b16 %v2131
        %v2468 = vunpack.c.l.b16 %v2132
        %v2469 = vunpack.c.h.b16 %v2132
        %v2470 = vunpack.c.l.b16 %v2133
        %v2471 = vunpack.c.h.b16 %v2133
        %v2472 = vunpack.c.l.b16 %v2134
        %v2473 = vunpack.c.h.b16 %v2134
        %v2474 = vunpack.c.l.b16 %v2135
        %v2475 = vunpack.c.h.b16 %v2135
        %v2476 = vunpack.c.l.b16 %v2136
        %v2477 = vunpack.c.h.b16 %v2136
        %v2478 = vunpack.c.l.b16 %v2137
        %v2479 = vunpack.c.h.b16 %v2137
        %v2480 = vunpack.c.l.b16 %v2138
        %v2481 = vunpack.c.h.b16 %v2138
        %v2482 = vunpack.c.l.b16 %v2139
        %v2483 = vunpack.c.h.b16 %v2139
        %v2484 = vunpack.c.l.b16 %v2140
        %v2485 = vunpack.c.h.b16 %v2140
        %v2486 = vunpack.c.l.b16 %v2141
        %v2487 = vunpack.c.h.b16 %v2141
        %v2488 = vunpack.c.l.b16 %v2142
        %v2489 = vunpack.c.h.b16 %v2142
        %v2490 = vunpack.c.l.b16 %v2143
        %v2491 = vunpack.c.h.b16 %v2143
        %v2492 = vunpack.c.l.b16 %v2144
        %v2493 = vunpack.c.h.b16 %v2144
        %v2494 = vunpack.c.l.b16 %v2145
        %v2495 = vunpack.c.h.b16 %v2145
        %v2496 = vunpack.c.l.b16 %v2146
        %v2497 = vunpack.c.h.b16 %v2146
        %v2498 = vunpack.c.l.b16 %v2147
        %v2499 = vunpack.c.h.b16 %v2147
        %v2500 = vunpack.c.l.b16 %v2148
        %v2501 = vunpack.c.h.b16 %v2148
        %v2502 = vunpack.c.l.b16 %v2149
        %v2503 = vunpack.c.h.b16 %v2149
        %v2504 = vunpack.c.l.b16 %v2150
        %v2505 = vunpack.c.h.b16 %v2150
        %v2506 = vunpack.c.l.b16 %v2151
        %v2507 = vunpack.c.h.b16 %v2151
        %v2508 = vunpack.c.l.b16 %v2152
        %v2509 = vunpack.c.h.b16 %v2152
        %v2510 = vunpack.c.l.b16 %v2153
        %v2511 = vunpack.c.h.b16 %v2153
        %v2512 = vunpack.c.l.b16 %v2154
        %v2513 = vunpack.c.h.b16 %v2154
        %v2514 = vunpack.c.l.b16 %v2155
        %v2515 = vunpack.c.h.b16 %v2155
        %v2516 = vunpack.c.l.b16 %v2156
        %v2517 = vunpack.c.h.b16 %v2156
        %v2518 = vunpack.c.l.b16 %v2157
        %v2519 = vunpack.c.h.b16 %v2157
        %v2520 = vunpack.c.l.b16 %v2158
        %v2521 = vunpack.c.h.b16 %v2158
        %v2522 = vunpack.c.l.b16 %v2159
        %v2523 = vunpack.c.h.b16 %v2159
        %v2524 = vunpack.c.l.b16 %v2160
        %v2525 = vunpack.c.h.b16 %v2160
        %v2526 = vunpack.c.l.b16 %v2161
        %v2527 = vunpack.c.h.b16 %v2161
        %v2528 = vunpack.c.l.b16 %v2162
        %v2529 = vunpack.c.h.b16 %v2162
        %v2530 = vunpack.c.l.b16 %v2163
        %v2531 = vunpack.c.h.b16 %v2163
        %v2532 = vunpack.c.l.b16 %v2164
        %v2533 = vunpack.c.h.b16 %v2164
        %v2534 = vunpack.c.l.b16 %v2165
        %v2535 = vunpack.c.h.b16 %v2165
        %v2536 = vunpack.c.l.b16 %v2166
        %v2537 = vunpack.c.h.b16 %v2166
        %v2538 = vunpack.c.l.b16 %v2167
        %v2539 = vunpack.c.h.b16 %v2167
        %v2540 = vunpack.c.l.b16 %v2168
        %v2541 = vunpack.c.h.b16 %v2168
        %v2542 = vunpack.c.l.b16 %v2169
        %v2543 = vunpack.c.h.b16 %v2169
        %v2544 = vunpack.c.l.b16 %v2170
        %v2545 = vunpack.c.h.b16 %v2170
        %v2546 = vunpack.c.l.b16 %v2171
        %v2547 = vunpack.c.h.b16 %v2171
        %v2548 = vunpack.c.l.b16 %v2172
        %v2549 = vunpack.c.h.b16 %v2172
        %v2550 = vunpack.c.l.b16 %v2173
        %v2551 = vunpack.c.h.b16 %v2173
        %v2552 = vunpack.c.l.b16 %v2174
        %v2553 = vunpack.c.h.b16 %v2174
        %v2554 = vunpack.c.l.b16 %v2175
        %v2555 = vunpack.c.h.b16 %v2175
        %v2556 = vunpack.c.l.b16 %v2176
        %v2557 = vunpack.c.h.b16 %v2176
        %v2558 = vunpack.c.l.b16 %v2177
        %v2559 = vunpack.c.h.b16 %v2177
        %v2560 = vunpack.c.l.b16 %v2178
        %v2561 = vunpack.c.h.b16 %v2178
        %v2562 = vunpack.c.l.b16 %v2179
        %v2563 = vunpack.c.h.b16 %v2179
        %v2564 = vunpack.c.l.b16 %v2180
        %v2565 = vunpack.c.h.b16 %v2180
        %v2566 = vunpack.c.l.b16 %v2181
        %v2567 = vunpack.c.h.b16 %v2181
        %v2568 = vunpack.c.l.b16 %v2182
        %v2569 = vunpack.c.h.b16 %v2182
        %v2570 = vunpack.c.l.b16 %v2183
        %v2571 = vunpack.c.h.b16 %v2183
        %v2572 = vunpack.c.l.b16 %v2184
        %v2573 = vunpack.c.h.b16 %v2184
        %v2574 = vunpack.c.l.b16 %v2185
        %v2575 = vunpack.c.h.b16 %v2185
        %v2576 = vunpack.c.l.b16 %v2186
        %v2577 = vunpack.c.h.b16 %v2186
        %v2578 = vunpack.c.l.b16 %v2187
        %v2579 = vunpack.c.h.b16 %v2187
        %v2580 = vunpack.c.l.b16 %v2188
        %v2581 = vunpack.c.h.b16 %v2188
        %v2582 = vunpack.c.l.b16 %v2189
        %v2583 = vunpack.c.h.b16 %v2189
        %v2584 = vunpack.c.l.b16 %v2190
        %v2585 = vunpack.c.h.b16 %v2190
        %v2586 = vunpack.c.l.b16 %v2191
        %v2587 = vunpack.c.h.b16 %v2191
        %v2588 = vunpack.c.l.b16 %v2192
        %v2589 = vunpack.c.h.b16 %v2192
        %v2590 = vunpack.c.l.b16 %v2193
        %v2591 = vunpack.c.h.b16 %v2193
        %v2592 = vunpack.c.l.b16 %v2194
        %v2593 = vunpack.c.h.b16 %v2194
        %v2594 = vunpack.c.l.b16 %v2195
        %v2595 = vunpack.c.h.b16 %v2195
        %v2596 = vunpack.c.l.b16 %v2196
        %v2597 = vunpack.c.h.b16 %v2196
        %v2598 = vunpack.c.l.b16 %v2197
        %v2599 = vunpack.c.h.b16 %v2197
        %v2600 = vunpack.c.l.b16 %v2198
        %v2601 = vunpack.c.h.b16 %v2198
        %v2602 = vunpack.c.l.b16 %v2199
        %v2603 = vunpack.c.h.b16 %v2199
        %v2604 = vunpack.c.l.b16 %v2200
        %v2605 = vunpack.c.h.b16 %v2200
        %v2606 = vunpack.c.l.b16 %v2201
        %v2607 = vunpack.c.h.b16 %v2201
        %v2608 = vunpack.c.l.b16 %v2202
        %v2609 = vunpack.c.h.b16 %v2202
        %v2610 = vunpack.c.l.b16 %v2203
        %v2611 = vunpack.c.h.b16 %v2203
        %v2612 = vunpack.c.l.b16 %v2204
        %v2613 = vunpack.c.h.b16 %v2204
        %v2614 = vunpack.c.l.b16 %v2205
        %v2615 = vunpack.c.h.b16 %v2205
        %v2616 = vunpack.c.l.b16 %v2206
        %v2617 = vunpack.c.h.b16 %v2206
        %v2618 = vunpack.c.l.b16 %v2207
        %v2619 = vunpack.c.h.b16 %v2207
        %v2620 = vunpack.c.l.b16 %v2208
        %v2621 = vunpack.c.h.b16 %v2208
        %v2622 = vunpack.c.l.b16 %v2209
        %v2623 = vunpack.c.h.b16 %v2209
        %v2624 = vunpack.c.l.b16 %v2210
        %v2625 = vunpack.c.h.b16 %v2210
        %v2626 = vunpack.c.l.b16 %v2211
        %v2627 = vunpack.c.h.b16 %v2211
        %v2628 = vunpack.c.l.b16 %v2212
        %v2629 = vunpack.c.h.b16 %v2212
        %v2630 = vunpack.c.l.b16 %v2213
        %v2631 = vunpack.c.h.b16 %v2213
        %v2632 = vunpack.c.l.b16 %v2214
        %v2633 = vunpack.c.h.b16 %v2214
        %v2634 = vunpack.c.l.b16 %v2215
        %v2635 = vunpack.c.h.b16 %v2215
        %v2636 = vunpack.c.l.b16 %v2216
        %v2637 = vunpack.c.h.b16 %v2216
        %v2638 = vunpack.c.l.b16 %v2217
        %v2639 = vunpack.c.h.b16 %v2217
        %v2640 = vunpack.c.l.b16 %v2218
        %v2641 = vunpack.c.h.b16 %v2218
        %v2642 = vunpack.c.l.b16 %v2219
        %v2643 = vunpack.c.h.b16 %v2219
        %v2644 = vunpack.c.l.b16 %v2220
        %v2645 = vunpack.c.h.b16 %v2220
        %v2646 = vunpack.c.l.b16 %v2221
        %v2647 = vunpack.c.h.b16 %v2221
        %v2648 = vunpack.c.l.b16 %v2222
        %v2649 = vunpack.c.h.b16 %v2222
        %v2650 = vunpack.c.l.b16 %v2223
        %v2651 = vunpack.c.h.b16 %v2223
        %v2652 = vunpack.c.l.b16 %v2224
        %v2653 = vunpack.c.h.b16 %v2224
        %v2654 = vunpack.c.l.b16 %v2225
        %v2655 = vunpack.c.h.b16 %v2225
        %v2656 = vpack.c.b16 %v2408, %v2400
        %v2657 = vpack.c.b16 %v2409, %v2401
        %v2658 = vpack.c.b16 %v2410, %v2402
        %v2659 = vpack.c.b16 %v2411, %v2403
        %v2660 = vpack.c.b16 %v2412, %v2404
        %v2661 = vpack.c.b16 %v2413, %v2405
        %v2662 = vpack.c.b16 %v2414, %v2406
        %v2663 = vpack.c.b16 %v2415, %v2407
        %v2664 = vpack.c.b16 %v2424, %v2416
        %v2665 = vpack.c.b16 %v2425, %v2417
        %v2666 = vpack.c.b16 %v2426, %v2418
        %v2667 = vpack.c.b16 %v2427, %v2419
        %v2668 = vpack.c.b16 %v2428, %v2420
        %v2669 = vpack.c.b16 %v2429, %v2421
        %v2670 = vpack.c.b16 %v2430, %v2422
        %v2671 = vpack.c.b16 %v2431, %v2423
        %v2672 = vpack.c.b16 %v2440, %v2432
        %v2673 = vpack.c.b16 %v2441, %v2433
        %v2674 = vpack.c.b16 %v2442, %v2434
        %v2675 = vpack.c.b16 %v2443, %v2435
        %v2676 = vpack.c.b16 %v2444, %v2436
        %v2677 = vpack.c.b16 %v2445, %v2437
        %v2678 = vpack.c.b16 %v2446, %v2438
        %v2679 = vpack.c.b16 %v2447, %v2439
        %v2680 = vpack.c.b16 %v2456, %v2448
        %v2681 = vpack.c.b16 %v2457, %v2449
        %v2682 = vpack.c.b16 %v2458, %v2450
        %v2683 = vpack.c.b16 %v2459, %v2451
        %v2684 = vpack.c.b16 %v2460, %v2452
        %v2685 = vpack.c.b16 %v2461, %v2453
        %v2686 = vpack.c.b16 %v2462, %v2454
        %v2687 = vpack.c.b16 %v2463, %v2455
        %v2688 = vpack.c.b16 %v2472, %v2464
        %v2689 = vpack.c.b16 %v2473, %v2465
        %v2690 = vpack.c.b16 %v2474, %v2466
        %v2691 = vpack.c.b16 %v2475, %v2467
        %v2692 = vpack.c.b16 %v2476, %v2468
        %v2693 = vpack.c.b16 %v2477, %v2469
        %v2694 = vpack.c.b16 %v2478, %v2470
        %v2695 = vpack.c.b16 %v2479, %v2471
        %v2696 = vpack.c.b16 %v2488, %v2480
        %v2697 = vpack.c.b16 %v2489, %v2481
        %v2698 = vpack.c.b16 %v2490, %v2482
        %v2699 = vpack.c.b16 %v2491, %v2483
        %v2700 = vpack.c.b16 %v2492, %v2484
        %v2701 = vpack.c.b16 %v2493, %v2485
        %v2702 = vpack.c.b16 %v2494, %v2486
        %v2703 = vpack.c.b16 %v2495, %v2487
        %v2704 = vpack.c.b16 %v2504, %v2496
        %v2705 = vpack.c.b16 %v2505, %v2497
        %v2706 = vpack.c.b16 %v2506, %v2498
        %v2707 = vpack.c.b16 %v2507, %v2499
        %v2708 = vpack.c.b16 %v2508, %v2500
        %v2709 = vpack.c.b16 %v2509, %v2501
        %v2710 = vpack.c.b16 %v2510, %v2502
        %v2711 = vpack.c.b16 %v2511, %v2503
        %v2712 = vpack.c.b16 %v2520, %v2512
        %v2713 = vpack.c.b16 %v2521, %v2513
        %v2714 = vpack.c.b16 %v2522, %v2514
        %v2715 = vpack.c.b16 %v2523, %v2515
        %v2716 = vpack.c.b16 %v2524, %v2516
        %v2717 = vpack.c.b16 %v2525, %v2517
        %v2718 = vpack.c.b16 %v2526, %v2518
        %v2719 = vpack.c.b16 %v2527, %v2519
        %v2720 = vpack.c.b16 %v2536, %v2528
        %v2721 = vpack.c.b16 %v2537, %v2529
        %v2722 = vpack.c.b16 %v2538, %v2530
        %v2723 = vpack.c.b16 %v2539, %v2531
        %v2724 = vpack.c.b16 %v2540, %v2532
        %v2725 = vpack.c.b16 %v2541, %v2533
        %v2726 = vpack.c.b16 %v2542, %v2534
        %v2727 = vpack.c.b16 %v2543, %v2535
        %v2728 = vpack.c.b16 %v2552, %v2544
        %v2729 = vpack.c.b16 %v2553, %v2545
        %v2730 = vpack.c.b16 %v2554, %v2546
        %v2731 = vpack.c.b16 %v2555, %v2547
        %v2732 = vpack.c.b16 %v2556, %v2548
        %v2733 = vpack.c.b16 %v2557, %v2549
        %v2734 = vpack.c.b16 %v2558, %v2550
        %v2735 = vpack.c.b16 %v2559, %v2551
        %v2736 = vpack.c.b16 %v2568, %v2560
        %v2737 = vpack.c.b16 %v2569, %v2561
        %v2738 = vpack.c.b16 %v2570, %v2562
        %v2739 = vpack.c.b16 %v2571, %v2563
        %v2740 = vpack.c.b16 %v2572, %v2564
        %v2741 = vpack.c.b16 %v2573, %v2565
        %v2742 = vpack.c.b16 %v2574, %v2566
        %v2743 = vpack.c.b16 %v2575, %v2567
        %v2744 = vpack.c.b16 %v2584, %v2576
        %v2745 = vpack.c.b16 %v2585, %v2577
        %v2746 = vpack.c.b16 %v2586, %v2578
        %v2747 = vpack.c.b16 %v2587, %v2579
        %v2748 = vpack.c.b16 %v2588, %v2580
        %v2749 = vpack.c.b16 %v2589, %v2581
        %v2750 = vpack.c.b16 %v2590, %v2582
        %v2751 = vpack.c.b16 %v2591, %v2583
        %v2752 = vpack.c.b16 %v2600, %v2592
        %v2753 = vpack.c.b16 %v2601, %v2593
        %v2754 = vpack.c.b16 %v2602, %v2594
        %v2755 = vpack.c.b16 %v2603, %v2595
        %v2756 = vpack.c.b16 %v2604, %v2596
        %v2757 = vpack.c.b16 %v2605, %v2597
        %v2758 = vpack.c.b16 %v2606, %v2598
        %v2759 = vpack.c.b16 %v2607, %v2599
        %v2760 = vpack.c.b16 %v2616, %v2608
        %v2761 = vpack.c.b16 %v2617, %v2609
        %v2762 = vpack.c.b16 %v2618, %v2610
        %v2763 = vpack.c.b16 %v2619, %v2611
        %v2764 = vpack.c.b16 %v2620, %v2612
        %v2765 = vpack.c.b16 %v2621, %v2613
        %v2766 = vpack.c.b16 %v2622, %v2614
        %v2767 = vpack.c.b16 %v2623, %v2615
        %v2768 = vpack.c.b16 %v2632, %v2624
        %v2769 = vpack.c.b16 %v2633, %v2625
        %v2770 = vpack.c.b16 %v2634, %v2626
        %v2771 = vpack.c.b16 %v2635, %v2627
        %v2772 = vpack.c.b16 %v2636, %v2628
        %v2773 = vpack.c.b16 %v2637, %v2629
        %v2774 = vpack.c.b16 %v2638, %v2630
        %v2775 = vpack.c.b16 %v2639, %v2631
        %v2776 = vpack.c.b16 %v2648, %v2640
        %v2777 = vpack.c.b16 %v2649, %v2641
        %v2778 = vpack.c.b16 %v2650, %v2642
        %v2779 = vpack.c.b16 %v2651, %v2643
        %v2780 = vpack.c.b16 %v2652, %v2644
        %v2781 = vpack.c.b16 %v2653, %v2645
        %v2782 = vpack.c.b16 %v2654, %v2646
        %v2783 = vpack.c.b16 %v2655, %v2647
        %2912 = vmatprep.subr.bf16.mxu0 %v2657
        %2913 = vmatpush1.bf16.msra.mxu0 %v2656
        %2914 = vmatprep.subr.bf16.mxu0 %v2665
        %2915 = vmatpush1.bf16.msra.mxu0 %v2664
        %2916 = vmatprep.subr.bf16.mxu0 %v2673
        %2917 = vmatpush1.bf16.msra.mxu0 %v2672
        %2918 = vmatprep.subr.bf16.mxu0 %v2681
        %2919 = vmatpush1.bf16.msra.mxu0 %v2680
        %2920 = vmatprep.subr.bf16.mxu0 %v2689
        %2921 = vmatpush1.bf16.msra.mxu0 %v2688
        %2922 = vmatprep.subr.bf16.mxu0 %v2697
        %2923 = vmatpush1.bf16.msra.mxu0 %v2696
        %2924 = vmatprep.subr.bf16.mxu0 %v2705
        %2925 = vmatpush1.bf16.msra.mxu0 %v2704
        %2926 = vmatprep.subr.bf16.mxu0 %v2713
        %2927 = vmatpush1.bf16.msra.mxu0 %v2712
        %2928 = vmatprep.subr.bf16.mxu0 %v2721
        %2929 = vmatpush1.bf16.msra.mxu0 %v2720
        %2930 = vmatprep.subr.bf16.mxu0 %v2729
        %2931 = vmatpush1.bf16.msra.mxu0 %v2728
        %2932 = vmatprep.subr.bf16.mxu0 %v2737
        %2933 = vmatpush1.bf16.msra.mxu0 %v2736
        %2934 = vmatprep.subr.bf16.mxu0 %v2745
        %2935 = vmatpush1.bf16.msra.mxu0 %v2744
        %2936 = vmatprep.subr.bf16.mxu0 %v2753
        %2937 = vmatpush1.bf16.msra.mxu0 %v2752
        %2938 = vmatprep.subr.bf16.mxu0 %v2761
        %2939 = vmatpush1.bf16.msra.mxu0 %v2760
        %2940 = vmatprep.subr.bf16.mxu0 %v2769
        %2941 = vmatpush1.bf16.msra.mxu0 %v2768
        %2942 = vmatprep.subr.bf16.mxu0 %v2777
        %2943 = vmatpush1.bf16.msra.mxu0 %v2776
        %2944 = vmatprep.mubr.bf16.mxu0 %v2227
        %2945 = vmatmul.mubr.bf16.gmra.mrb[0].mxu0 %v2226
        %v2946 = vpop.f32.mrb[0].mxu0
        %v2947 = vadd.f32 %v2235, %v2946
        %v2948 = vpop.f32.mrb[0].mxu0
        %v2949 = vadd.f32 %v2239, %v2948
        %v2950 = vpop.f32.mrb[0].mxu0
        %v2951 = vadd.f32 %v2235, %v2950
        %v2952 = vpop.f32.mrb[0].mxu0
        %v2953 = vadd.f32 %v2239, %v2952
        %2954 = vmatprep.mubr.bf16.mxu0 %v2229
        %2955 = vmatmul.mubr.bf16.gmra.mrb[0].mxu0 %v2228
        %v2956 = vpop.f32.mrb[0].mxu0
        %v2957 = vadd.f32 %v2235, %v2956
        %v2958 = vpop.f32.mrb[0].mxu0
        %v2959 = vadd.f32 %v2239, %v2958
        %v2960 = vpop.f32.mrb[0].mxu0
        %v2961 = vadd.f32 %v2235, %v2960
        %v2962 = vpop.f32.mrb[0].mxu0
        %v2963 = vadd.f32 %v2239, %v2962
        %2964 = vdwg.mxu0
        %2965 = vmatprep.subr.bf16.mxu0 %v2659
        %2966 = vmatpush1.bf16.msra.mxu0 %v2658
        %2967 = vmatprep.subr.bf16.mxu0 %v2667
        %2968 = vmatpush1.bf16.msra.mxu0 %v2666
        %2969 = vmatprep.subr.bf16.mxu0 %v2675
        %2970 = vmatpush1.bf16.msra.mxu0 %v2674
        %2971 = vmatprep.subr.bf16.mxu0 %v2683
        %2972 = vmatpush1.bf16.msra.mxu0 %v2682
        %2973 = vmatprep.subr.bf16.mxu0 %v2691
        %2974 = vmatpush1.bf16.msra.mxu0 %v2690
        %2975 = vmatprep.subr.bf16.mxu0 %v2699
        %2976 = vmatpush1.bf16.msra.mxu0 %v2698
        %2977 = vmatprep.subr.bf16.mxu0 %v2707
        %2978 = vmatpush1.bf16.msra.mxu0 %v2706
        %2979 = vmatprep.subr.bf16.mxu0 %v2715
        %2980 = vmatpush1.bf16.msra.mxu0 %v2714
        %2981 = vmatprep.subr.bf16.mxu0 %v2723
        %2982 = vmatpush1.bf16.msra.mxu0 %v2722
        %2983 = vmatprep.subr.bf16.mxu0 %v2731
        %2984 = vmatpush1.bf16.msra.mxu0 %v2730
        %2985 = vmatprep.subr.bf16.mxu0 %v2739
        %2986 = vmatpush1.bf16.msra.mxu0 %v2738
        %2987 = vmatprep.subr.bf16.mxu0 %v2747
        %2988 = vmatpush1.bf16.msra.mxu0 %v2746
        %2989 = vmatprep.subr.bf16.mxu0 %v2755
        %2990 = vmatpush1.bf16.msra.mxu0 %v2754
        %2991 = vmatprep.subr.bf16.mxu0 %v2763
        %2992 = vmatpush1.bf16.msra.mxu0 %v2762
        %2993 = vmatprep.subr.bf16.mxu0 %v2771
        %2994 = vmatpush1.bf16.msra.mxu0 %v2770
        %2995 = vmatprep.subr.bf16.mxu0 %v2779
        %2996 = vmatpush1.bf16.msra.mxu0 %v2778
        %2997 = vmatprep.mubr.bf16.mxu0 %v2227
        %2998 = vmatmul.mubr.bf16.gmra.mrb[0].mxu0 %v2226
        %v2999 = vpop.f32.mrb[0].mxu0
        %v3000 = vadd.f32 %v2243, %v2999
        %v3001 = vpop.f32.mrb[0].mxu0
        %v3002 = vadd.f32 %v2247, %v3001
        %v3003 = vpop.f32.mrb[0].mxu0
        %v3004 = vadd.f32 %v2243, %v3003
        %v3005 = vpop.f32.mrb[0].mxu0
        %v3006 = vadd.f32 %v2247, %v3005
        %3007 = vmatprep.mubr.bf16.mxu0 %v2229
        %3008 = vmatmul.mubr.bf16.gmra.mrb[0].mxu0 %v2228
        %v3009 = vpop.f32.mrb[0].mxu0
        %v3010 = vadd.f32 %v2243, %v3009
        %v3011 = vpop.f32.mrb[0].mxu0
        %v3012 = vadd.f32 %v2247, %v3011
        %v3013 = vpop.f32.mrb[0].mxu0
        %v3014 = vadd.f32 %v2243, %v3013
        %v3015 = vpop.f32.mrb[0].mxu0
        %v3016 = vadd.f32 %v2247, %v3015
        %3017 = vdwg.mxu0
        %3018 = vmatprep.subr.bf16.mxu0 %v2661
        %3019 = vmatpush1.bf16.msra.mxu0 %v2660
        %3020 = vmatprep.subr.bf16.mxu0 %v2669
        %3021 = vmatpush1.bf16.msra.mxu0 %v2668
        %3022 = vmatprep.subr.bf16.mxu0 %v2677
        %3023 = vmatpush1.bf16.msra.mxu0 %v2676
        %3024 = vmatprep.subr.bf16.mxu0 %v2685
        %3025 = vmatpush1.bf16.msra.mxu0 %v2684
        %3026 = vmatprep.subr.bf16.mxu0 %v2693
        %3027 = vmatpush1.bf16.msra.mxu0 %v2692
        %3028 = vmatprep.subr.bf16.mxu0 %v2701
        %3029 = vmatpush1.bf16.msra.mxu0 %v2700
        %3030 = vmatprep.subr.bf16.mxu0 %v2709
        %3031 = vmatpush1.bf16.msra.mxu0 %v2708
        %3032 = vmatprep.subr.bf16.mxu0 %v2717
        %3033 = vmatpush1.bf16.msra.mxu0 %v2716
        %3034 = vmatprep.subr.bf16.mxu0 %v2725
        %3035 = vmatpush1.bf16.msra.mxu0 %v2724
        %3036 = vmatprep.subr.bf16.mxu0 %v2733
        %3037 = vmatpush1.bf16.msra.mxu0 %v2732
        %3038 = vmatprep.subr.bf16.mxu0 %v2741
        %3039 = vmatpush1.bf16.msra.mxu0 %v2740
        %3040 = vmatprep.subr.bf16.mxu0 %v2749
        %3041 = vmatpush1.bf16.msra.mxu0 %v2748
        %3042 = vmatprep.subr.bf16.mxu0 %v2757
        %3043 = vmatpush1.bf16.msra.mxu0 %v2756
        %3044 = vmatprep.subr.bf16.mxu0 %v2765
        %3045 = vmatpush1.bf16.msra.mxu0 %v2764
        %3046 = vmatprep.subr.bf16.mxu0 %v2773
        %3047 = vmatpush1.bf16.msra.mxu0 %v2772
        %3048 = vmatprep.subr.bf16.mxu0 %v2781
        %3049 = vmatpush1.bf16.msra.mxu0 %v2780
        %3050 = vmatprep.mubr.bf16.mxu0 %v2227
        %3051 = vmatmul.mubr.bf16.gmra.mrb[0].mxu0 %v2226
        %v3052 = vpop.f32.mrb[0].mxu0
        %v3053 = vadd.f32 %v2251, %v3052
        %v3054 = vpop.f32.mrb[0].mxu0
        %v3055 = vadd.f32 %v2255, %v3054
        %v3056 = vpop.f32.mrb[0].mxu0
        %v3057 = vadd.f32 %v2251, %v3056
        %v3058 = vpop.f32.mrb[0].mxu0
        %v3059 = vadd.f32 %v2255, %v3058
        %3060 = vmatprep.mubr.bf16.mxu0 %v2229
        %3061 = vmatmul.mubr.bf16.gmra.mrb[0].mxu0 %v2228
        %v3062 = vpop.f32.mrb[0].mxu0
        %v3063 = vadd.f32 %v2251, %v3062
        %v3064 = vpop.f32.mrb[0].mxu0
        %v3065 = vadd.f32 %v2255, %v3064
        %v3066 = vpop.f32.mrb[0].mxu0
        %v3067 = vadd.f32 %v2251, %v3066
        %v3068 = vpop.f32.mrb[0].mxu0
        %v3069 = vadd.f32 %v2255, %v3068
        %3070 = vdwg.mxu0
        %3071 = vmatprep.subr.bf16.mxu0 %v2663
        %3072 = vmatpush1.bf16.msra.mxu0 %v2662
        %3073 = vmatprep.subr.bf16.mxu0 %v2671
        %3074 = vmatpush1.bf16.msra.mxu0 %v2670
        %3075 = vmatprep.subr.bf16.mxu0 %v2679
        %3076 = vmatpush1.bf16.msra.mxu0 %v2678
        %3077 = vmatprep.subr.bf16.mxu0 %v2687
        %3078 = vmatpush1.bf16.msra.mxu0 %v2686
        %3079 = vmatprep.subr.bf16.mxu0 %v2695
        %3080 = vmatpush1.bf16.msra.mxu0 %v2694
        %3081 = vmatprep.subr.bf16.mxu0 %v2703
        %3082 = vmatpush1.bf16.msra.mxu0 %v2702
        %3083 = vmatprep.subr.bf16.mxu0 %v2711
        %3084 = vmatpush1.bf16.msra.mxu0 %v2710
        %3085 = vmatprep.subr.bf16.mxu0 %v2719
        %3086 = vmatpush1.bf16.msra.mxu0 %v2718
        %3087 = vmatprep.subr.bf16.mxu0 %v2727
        %3088 = vmatpush1.bf16.msra.mxu0 %v2726
        %3089 = vmatprep.subr.bf16.mxu0 %v2735
        %3090 = vmatpush1.bf16.msra.mxu0 %v2734
        %3091 = vmatprep.subr.bf16.mxu0 %v2743
        %3092 = vmatpush1.bf16.msra.mxu0 %v2742
        %3093 = vmatprep.subr.bf16.mxu0 %v2751
        %3094 = vmatpush1.bf16.msra.mxu0 %v2750
        %3095 = vmatprep.subr.bf16.mxu0 %v2759
        %3096 = vmatpush1.bf16.msra.mxu0 %v2758
        %3097 = vmatprep.subr.bf16.mxu0 %v2767
        %3098 = vmatpush1.bf16.msra.mxu0 %v2766
        %3099 = vmatprep.subr.bf16.mxu0 %v2775
        %3100 = vmatpush1.bf16.msra.mxu0 %v2774
        %3101 = vmatprep.subr.bf16.mxu0 %v2783
        %3102 = vmatpush1.bf16.msra.mxu0 %v2782
        %3103 = vmatprep.mubr.bf16.mxu0 %v2227
        %3104 = vmatmul.mubr.bf16.gmra.mrb[0].mxu0 %v2226
        %v3105 = vpop.f32.mrb[0].mxu0
        %v3106 = vadd.f32 %v2259, %v3105
        %v3107 = vpop.f32.mrb[0].mxu0
        %v3108 = vadd.f32 %v2263, %v3107
        %v3109 = vpop.f32.mrb[0].mxu0
        %v3110 = vadd.f32 %v2259, %v3109
        %v3111 = vpop.f32.mrb[0].mxu0
        %v3112 = vadd.f32 %v2263, %v3111
        %3113 = vmatprep.mubr.bf16.mxu0 %v2229
        %3114 = vmatmul.mubr.bf16.gmra.mrb[0].mxu0 %v2228
        %v3115 = vpop.f32.mrb[0].mxu0
        %v3116 = vadd.f32 %v2259, %v3115
        %v3117 = vpop.f32.mrb[0].mxu0
        %v3118 = vadd.f32 %v2263, %v3117
        %v3119 = vpop.f32.mrb[0].mxu0
        %v3120 = vadd.f32 %v2259, %v3119
        %v3121 = vpop.f32.mrb[0].mxu0
        %v3122 = vadd.f32 %v2263, %v3121
        %3123 = vdwg.mxu0
        %v3124 = vmul.f32 %v2947, 0.5
        %v3125 = vmul.f32 %v2949, 0.5
        %v3126 = vmul.f32 %v3000, 0.5
        %v3127 = vmul.f32 %v3002, 0.5
        %v3128 = vmul.f32 %v3053, 0.5
        %v3129 = vmul.f32 %v3055, 0.5
        %v3130 = vmul.f32 %v3106, 0.5
        %v3131 = vmul.f32 %v3108, 0.5
        %v3132 = vmul.f32 %v2951, 0.5
        %v3133 = vmul.f32 %v2953, 0.5
        %v3134 = vmul.f32 %v3004, 0.5
        %v3135 = vmul.f32 %v3006, 0.5
        %v3136 = vmul.f32 %v3057, 0.5
        %v3137 = vmul.f32 %v3059, 0.5
        %v3138 = vmul.f32 %v3110, 0.5
        %v3139 = vmul.f32 %v3112, 0.5
        %v3140 = vmul.f32 %v2957, 0.5
        %v3141 = vmul.f32 %v2959, 0.5
        %v3142 = vmul.f32 %v3010, 0.5
        %v3143 = vmul.f32 %v3012, 0.5
        %v3144 = vmul.f32 %v3063, 0.5
        %v3145 = vmul.f32 %v3065, 0.5
        %v3146 = vmul.f32 %v3116, 0.5
        %v3147 = vmul.f32 %v3118, 0.5
        %v3148 = vmul.f32 %v2961, 0.5
        %v3149 = vmul.f32 %v2963, 0.5
        %v3150 = vmul.f32 %v3014, 0.5
        %v3151 = vmul.f32 %v3016, 0.5
        %v3152 = vmul.f32 %v3067, 0.5
        %v3153 = vmul.f32 %v3069, 0.5
        %v3154 = vmul.f32 %v3120, 0.5
        %v3155 = vmul.f32 %v3122, 0.5
        %v3156 = vmul.f32 %v2947, 0.70710677
        %v3157 = vmul.f32 %v2949, 0.70710677
        %v3158 = vmul.f32 %v3000, 0.70710677
        %v3159 = vmul.f32 %v3002, 0.70710677
        %v3160 = vmul.f32 %v3053, 0.70710677
        %v3161 = vmul.f32 %v3055, 0.70710677
        %v3162 = vmul.f32 %v3106, 0.70710677
        %v3163 = vmul.f32 %v3108, 0.70710677
        %v3164 = vmul.f32 %v2951, 0.70710677
        %v3165 = vmul.f32 %v2953, 0.70710677
        %v3166 = vmul.f32 %v3004, 0.70710677
        %v3167 = vmul.f32 %v3006, 0.70710677
        %v3168 = vmul.f32 %v3057, 0.70710677
        %v3169 = vmul.f32 %v3059, 0.70710677
        %v3170 = vmul.f32 %v3110, 0.70710677
        %v3171 = vmul.f32 %v3112, 0.70710677
        %v3172 = vmul.f32 %v2957, 0.70710677
        %v3173 = vmul.f32 %v2959, 0.70710677
        %v3174 = vmul.f32 %v3010, 0.70710677
        %v3175 = vmul.f32 %v3012, 0.70710677
        %v3176 = vmul.f32 %v3063, 0.70710677
        %v3177 = vmul.f32 %v3065, 0.70710677
        %v3178 = vmul.f32 %v3116, 0.70710677
        %v3179 = vmul.f32 %v3118, 0.70710677
        %v3180 = vmul.f32 %v2961, 0.70710677
        %v3181 = vmul.f32 %v2963, 0.70710677
        %v3182 = vmul.f32 %v3014, 0.70710677
        %v3183 = vmul.f32 %v3016, 0.70710677
        %v3184 = vmul.f32 %v3067, 0.70710677
        %v3185 = vmul.f32 %v3069, 0.70710677
        %v3186 = vmul.f32 %v3120, 0.70710677
        %v3187 = vmul.f32 %v3122, 0.70710677
        %v3188 = vand.u32 2147483647, %v3156
        %v3189 = vand.u32 2147483647, %v3157
        %v3190 = vand.u32 2147483647, %v3158
        %v3191 = vand.u32 2147483647, %v3159
        %v3192 = vand.u32 2147483647, %v3160
        %v3193 = vand.u32 2147483647, %v3161
        %v3194 = vand.u32 2147483647, %v3162
        %v3195 = vand.u32 2147483647, %v3163
        %v3196 = vand.u32 2147483647, %v3164
        %v3197 = vand.u32 2147483647, %v3165
        %v3198 = vand.u32 2147483647, %v3166
        %v3199 = vand.u32 2147483647, %v3167
        %v3200 = vand.u32 2147483647, %v3168
        %v3201 = vand.u32 2147483647, %v3169
        %v3202 = vand.u32 2147483647, %v3170
        %v3203 = vand.u32 2147483647, %v3171
        %v3204 = vand.u32 2147483647, %v3172
        %v3205 = vand.u32 2147483647, %v3173
        %v3206 = vand.u32 2147483647, %v3174
        %v3207 = vand.u32 2147483647, %v3175
        %v3208 = vand.u32 2147483647, %v3176
        %v3209 = vand.u32 2147483647, %v3177
        %v3210 = vand.u32 2147483647, %v3178
        %v3211 = vand.u32 2147483647, %v3179
        %v3212 = vand.u32 2147483647, %v3180
        %v3213 = vand.u32 2147483647, %v3181
        %v3214 = vand.u32 2147483647, %v3182
        %v3215 = vand.u32 2147483647, %v3183
        %v3216 = vand.u32 2147483647, %v3184
        %v3217 = vand.u32 2147483647, %v3185
        %v3218 = vand.u32 2147483647, %v3186
        %v3219 = vand.u32 2147483647, %v3187
        %v3220 = vmul.f32 %v3188, 0.3275911
        %v3221 = vmul.f32 %v3189, 0.3275911
        %v3222 = vmul.f32 %v3190, 0.3275911
        %v3223 = vmul.f32 %v3191, 0.3275911
        %v3224 = vmul.f32 %v3192, 0.3275911
        %v3225 = vmul.f32 %v3193, 0.3275911
        %v3226 = vmul.f32 %v3194, 0.3275911
        %v3227 = vmul.f32 %v3195, 0.3275911
        %v3228 = vmul.f32 %v3196, 0.3275911
        %v3229 = vmul.f32 %v3197, 0.3275911
        %v3230 = vmul.f32 %v3198, 0.3275911
        %v3231 = vmul.f32 %v3199, 0.3275911
        %v3232 = vmul.f32 %v3200, 0.3275911
        %v3233 = vmul.f32 %v3201, 0.3275911
        %v3234 = vmul.f32 %v3202, 0.3275911
        %v3235 = vmul.f32 %v3203, 0.3275911
        %v3236 = vmul.f32 %v3204, 0.3275911
        %v3237 = vmul.f32 %v3205, 0.3275911
        %v3238 = vmul.f32 %v3206, 0.3275911
        %v3239 = vmul.f32 %v3207, 0.3275911
        %v3240 = vmul.f32 %v3208, 0.3275911
        %v3241 = vmul.f32 %v3209, 0.3275911
        %v3242 = vmul.f32 %v3210, 0.3275911
        %v3243 = vmul.f32 %v3211, 0.3275911
        %v3244 = vmul.f32 %v3212, 0.3275911
        %v3245 = vmul.f32 %v3213, 0.3275911
        %v3246 = vmul.f32 %v3214, 0.3275911
        %v3247 = vmul.f32 %v3215, 0.3275911
        %v3248 = vmul.f32 %v3216, 0.3275911
        %v3249 = vmul.f32 %v3217, 0.3275911
        %v3250 = vmul.f32 %v3218, 0.3275911
        %v3251 = vmul.f32 %v3219, 0.3275911
        %v3252 = vadd.f32 %v3220, 1.0
        %v3253 = vadd.f32 %v3221, 1.0
        %v3254 = vadd.f32 %v3222, 1.0
        %v3255 = vadd.f32 %v3223, 1.0
        %v3256 = vadd.f32 %v3224, 1.0
        %v3257 = vadd.f32 %v3225, 1.0
        %v3258 = vadd.f32 %v3226, 1.0
        %v3259 = vadd.f32 %v3227, 1.0
        %v3260 = vadd.f32 %v3228, 1.0
        %v3261 = vadd.f32 %v3229, 1.0
        %v3262 = vadd.f32 %v3230, 1.0
        %v3263 = vadd.f32 %v3231, 1.0
        %v3264 = vadd.f32 %v3232, 1.0
        %v3265 = vadd.f32 %v3233, 1.0
        %v3266 = vadd.f32 %v3234, 1.0
        %v3267 = vadd.f32 %v3235, 1.0
        %v3268 = vadd.f32 %v3236, 1.0
        %v3269 = vadd.f32 %v3237, 1.0
        %v3270 = vadd.f32 %v3238, 1.0
        %v3271 = vadd.f32 %v3239, 1.0
        %v3272 = vadd.f32 %v3240, 1.0
        %v3273 = vadd.f32 %v3241, 1.0
        %v3274 = vadd.f32 %v3242, 1.0
        %v3275 = vadd.f32 %v3243, 1.0
        %v3276 = vadd.f32 %v3244, 1.0
        %v3277 = vadd.f32 %v3245, 1.0
        %v3278 = vadd.f32 %v3246, 1.0
        %v3279 = vadd.f32 %v3247, 1.0
        %v3280 = vadd.f32 %v3248, 1.0
        %v3281 = vadd.f32 %v3249, 1.0
        %v3282 = vadd.f32 %v3250, 1.0
        %v3283 = vadd.f32 %v3251, 1.0
        %v3284 = vrcp.pop %v3252
        %v3285 = vmul.f32 1.0, %v3284
        %v3286 = vrcp.pop %v3253
        %v3287 = vmul.f32 1.0, %v3286
        %v3288 = vrcp.pop %v3254
        %v3289 = vmul.f32 1.0, %v3288
        %v3290 = vrcp.pop %v3255
        %v3291 = vmul.f32 1.0, %v3290
        %v3292 = vrcp.pop %v3256
        %v3293 = vmul.f32 1.0, %v3292
        %v3294 = vrcp.pop %v3257
        %v3295 = vmul.f32 1.0, %v3294
        %v3296 = vrcp.pop %v3258
        %v3297 = vmul.f32 1.0, %v3296
        %v3298 = vrcp.pop %v3259
        %v3299 = vmul.f32 1.0, %v3298
        %v3300 = vrcp.pop %v3260
        %v3301 = vmul.f32 1.0, %v3300
        %v3302 = vrcp.pop %v3261
        %v3303 = vmul.f32 1.0, %v3302
        %v3304 = vrcp.pop %v3262
        %v3305 = vmul.f32 1.0, %v3304
        %v3306 = vrcp.pop %v3263
        %v3307 = vmul.f32 1.0, %v3306
        %v3308 = vrcp.pop %v3264
        %v3309 = vmul.f32 1.0, %v3308
        %v3310 = vrcp.pop %v3265
        %v3311 = vmul.f32 1.0, %v3310
        %v3312 = vrcp.pop %v3266
        %v3313 = vmul.f32 1.0, %v3312
        %v3314 = vrcp.pop %v3267
        %v3315 = vmul.f32 1.0, %v3314
        %v3316 = vrcp.pop %v3268
        %v3317 = vmul.f32 1.0, %v3316
        %v3318 = vrcp.pop %v3269
        %v3319 = vmul.f32 1.0, %v3318
        %v3320 = vrcp.pop %v3270
        %v3321 = vmul.f32 1.0, %v3320
        %v3322 = vrcp.pop %v3271
        %v3323 = vmul.f32 1.0, %v3322
        %v3324 = vrcp.pop %v3272
        %v3325 = vmul.f32 1.0, %v3324
        %v3326 = vrcp.pop %v3273
        %v3327 = vmul.f32 1.0, %v3326
        %v3328 = vrcp.pop %v3274
        %v3329 = vmul.f32 1.0, %v3328
        %v3330 = vrcp.pop %v3275
        %v3331 = vmul.f32 1.0, %v3330
        %v3332 = vrcp.pop %v3276
        %v3333 = vmul.f32 1.0, %v3332
        %v3334 = vrcp.pop %v3277
        %v3335 = vmul.f32 1.0, %v3334
        %v3336 = vrcp.pop %v3278
        %v3337 = vmul.f32 1.0, %v3336
        %v3338 = vrcp.pop %v3279
        %v3339 = vmul.f32 1.0, %v3338
        %v3340 = vrcp.pop %v3280
        %v3341 = vmul.f32 1.0, %v3340
        %v3342 = vrcp.pop %v3281
        %v3343 = vmul.f32 1.0, %v3342
        %v3344 = vrcp.pop %v3282
        %v3345 = vmul.f32 1.0, %v3344
        %v3346 = vrcp.pop %v3283
        %v3347 = vmul.f32 1.0, %v3346
        %v3348 = vmul.f32 %v3285, 1.0614054
        %v3349 = vmul.f32 %v3287, 1.0614054
        %v3350 = vmul.f32 %v3289, 1.0614054
        %v3351 = vmul.f32 %v3291, 1.0614054
        %v3352 = vmul.f32 %v3293, 1.0614054
        %v3353 = vmul.f32 %v3295, 1.0614054
        %v3354 = vmul.f32 %v3297, 1.0614054
        %v3355 = vmul.f32 %v3299, 1.0614054
        %v3356 = vmul.f32 %v3301, 1.0614054
        %v3357 = vmul.f32 %v3303, 1.0614054
        %v3358 = vmul.f32 %v3305, 1.0614054
        %v3359 = vmul.f32 %v3307, 1.0614054
        %v3360 = vmul.f32 %v3309, 1.0614054
        %v3361 = vmul.f32 %v3311, 1.0614054
        %v3362 = vmul.f32 %v3313, 1.0614054
        %v3363 = vmul.f32 %v3315, 1.0614054
        %v3364 = vmul.f32 %v3317, 1.0614054
        %v3365 = vmul.f32 %v3319, 1.0614054
        %v3366 = vmul.f32 %v3321, 1.0614054
        %v3367 = vmul.f32 %v3323, 1.0614054
        %v3368 = vmul.f32 %v3325, 1.0614054
        %v3369 = vmul.f32 %v3327, 1.0614054
        %v3370 = vmul.f32 %v3329, 1.0614054
        %v3371 = vmul.f32 %v3331, 1.0614054
        %v3372 = vmul.f32 %v3333, 1.0614054
        %v3373 = vmul.f32 %v3335, 1.0614054
        %v3374 = vmul.f32 %v3337, 1.0614054
        %v3375 = vmul.f32 %v3339, 1.0614054
        %v3376 = vmul.f32 %v3341, 1.0614054
        %v3377 = vmul.f32 %v3343, 1.0614054
        %v3378 = vmul.f32 %v3345, 1.0614054
        %v3379 = vmul.f32 %v3347, 1.0614054
        %v3380 = vadd.f32 %v3348, -1.4531521
        %v3381 = vadd.f32 %v3349, -1.4531521
        %v3382 = vadd.f32 %v3350, -1.4531521
        %v3383 = vadd.f32 %v3351, -1.4531521
        %v3384 = vadd.f32 %v3352, -1.4531521
        %v3385 = vadd.f32 %v3353, -1.4531521
        %v3386 = vadd.f32 %v3354, -1.4531521
        %v3387 = vadd.f32 %v3355, -1.4531521
        %v3388 = vadd.f32 %v3356, -1.4531521
        %v3389 = vadd.f32 %v3357, -1.4531521
        %v3390 = vadd.f32 %v3358, -1.4531521
        %v3391 = vadd.f32 %v3359, -1.4531521
        %v3392 = vadd.f32 %v3360, -1.4531521
        %v3393 = vadd.f32 %v3361, -1.4531521
        %v3394 = vadd.f32 %v3362, -1.4531521
        %v3395 = vadd.f32 %v3363, -1.4531521
        %v3396 = vadd.f32 %v3364, -1.4531521
        %v3397 = vadd.f32 %v3365, -1.4531521
        %v3398 = vadd.f32 %v3366, -1.4531521
        %v3399 = vadd.f32 %v3367, -1.4531521
        %v3400 = vadd.f32 %v3368, -1.4531521
        %v3401 = vadd.f32 %v3369, -1.4531521
        %v3402 = vadd.f32 %v3370, -1.4531521
        %v3403 = vadd.f32 %v3371, -1.4531521
        %v3404 = vadd.f32 %v3372, -1.4531521
        %v3405 = vadd.f32 %v3373, -1.4531521
        %v3406 = vadd.f32 %v3374, -1.4531521
        %v3407 = vadd.f32 %v3375, -1.4531521
        %v3408 = vadd.f32 %v3376, -1.4531521
        %v3409 = vadd.f32 %v3377, -1.4531521
        %v3410 = vadd.f32 %v3378, -1.4531521
        %v3411 = vadd.f32 %v3379, -1.4531521
        %v3412 = vmul.f32 %v3380, %v3285
        %v3413 = vmul.f32 %v3381, %v3287
        %v3414 = vmul.f32 %v3382, %v3289
        %v3415 = vmul.f32 %v3383, %v3291
        %v3416 = vmul.f32 %v3384, %v3293
        %v3417 = vmul.f32 %v3385, %v3295
        %v3418 = vmul.f32 %v3386, %v3297
        %v3419 = vmul.f32 %v3387, %v3299
        %v3420 = vmul.f32 %v3388, %v3301
        %v3421 = vmul.f32 %v3389, %v3303
        %v3422 = vmul.f32 %v3390, %v3305
        %v3423 = vmul.f32 %v3391, %v3307
        %v3424 = vmul.f32 %v3392, %v3309
        %v3425 = vmul.f32 %v3393, %v3311
        %v3426 = vmul.f32 %v3394, %v3313
        %v3427 = vmul.f32 %v3395, %v3315
        %v3428 = vmul.f32 %v3396, %v3317
        %v3429 = vmul.f32 %v3397, %v3319
        %v3430 = vmul.f32 %v3398, %v3321
        %v3431 = vmul.f32 %v3399, %v3323
        %v3432 = vmul.f32 %v3400, %v3325
        %v3433 = vmul.f32 %v3401, %v3327
        %v3434 = vmul.f32 %v3402, %v3329
        %v3435 = vmul.f32 %v3403, %v3331
        %v3436 = vmul.f32 %v3404, %v3333
        %v3437 = vmul.f32 %v3405, %v3335
        %v3438 = vmul.f32 %v3406, %v3337
        %v3439 = vmul.f32 %v3407, %v3339
        %v3440 = vmul.f32 %v3408, %v3341
        %v3441 = vmul.f32 %v3409, %v3343
        %v3442 = vmul.f32 %v3410, %v3345
        %v3443 = vmul.f32 %v3411, %v3347
        %v3444 = vadd.f32 %v3412, 1.4214138
        %v3445 = vadd.f32 %v3413, 1.4214138
        %v3446 = vadd.f32 %v3414, 1.4214138
        %v3447 = vadd.f32 %v3415, 1.4214138
        %v3448 = vadd.f32 %v3416, 1.4214138
        %v3449 = vadd.f32 %v3417, 1.4214138
        %v3450 = vadd.f32 %v3418, 1.4214138
        %v3451 = vadd.f32 %v3419, 1.4214138
        %v3452 = vadd.f32 %v3420, 1.4214138
        %v3453 = vadd.f32 %v3421, 1.4214138
        %v3454 = vadd.f32 %v3422, 1.4214138
        %v3455 = vadd.f32 %v3423, 1.4214138
        %v3456 = vadd.f32 %v3424, 1.4214138
        %v3457 = vadd.f32 %v3425, 1.4214138
        %v3458 = vadd.f32 %v3426, 1.4214138
        %v3459 = vadd.f32 %v3427, 1.4214138
        %v3460 = vadd.f32 %v3428, 1.4214138
        %v3461 = vadd.f32 %v3429, 1.4214138
        %v3462 = vadd.f32 %v3430, 1.4214138
        %v3463 = vadd.f32 %v3431, 1.4214138
        %v3464 = vadd.f32 %v3432, 1.4214138
        %v3465 = vadd.f32 %v3433, 1.4214138
        %v3466 = vadd.f32 %v3434, 1.4214138
        %v3467 = vadd.f32 %v3435, 1.4214138
        %v3468 = vadd.f32 %v3436, 1.4214138
        %v3469 = vadd.f32 %v3437, 1.4214138
        %v3470 = vadd.f32 %v3438, 1.4214138
        %v3471 = vadd.f32 %v3439, 1.4214138
        %v3472 = vadd.f32 %v3440, 1.4214138
        %v3473 = vadd.f32 %v3441, 1.4214138
        %v3474 = vadd.f32 %v3442, 1.4214138
        %v3475 = vadd.f32 %v3443, 1.4214138
        %v3476 = vmul.f32 %v3444, %v3285
        %v3477 = vmul.f32 %v3445, %v3287
        %v3478 = vmul.f32 %v3446, %v3289
        %v3479 = vmul.f32 %v3447, %v3291
        %v3480 = vmul.f32 %v3448, %v3293
        %v3481 = vmul.f32 %v3449, %v3295
        %v3482 = vmul.f32 %v3450, %v3297
        %v3483 = vmul.f32 %v3451, %v3299
        %v3484 = vmul.f32 %v3452, %v3301
        %v3485 = vmul.f32 %v3453, %v3303
        %v3486 = vmul.f32 %v3454, %v3305
        %v3487 = vmul.f32 %v3455, %v3307
        %v3488 = vmul.f32 %v3456, %v3309
        %v3489 = vmul.f32 %v3457, %v3311
        %v3490 = vmul.f32 %v3458, %v3313
        %v3491 = vmul.f32 %v3459, %v3315
        %v3492 = vmul.f32 %v3460, %v3317
        %v3493 = vmul.f32 %v3461, %v3319
        %v3494 = vmul.f32 %v3462, %v3321
        %v3495 = vmul.f32 %v3463, %v3323
        %v3496 = vmul.f32 %v3464, %v3325
        %v3497 = vmul.f32 %v3465, %v3327
        %v3498 = vmul.f32 %v3466, %v3329
        %v3499 = vmul.f32 %v3467, %v3331
        %v3500 = vmul.f32 %v3468, %v3333
        %v3501 = vmul.f32 %v3469, %v3335
        %v3502 = vmul.f32 %v3470, %v3337
        %v3503 = vmul.f32 %v3471, %v3339
        %v3504 = vmul.f32 %v3472, %v3341
        %v3505 = vmul.f32 %v3473, %v3343
        %v3506 = vmul.f32 %v3474, %v3345
        %v3507 = vmul.f32 %v3475, %v3347
        %v3508 = vadd.f32 %v3476, -0.28449672
        %v3509 = vadd.f32 %v3477, -0.28449672
        %v3510 = vadd.f32 %v3478, -0.28449672
        %v3511 = vadd.f32 %v3479, -0.28449672
        %v3512 = vadd.f32 %v3480, -0.28449672
        %v3513 = vadd.f32 %v3481, -0.28449672
        %v3514 = vadd.f32 %v3482, -0.28449672
        %v3515 = vadd.f32 %v3483, -0.28449672
        %v3516 = vadd.f32 %v3484, -0.28449672
        %v3517 = vadd.f32 %v3485, -0.28449672
        %v3518 = vadd.f32 %v3486, -0.28449672
        %v3519 = vadd.f32 %v3487, -0.28449672
        %v3520 = vadd.f32 %v3488, -0.28449672
        %v3521 = vadd.f32 %v3489, -0.28449672
        %v3522 = vadd.f32 %v3490, -0.28449672
        %v3523 = vadd.f32 %v3491, -0.28449672
        %v3524 = vadd.f32 %v3492, -0.28449672
        %v3525 = vadd.f32 %v3493, -0.28449672
        %v3526 = vadd.f32 %v3494, -0.28449672
        %v3527 = vadd.f32 %v3495, -0.28449672
        %v3528 = vadd.f32 %v3496, -0.28449672
        %v3529 = vadd.f32 %v3497, -0.28449672
        %v3530 = vadd.f32 %v3498, -0.28449672
        %v3531 = vadd.f32 %v3499, -0.28449672
        %v3532 = vadd.f32 %v3500, -0.28449672
        %v3533 = vadd.f32 %v3501, -0.28449672
        %v3534 = vadd.f32 %v3502, -0.28449672
        %v3535 = vadd.f32 %v3503, -0.28449672
        %v3536 = vadd.f32 %v3504, -0.28449672
        %v3537 = vadd.f32 %v3505, -0.28449672
        %v3538 = vadd.f32 %v3506, -0.28449672
        %v3539 = vadd.f32 %v3507, -0.28449672
        %v3540 = vmul.f32 %v3508, %v3285
        %v3541 = vmul.f32 %v3509, %v3287
        %v3542 = vmul.f32 %v3510, %v3289
        %v3543 = vmul.f32 %v3511, %v3291
        %v3544 = vmul.f32 %v3512, %v3293
        %v3545 = vmul.f32 %v3513, %v3295
        %v3546 = vmul.f32 %v3514, %v3297
        %v3547 = vmul.f32 %v3515, %v3299
        %v3548 = vmul.f32 %v3516, %v3301
        %v3549 = vmul.f32 %v3517, %v3303
        %v3550 = vmul.f32 %v3518, %v3305
        %v3551 = vmul.f32 %v3519, %v3307
        %v3552 = vmul.f32 %v3520, %v3309
        %v3553 = vmul.f32 %v3521, %v3311
        %v3554 = vmul.f32 %v3522, %v3313
        %v3555 = vmul.f32 %v3523, %v3315
        %v3556 = vmul.f32 %v3524, %v3317
        %v3557 = vmul.f32 %v3525, %v3319
        %v3558 = vmul.f32 %v3526, %v3321
        %v3559 = vmul.f32 %v3527, %v3323
        %v3560 = vmul.f32 %v3528, %v3325
        %v3561 = vmul.f32 %v3529, %v3327
        %v3562 = vmul.f32 %v3530, %v3329
        %v3563 = vmul.f32 %v3531, %v3331
        %v3564 = vmul.f32 %v3532, %v3333
        %v3565 = vmul.f32 %v3533, %v3335
        %v3566 = vmul.f32 %v3534, %v3337
        %v3567 = vmul.f32 %v3535, %v3339
        %v3568 = vmul.f32 %v3536, %v3341
        %v3569 = vmul.f32 %v3537, %v3343
        %v3570 = vmul.f32 %v3538, %v3345
        %v3571 = vmul.f32 %v3539, %v3347
        %v3572 = vadd.f32 %v3540, 0.2548296
        %v3573 = vadd.f32 %v3541, 0.2548296
        %v3574 = vadd.f32 %v3542, 0.2548296
        %v3575 = vadd.f32 %v3543, 0.2548296
        %v3576 = vadd.f32 %v3544, 0.2548296
        %v3577 = vadd.f32 %v3545, 0.2548296
        %v3578 = vadd.f32 %v3546, 0.2548296
        %v3579 = vadd.f32 %v3547, 0.2548296
        %v3580 = vadd.f32 %v3548, 0.2548296
        %v3581 = vadd.f32 %v3549, 0.2548296
        %v3582 = vadd.f32 %v3550, 0.2548296
        %v3583 = vadd.f32 %v3551, 0.2548296
        %v3584 = vadd.f32 %v3552, 0.2548296
        %v3585 = vadd.f32 %v3553, 0.2548296
        %v3586 = vadd.f32 %v3554, 0.2548296
        %v3587 = vadd.f32 %v3555, 0.2548296
        %v3588 = vadd.f32 %v3556, 0.2548296
        %v3589 = vadd.f32 %v3557, 0.2548296
        %v3590 = vadd.f32 %v3558, 0.2548296
        %v3591 = vadd.f32 %v3559, 0.2548296
        %v3592 = vadd.f32 %v3560, 0.2548296
        %v3593 = vadd.f32 %v3561, 0.2548296
        %v3594 = vadd.f32 %v3562, 0.2548296
        %v3595 = vadd.f32 %v3563, 0.2548296
        %v3596 = vadd.f32 %v3564, 0.2548296
        %v3597 = vadd.f32 %v3565, 0.2548296
        %v3598 = vadd.f32 %v3566, 0.2548296
        %v3599 = vadd.f32 %v3567, 0.2548296
        %v3600 = vadd.f32 %v3568, 0.2548296
        %v3601 = vadd.f32 %v3569, 0.2548296
        %v3602 = vadd.f32 %v3570, 0.2548296
        %v3603 = vadd.f32 %v3571, 0.2548296
        %v3604 = vmul.f32 %v3572, %v3285
        %v3605 = vmul.f32 %v3573, %v3287
        %v3606 = vmul.f32 %v3574, %v3289
        %v3607 = vmul.f32 %v3575, %v3291
        %v3608 = vmul.f32 %v3576, %v3293
        %v3609 = vmul.f32 %v3577, %v3295
        %v3610 = vmul.f32 %v3578, %v3297
        %v3611 = vmul.f32 %v3579, %v3299
        %v3612 = vmul.f32 %v3580, %v3301
        %v3613 = vmul.f32 %v3581, %v3303
        %v3614 = vmul.f32 %v3582, %v3305
        %v3615 = vmul.f32 %v3583, %v3307
        %v3616 = vmul.f32 %v3584, %v3309
        %v3617 = vmul.f32 %v3585, %v3311
        %v3618 = vmul.f32 %v3586, %v3313
        %v3619 = vmul.f32 %v3587, %v3315
        %v3620 = vmul.f32 %v3588, %v3317
        %v3621 = vmul.f32 %v3589, %v3319
        %v3622 = vmul.f32 %v3590, %v3321
        %v3623 = vmul.f32 %v3591, %v3323
        %v3624 = vmul.f32 %v3592, %v3325
        %v3625 = vmul.f32 %v3593, %v3327
        %v3626 = vmul.f32 %v3594, %v3329
        %v3627 = vmul.f32 %v3595, %v3331
        %v3628 = vmul.f32 %v3596, %v3333
        %v3629 = vmul.f32 %v3597, %v3335
        %v3630 = vmul.f32 %v3598, %v3337
        %v3631 = vmul.f32 %v3599, %v3339
        %v3632 = vmul.f32 %v3600, %v3341
        %v3633 = vmul.f32 %v3601, %v3343
        %v3634 = vmul.f32 %v3602, %v3345
        %v3635 = vmul.f32 %v3603, %v3347
        %v3636 = vsub.f32 0.0, %v3188
        %v3637 = vsub.f32 0.0, %v3189
        %v3638 = vsub.f32 0.0, %v3190
        %v3639 = vsub.f32 0.0, %v3191
        %v3640 = vsub.f32 0.0, %v3192
        %v3641 = vsub.f32 0.0, %v3193
        %v3642 = vsub.f32 0.0, %v3194
        %v3643 = vsub.f32 0.0, %v3195
        %v3644 = vsub.f32 0.0, %v3196
        %v3645 = vsub.f32 0.0, %v3197
        %v3646 = vsub.f32 0.0, %v3198
        %v3647 = vsub.f32 0.0, %v3199
        %v3648 = vsub.f32 0.0, %v3200
        %v3649 = vsub.f32 0.0, %v3201
        %v3650 = vsub.f32 0.0, %v3202
        %v3651 = vsub.f32 0.0, %v3203
        %v3652 = vsub.f32 0.0, %v3204
        %v3653 = vsub.f32 0.0, %v3205
        %v3654 = vsub.f32 0.0, %v3206
        %v3655 = vsub.f32 0.0, %v3207
        %v3656 = vsub.f32 0.0, %v3208
        %v3657 = vsub.f32 0.0, %v3209
        %v3658 = vsub.f32 0.0, %v3210
        %v3659 = vsub.f32 0.0, %v3211
        %v3660 = vsub.f32 0.0, %v3212
        %v3661 = vsub.f32 0.0, %v3213
        %v3662 = vsub.f32 0.0, %v3214
        %v3663 = vsub.f32 0.0, %v3215
        %v3664 = vsub.f32 0.0, %v3216
        %v3665 = vsub.f32 0.0, %v3217
        %v3666 = vsub.f32 0.0, %v3218
        %v3667 = vsub.f32 0.0, %v3219
        %v3668 = vmul.f32 %v3636, %v3188
        %v3669 = vmul.f32 %v3637, %v3189
        %v3670 = vmul.f32 %v3638, %v3190
        %v3671 = vmul.f32 %v3639, %v3191
        %v3672 = vmul.f32 %v3640, %v3192
        %v3673 = vmul.f32 %v3641, %v3193
        %v3674 = vmul.f32 %v3642, %v3194
        %v3675 = vmul.f32 %v3643, %v3195
        %v3676 = vmul.f32 %v3644, %v3196
        %v3677 = vmul.f32 %v3645, %v3197
        %v3678 = vmul.f32 %v3646, %v3198
        %v3679 = vmul.f32 %v3647, %v3199
        %v3680 = vmul.f32 %v3648, %v3200
        %v3681 = vmul.f32 %v3649, %v3201
        %v3682 = vmul.f32 %v3650, %v3202
        %v3683 = vmul.f32 %v3651, %v3203
        %v3684 = vmul.f32 %v3652, %v3204
        %v3685 = vmul.f32 %v3653, %v3205
        %v3686 = vmul.f32 %v3654, %v3206
        %v3687 = vmul.f32 %v3655, %v3207
        %v3688 = vmul.f32 %v3656, %v3208
        %v3689 = vmul.f32 %v3657, %v3209
        %v3690 = vmul.f32 %v3658, %v3210
        %v3691 = vmul.f32 %v3659, %v3211
        %v3692 = vmul.f32 %v3660, %v3212
        %v3693 = vmul.f32 %v3661, %v3213
        %v3694 = vmul.f32 %v3662, %v3214
        %v3695 = vmul.f32 %v3663, %v3215
        %v3696 = vmul.f32 %v3664, %v3216
        %v3697 = vmul.f32 %v3665, %v3217
        %v3698 = vmul.f32 %v3666, %v3218
        %v3699 = vmul.f32 %v3667, %v3219
        %v3700 = vmul.f32 %v3668, 1.442695
        %v3701 = vpow.pop %v3700
        %v3702 = vmul.f32 %v3669, 1.442695
        %v3703 = vpow.pop %v3702
        %v3704 = vmul.f32 %v3670, 1.442695
        %v3705 = vpow.pop %v3704
        %v3706 = vmul.f32 %v3671, 1.442695
        %v3707 = vpow.pop %v3706
        %v3708 = vmul.f32 %v3672, 1.442695
        %v3709 = vpow.pop %v3708
        %v3710 = vmul.f32 %v3673, 1.442695
        %v3711 = vpow.pop %v3710
        %v3712 = vmul.f32 %v3674, 1.442695
        %v3713 = vpow.pop %v3712
        %v3714 = vmul.f32 %v3675, 1.442695
        %v3715 = vpow.pop %v3714
        %v3716 = vmul.f32 %v3676, 1.442695
        %v3717 = vpow.pop %v3716
        %v3718 = vmul.f32 %v3677, 1.442695
        %v3719 = vpow.pop %v3718
        %v3720 = vmul.f32 %v3678, 1.442695
        %v3721 = vpow.pop %v3720
        %v3722 = vmul.f32 %v3679, 1.442695
        %v3723 = vpow.pop %v3722
        %v3724 = vmul.f32 %v3680, 1.442695
        %v3725 = vpow.pop %v3724
        %v3726 = vmul.f32 %v3681, 1.442695
        %v3727 = vpow.pop %v3726
        %v3728 = vmul.f32 %v3682, 1.442695
        %v3729 = vpow.pop %v3728
        %v3730 = vmul.f32 %v3683, 1.442695
        %v3731 = vpow.pop %v3730
        %v3732 = vmul.f32 %v3684, 1.442695
        %v3733 = vpow.pop %v3732
        %v3734 = vmul.f32 %v3685, 1.442695
        %v3735 = vpow.pop %v3734
        %v3736 = vmul.f32 %v3686, 1.442695
        %v3737 = vpow.pop %v3736
        %v3738 = vmul.f32 %v3687, 1.442695
        %v3739 = vpow.pop %v3738
        %v3740 = vmul.f32 %v3688, 1.442695
        %v3741 = vpow.pop %v3740
        %v3742 = vmul.f32 %v3689, 1.442695
        %v3743 = vpow.pop %v3742
        %v3744 = vmul.f32 %v3690, 1.442695
        %v3745 = vpow.pop %v3744
        %v3746 = vmul.f32 %v3691, 1.442695
        %v3747 = vpow.pop %v3746
        %v3748 = vmul.f32 %v3692, 1.442695
        %v3749 = vpow.pop %v3748
        %v3750 = vmul.f32 %v3693, 1.442695
        %v3751 = vpow.pop %v3750
        %v3752 = vmul.f32 %v3694, 1.442695
        %v3753 = vpow.pop %v3752
        %v3754 = vmul.f32 %v3695, 1.442695
        %v3755 = vpow.pop %v3754
        %v3756 = vmul.f32 %v3696, 1.442695
        %v3757 = vpow.pop %v3756
        %v3758 = vmul.f32 %v3697, 1.442695
        %v3759 = vpow.pop %v3758
        %v3760 = vmul.f32 %v3698, 1.442695
        %v3761 = vpow.pop %v3760
        %v3762 = vmul.f32 %v3699, 1.442695
        %v3763 = vpow.pop %v3762
        %v3764 = vmul.f32 %v3604, %v3701
        %v3765 = vmul.f32 %v3605, %v3703
        %v3766 = vmul.f32 %v3606, %v3705
        %v3767 = vmul.f32 %v3607, %v3707
        %v3768 = vmul.f32 %v3608, %v3709
        %v3769 = vmul.f32 %v3609, %v3711
        %v3770 = vmul.f32 %v3610, %v3713
        %v3771 = vmul.f32 %v3611, %v3715
        %v3772 = vmul.f32 %v3612, %v3717
        %v3773 = vmul.f32 %v3613, %v3719
        %v3774 = vmul.f32 %v3614, %v3721
        %v3775 = vmul.f32 %v3615, %v3723
        %v3776 = vmul.f32 %v3616, %v3725
        %v3777 = vmul.f32 %v3617, %v3727
        %v3778 = vmul.f32 %v3618, %v3729
        %v3779 = vmul.f32 %v3619, %v3731
        %v3780 = vmul.f32 %v3620, %v3733
        %v3781 = vmul.f32 %v3621, %v3735
        %v3782 = vmul.f32 %v3622, %v3737
        %v3783 = vmul.f32 %v3623, %v3739
        %v3784 = vmul.f32 %v3624, %v3741
        %v3785 = vmul.f32 %v3625, %v3743
        %v3786 = vmul.f32 %v3626, %v3745
        %v3787 = vmul.f32 %v3627, %v3747
        %v3788 = vmul.f32 %v3628, %v3749
        %v3789 = vmul.f32 %v3629, %v3751
        %v3790 = vmul.f32 %v3630, %v3753
        %v3791 = vmul.f32 %v3631, %v3755
        %v3792 = vmul.f32 %v3632, %v3757
        %v3793 = vmul.f32 %v3633, %v3759
        %v3794 = vmul.f32 %v3634, %v3761
        %v3795 = vmul.f32 %v3635, %v3763
        %v3796 = vsub.f32 1.0, %v3764
        %v3797 = vsub.f32 1.0, %v3765
        %v3798 = vsub.f32 1.0, %v3766
        %v3799 = vsub.f32 1.0, %v3767
        %v3800 = vsub.f32 1.0, %v3768
        %v3801 = vsub.f32 1.0, %v3769
        %v3802 = vsub.f32 1.0, %v3770
        %v3803 = vsub.f32 1.0, %v3771
        %v3804 = vsub.f32 1.0, %v3772
        %v3805 = vsub.f32 1.0, %v3773
        %v3806 = vsub.f32 1.0, %v3774
        %v3807 = vsub.f32 1.0, %v3775
        %v3808 = vsub.f32 1.0, %v3776
        %v3809 = vsub.f32 1.0, %v3777
        %v3810 = vsub.f32 1.0, %v3778
        %v3811 = vsub.f32 1.0, %v3779
        %v3812 = vsub.f32 1.0, %v3780
        %v3813 = vsub.f32 1.0, %v3781
        %v3814 = vsub.f32 1.0, %v3782
        %v3815 = vsub.f32 1.0, %v3783
        %v3816 = vsub.f32 1.0, %v3784
        %v3817 = vsub.f32 1.0, %v3785
        %v3818 = vsub.f32 1.0, %v3786
        %v3819 = vsub.f32 1.0, %v3787
        %v3820 = vsub.f32 1.0, %v3788
        %v3821 = vsub.f32 1.0, %v3789
        %v3822 = vsub.f32 1.0, %v3790
        %v3823 = vsub.f32 1.0, %v3791
        %v3824 = vsub.f32 1.0, %v3792
        %v3825 = vsub.f32 1.0, %v3793
        %v3826 = vsub.f32 1.0, %v3794
        %v3827 = vsub.f32 1.0, %v3795
        %vm3828 = vcmp.lt.f32.partialorder %v3156, 0.0
        %vm3829 = vcmp.lt.f32.partialorder %v3157, 0.0
        %vm3830 = vcmp.lt.f32.partialorder %v3158, 0.0
        %vm3831 = vcmp.lt.f32.partialorder %v3159, 0.0
        %vm3832 = vcmp.lt.f32.partialorder %v3160, 0.0
        %vm3833 = vcmp.lt.f32.partialorder %v3161, 0.0
        %vm3834 = vcmp.lt.f32.partialorder %v3162, 0.0
        %vm3835 = vcmp.lt.f32.partialorder %v3163, 0.0
        %vm3836 = vcmp.lt.f32.partialorder %v3164, 0.0
        %vm3837 = vcmp.lt.f32.partialorder %v3165, 0.0
        %vm3838 = vcmp.lt.f32.partialorder %v3166, 0.0
        %vm3839 = vcmp.lt.f32.partialorder %v3167, 0.0
        %vm3840 = vcmp.lt.f32.partialorder %v3168, 0.0
        %vm3841 = vcmp.lt.f32.partialorder %v3169, 0.0
        %vm3842 = vcmp.lt.f32.partialorder %v3170, 0.0
        %vm3843 = vcmp.lt.f32.partialorder %v3171, 0.0
        %vm3844 = vcmp.lt.f32.partialorder %v3172, 0.0
        %vm3845 = vcmp.lt.f32.partialorder %v3173, 0.0
        %vm3846 = vcmp.lt.f32.partialorder %v3174, 0.0
        %vm3847 = vcmp.lt.f32.partialorder %v3175, 0.0
        %vm3848 = vcmp.lt.f32.partialorder %v3176, 0.0
        %vm3849 = vcmp.lt.f32.partialorder %v3177, 0.0
        %vm3850 = vcmp.lt.f32.partialorder %v3178, 0.0
        %vm3851 = vcmp.lt.f32.partialorder %v3179, 0.0
        %vm3852 = vcmp.lt.f32.partialorder %v3180, 0.0
        %vm3853 = vcmp.lt.f32.partialorder %v3181, 0.0
        %vm3854 = vcmp.lt.f32.partialorder %v3182, 0.0
        %vm3855 = vcmp.lt.f32.partialorder %v3183, 0.0
        %vm3856 = vcmp.lt.f32.partialorder %v3184, 0.0
        %vm3857 = vcmp.lt.f32.partialorder %v3185, 0.0
        %vm3858 = vcmp.lt.f32.partialorder %v3186, 0.0
        %vm3859 = vcmp.lt.f32.partialorder %v3187, 0.0
        %v3860 = vsub.f32 0.0, %v3796
        %v3861 = vsub.f32 0.0, %v3797
        %v3862 = vsub.f32 0.0, %v3798
        %v3863 = vsub.f32 0.0, %v3799
        %v3864 = vsub.f32 0.0, %v3800
        %v3865 = vsub.f32 0.0, %v3801
        %v3866 = vsub.f32 0.0, %v3802
        %v3867 = vsub.f32 0.0, %v3803
        %v3868 = vsub.f32 0.0, %v3804
        %v3869 = vsub.f32 0.0, %v3805
        %v3870 = vsub.f32 0.0, %v3806
        %v3871 = vsub.f32 0.0, %v3807
        %v3872 = vsub.f32 0.0, %v3808
        %v3873 = vsub.f32 0.0, %v3809
        %v3874 = vsub.f32 0.0, %v3810
        %v3875 = vsub.f32 0.0, %v3811
        %v3876 = vsub.f32 0.0, %v3812
        %v3877 = vsub.f32 0.0, %v3813
        %v3878 = vsub.f32 0.0, %v3814
        %v3879 = vsub.f32 0.0, %v3815
        %v3880 = vsub.f32 0.0, %v3816
        %v3881 = vsub.f32 0.0, %v3817
        %v3882 = vsub.f32 0.0, %v3818
        %v3883 = vsub.f32 0.0, %v3819
        %v3884 = vsub.f32 0.0, %v3820
        %v3885 = vsub.f32 0.0, %v3821
        %v3886 = vsub.f32 0.0, %v3822
        %v3887 = vsub.f32 0.0, %v3823
        %v3888 = vsub.f32 0.0, %v3824
        %v3889 = vsub.f32 0.0, %v3825
        %v3890 = vsub.f32 0.0, %v3826
        %v3891 = vsub.f32 0.0, %v3827
        %v3892 = vsel %vm3828, %v3860, %v3796
        %v3893 = vsel %vm3829, %v3861, %v3797
        %v3894 = vsel %vm3830, %v3862, %v3798
        %v3895 = vsel %vm3831, %v3863, %v3799
        %v3896 = vsel %vm3832, %v3864, %v3800
        %v3897 = vsel %vm3833, %v3865, %v3801
        %v3898 = vsel %vm3834, %v3866, %v3802
        %v3899 = vsel %vm3835, %v3867, %v3803
        %v3900 = vsel %vm3836, %v3868, %v3804
        %v3901 = vsel %vm3837, %v3869, %v3805
        %v3902 = vsel %vm3838, %v3870, %v3806
        %v3903 = vsel %vm3839, %v3871, %v3807
        %v3904 = vsel %vm3840, %v3872, %v3808
        %v3905 = vsel %vm3841, %v3873, %v3809
        %v3906 = vsel %vm3842, %v3874, %v3810
        %v3907 = vsel %vm3843, %v3875, %v3811
        %v3908 = vsel %vm3844, %v3876, %v3812
        %v3909 = vsel %vm3845, %v3877, %v3813
        %v3910 = vsel %vm3846, %v3878, %v3814
        %v3911 = vsel %vm3847, %v3879, %v3815
        %v3912 = vsel %vm3848, %v3880, %v3816
        %v3913 = vsel %vm3849, %v3881, %v3817
        %v3914 = vsel %vm3850, %v3882, %v3818
        %v3915 = vsel %vm3851, %v3883, %v3819
        %v3916 = vsel %vm3852, %v3884, %v3820
        %v3917 = vsel %vm3853, %v3885, %v3821
        %v3918 = vsel %vm3854, %v3886, %v3822
        %v3919 = vsel %vm3855, %v3887, %v3823
        %v3920 = vsel %vm3856, %v3888, %v3824
        %v3921 = vsel %vm3857, %v3889, %v3825
        %v3922 = vsel %vm3858, %v3890, %v3826
        %v3923 = vsel %vm3859, %v3891, %v3827
        %v3924 = vadd.f32 %v3892, 1.0
        %v3925 = vadd.f32 %v3893, 1.0
        %v3926 = vadd.f32 %v3894, 1.0
        %v3927 = vadd.f32 %v3895, 1.0
        %v3928 = vadd.f32 %v3896, 1.0
        %v3929 = vadd.f32 %v3897, 1.0
        %v3930 = vadd.f32 %v3898, 1.0
        %v3931 = vadd.f32 %v3899, 1.0
        %v3932 = vadd.f32 %v3900, 1.0
        %v3933 = vadd.f32 %v3901, 1.0
        %v3934 = vadd.f32 %v3902, 1.0
        %v3935 = vadd.f32 %v3903, 1.0
        %v3936 = vadd.f32 %v3904, 1.0
        %v3937 = vadd.f32 %v3905, 1.0
        %v3938 = vadd.f32 %v3906, 1.0
        %v3939 = vadd.f32 %v3907, 1.0
        %v3940 = vadd.f32 %v3908, 1.0
        %v3941 = vadd.f32 %v3909, 1.0
        %v3942 = vadd.f32 %v3910, 1.0
        %v3943 = vadd.f32 %v3911, 1.0
        %v3944 = vadd.f32 %v3912, 1.0
        %v3945 = vadd.f32 %v3913, 1.0
        %v3946 = vadd.f32 %v3914, 1.0
        %v3947 = vadd.f32 %v3915, 1.0
        %v3948 = vadd.f32 %v3916, 1.0
        %v3949 = vadd.f32 %v3917, 1.0
        %v3950 = vadd.f32 %v3918, 1.0
        %v3951 = vadd.f32 %v3919, 1.0
        %v3952 = vadd.f32 %v3920, 1.0
        %v3953 = vadd.f32 %v3921, 1.0
        %v3954 = vadd.f32 %v3922, 1.0
        %v3955 = vadd.f32 %v3923, 1.0
        %v3956 = vmul.f32 %v3124, %v3924
        %v3957 = vmul.f32 %v3125, %v3925
        %v3958 = vmul.f32 %v3126, %v3926
        %v3959 = vmul.f32 %v3127, %v3927
        %v3960 = vmul.f32 %v3128, %v3928
        %v3961 = vmul.f32 %v3129, %v3929
        %v3962 = vmul.f32 %v3130, %v3930
        %v3963 = vmul.f32 %v3131, %v3931
        %v3964 = vmul.f32 %v3132, %v3932
        %v3965 = vmul.f32 %v3133, %v3933
        %v3966 = vmul.f32 %v3134, %v3934
        %v3967 = vmul.f32 %v3135, %v3935
        %v3968 = vmul.f32 %v3136, %v3936
        %v3969 = vmul.f32 %v3137, %v3937
        %v3970 = vmul.f32 %v3138, %v3938
        %v3971 = vmul.f32 %v3139, %v3939
        %v3972 = vmul.f32 %v3140, %v3940
        %v3973 = vmul.f32 %v3141, %v3941
        %v3974 = vmul.f32 %v3142, %v3942
        %v3975 = vmul.f32 %v3143, %v3943
        %v3976 = vmul.f32 %v3144, %v3944
        %v3977 = vmul.f32 %v3145, %v3945
        %v3978 = vmul.f32 %v3146, %v3946
        %v3979 = vmul.f32 %v3147, %v3947
        %v3980 = vmul.f32 %v3148, %v3948
        %v3981 = vmul.f32 %v3149, %v3949
        %v3982 = vmul.f32 %v3150, %v3950
        %v3983 = vmul.f32 %v3151, %v3951
        %v3984 = vmul.f32 %v3152, %v3952
        %v3985 = vmul.f32 %v3153, %v3953
        %v3986 = vmul.f32 %v3154, %v3954
        %v3987 = vmul.f32 %v3155, %v3955
        %v3988 = vld [vmem:[#allocation10] sm:$0xff]
        %v3989 = vld [vmem:[#allocation10 + $0x8] sm:$0xff]
        %v3990 = vld [vmem:[#allocation10 + $0x10] sm:$0xff]
        %v3991 = vld [vmem:[#allocation10 + $0x18] sm:$0xff]
        %v3992 = vld [vmem:[#allocation10 + $0x20] sm:$0xff]
        %v3993 = vld [vmem:[#allocation10 + $0x28] sm:$0xff]
        %v3994 = vld [vmem:[#allocation10 + $0x30] sm:$0xff]
        %v3995 = vld [vmem:[#allocation10 + $0x38] sm:$0xff]
        %v3996 = vld [vmem:[#allocation10 + $0x40] sm:$0xff]
        %v3997 = vld [vmem:[#allocation10 + $0x48] sm:$0xff]
        %v3998 = vld [vmem:[#allocation10 + $0x50] sm:$0xff]
        %v3999 = vld [vmem:[#allocation10 + $0x58] sm:$0xff]
        %v4000 = vld [vmem:[#allocation10 + $0x60] sm:$0xff]
        %v4001 = vld [vmem:[#allocation10 + $0x68] sm:$0xff]
        %v4002 = vld [vmem:[#allocation10 + $0x70] sm:$0xff]
        %v4003 = vld [vmem:[#allocation10 + $0x78] sm:$0xff]
        %v4004 = vld [vmem:[#allocation10 + $0x80] sm:$0xff]
        %v4005 = vld [vmem:[#allocation10 + $0x88] sm:$0xff]
        %v4006 = vld [vmem:[#allocation10 + $0x90] sm:$0xff]
        %v4007 = vld [vmem:[#allocation10 + $0x98] sm:$0xff]
        %v4008 = vld [vmem:[#allocation10 + $0xa0] sm:$0xff]
        %v4009 = vld [vmem:[#allocation10 + $0xa8] sm:$0xff]
        %v4010 = vld [vmem:[#allocation10 + $0xb0] sm:$0xff]
        %v4011 = vld [vmem:[#allocation10 + $0xb8] sm:$0xff]
        %v4012 = vld [vmem:[#allocation10 + $0xc0] sm:$0xff]
        %v4013 = vld [vmem:[#allocation10 + $0xc8] sm:$0xff]
        %v4014 = vld [vmem:[#allocation10 + $0xd0] sm:$0xff]
        %v4015 = vld [vmem:[#allocation10 + $0xd8] sm:$0xff]
        %v4016 = vld [vmem:[#allocation10 + $0xe0] sm:$0xff]
        %v4017 = vld [vmem:[#allocation10 + $0xe8] sm:$0xff]
        %v4018 = vld [vmem:[#allocation10 + $0xf0] sm:$0xff]
        %v4019 = vld [vmem:[#allocation10 + $0xf8] sm:$0xff]
        %v4020 = vld [vmem:[#allocation10 + $0x100] sm:$0xff]
        %v4021 = vld [vmem:[#allocation10 + $0x108] sm:$0xff]
        %v4022 = vld [vmem:[#allocation10 + $0x110] sm:$0xff]
        %v4023 = vld [vmem:[#allocation10 + $0x118] sm:$0xff]
        %v4024 = vld [vmem:[#allocation10 + $0x120] sm:$0xff]
        %v4025 = vld [vmem:[#allocation10 + $0x128] sm:$0xff]
        %v4026 = vld [vmem:[#allocation10 + $0x130] sm:$0xff]
        %v4027 = vld [vmem:[#allocation10 + $0x138] sm:$0xff]
        %v4028 = vld [vmem:[#allocation10 + $0x140] sm:$0xff]
        %v4029 = vld [vmem:[#allocation10 + $0x148] sm:$0xff]
        %v4030 = vld [vmem:[#allocation10 + $0x150] sm:$0xff]
        %v4031 = vld [vmem:[#allocation10 + $0x158] sm:$0xff]
        %v4032 = vld [vmem:[#allocation10 + $0x160] sm:$0xff]
        %v4033 = vld [vmem:[#allocation10 + $0x168] sm:$0xff]
        %v4034 = vld [vmem:[#allocation10 + $0x170] sm:$0xff]
        %v4035 = vld [vmem:[#allocation10 + $0x178] sm:$0xff]
        %v4036 = vld [vmem:[#allocation10 + $0x180] sm:$0xff]
        %v4037 = vld [vmem:[#allocation10 + $0x188] sm:$0xff]
        %v4038 = vld [vmem:[#allocation10 + $0x190] sm:$0xff]
        %v4039 = vld [vmem:[#allocation10 + $0x198] sm:$0xff]
        %v4040 = vld [vmem:[#allocation10 + $0x1a0] sm:$0xff]
        %v4041 = vld [vmem:[#allocation10 + $0x1a8] sm:$0xff]
        %v4042 = vld [vmem:[#allocation10 + $0x1b0] sm:$0xff]
        %v4043 = vld [vmem:[#allocation10 + $0x1b8] sm:$0xff]
        %v4044 = vld [vmem:[#allocation10 + $0x1c0] sm:$0xff]
        %v4045 = vld [vmem:[#allocation10 + $0x1c8] sm:$0xff]
        %v4046 = vld [vmem:[#allocation10 + $0x1d0] sm:$0xff]
        %v4047 = vld [vmem:[#allocation10 + $0x1d8] sm:$0xff]
        %v4048 = vld [vmem:[#allocation10 + $0x1e0] sm:$0xff]
        %v4049 = vld [vmem:[#allocation10 + $0x1e8] sm:$0xff]
        %v4050 = vld [vmem:[#allocation10 + $0x1f0] sm:$0xff]
        %v4051 = vld [vmem:[#allocation10 + $0x1f8] sm:$0xff]
        %v4052 = vld [vmem:[#allocation10 + $0x200] sm:$0xff]
        %v4053 = vld [vmem:[#allocation10 + $0x208] sm:$0xff]
        %v4054 = vld [vmem:[#allocation10 + $0x210] sm:$0xff]
        %v4055 = vld [vmem:[#allocation10 + $0x218] sm:$0xff]
        %v4056 = vld [vmem:[#allocation10 + $0x220] sm:$0xff]
        %v4057 = vld [vmem:[#allocation10 + $0x228] sm:$0xff]
        %v4058 = vld [vmem:[#allocation10 + $0x230] sm:$0xff]
        %v4059 = vld [vmem:[#allocation10 + $0x238] sm:$0xff]
        %v4060 = vld [vmem:[#allocation10 + $0x240] sm:$0xff]
        %v4061 = vld [vmem:[#allocation10 + $0x248] sm:$0xff]
        %v4062 = vld [vmem:[#allocation10 + $0x250] sm:$0xff]
        %v4063 = vld [vmem:[#allocation10 + $0x258] sm:$0xff]
        %v4064 = vld [vmem:[#allocation10 + $0x260] sm:$0xff]
        %v4065 = vld [vmem:[#allocation10 + $0x268] sm:$0xff]
        %v4066 = vld [vmem:[#allocation10 + $0x270] sm:$0xff]
        %v4067 = vld [vmem:[#allocation10 + $0x278] sm:$0xff]
        %v4068 = vld [vmem:[#allocation10 + $0x280] sm:$0xff]
        %v4069 = vld [vmem:[#allocation10 + $0x288] sm:$0xff]
        %v4070 = vld [vmem:[#allocation10 + $0x290] sm:$0xff]
        %v4071 = vld [vmem:[#allocation10 + $0x298] sm:$0xff]
        %v4072 = vld [vmem:[#allocation10 + $0x2a0] sm:$0xff]
        %v4073 = vld [vmem:[#allocation10 + $0x2a8] sm:$0xff]
        %v4074 = vld [vmem:[#allocation10 + $0x2b0] sm:$0xff]
        %v4075 = vld [vmem:[#allocation10 + $0x2b8] sm:$0xff]
        %v4076 = vld [vmem:[#allocation10 + $0x2c0] sm:$0xff]
        %v4077 = vld [vmem:[#allocation10 + $0x2c8] sm:$0xff]
        %v4078 = vld [vmem:[#allocation10 + $0x2d0] sm:$0xff]
        %v4079 = vld [vmem:[#allocation10 + $0x2d8] sm:$0xff]
        %v4080 = vld [vmem:[#allocation10 + $0x2e0] sm:$0xff]
        %v4081 = vld [vmem:[#allocation10 + $0x2e8] sm:$0xff]
        %v4082 = vld [vmem:[#allocation10 + $0x2f0] sm:$0xff]
        %v4083 = vld [vmem:[#allocation10 + $0x2f8] sm:$0xff]
        %v4084 = vld [vmem:[#allocation10 + $0x300] sm:$0xff]
        %v4085 = vld [vmem:[#allocation10 + $0x308] sm:$0xff]
        %v4086 = vld [vmem:[#allocation10 + $0x310] sm:$0xff]
        %v4087 = vld [vmem:[#allocation10 + $0x318] sm:$0xff]
        %v4088 = vld [vmem:[#allocation10 + $0x320] sm:$0xff]
        %v4089 = vld [vmem:[#allocation10 + $0x328] sm:$0xff]
        %v4090 = vld [vmem:[#allocation10 + $0x330] sm:$0xff]
        %v4091 = vld [vmem:[#allocation10 + $0x338] sm:$0xff]
        %v4092 = vld [vmem:[#allocation10 + $0x340] sm:$0xff]
        %v4093 = vld [vmem:[#allocation10 + $0x348] sm:$0xff]
        %v4094 = vld [vmem:[#allocation10 + $0x350] sm:$0xff]
        %v4095 = vld [vmem:[#allocation10 + $0x358] sm:$0xff]
        %v4096 = vld [vmem:[#allocation10 + $0x360] sm:$0xff]
        %v4097 = vld [vmem:[#allocation10 + $0x368] sm:$0xff]
        %v4098 = vld [vmem:[#allocation10 + $0x370] sm:$0xff]
        %v4099 = vld [vmem:[#allocation10 + $0x378] sm:$0xff]
        %v4100 = vld [vmem:[#allocation10 + $0x380] sm:$0xff]
        %v4101 = vld [vmem:[#allocation10 + $0x388] sm:$0xff]
        %v4102 = vld [vmem:[#allocation10 + $0x390] sm:$0xff]
        %v4103 = vld [vmem:[#allocation10 + $0x398] sm:$0xff]
        %v4104 = vld [vmem:[#allocation10 + $0x3a0] sm:$0xff]
        %v4105 = vld [vmem:[#allocation10 + $0x3a8] sm:$0xff]
        %v4106 = vld [vmem:[#allocation10 + $0x3b0] sm:$0xff]
        %v4107 = vld [vmem:[#allocation10 + $0x3b8] sm:$0xff]
        %v4108 = vld [vmem:[#allocation10 + $0x3c0] sm:$0xff]
        %v4109 = vld [vmem:[#allocation10 + $0x3c8] sm:$0xff]
        %v4110 = vld [vmem:[#allocation10 + $0x3d0] sm:$0xff]
        %v4111 = vld [vmem:[#allocation10 + $0x3d8] sm:$0xff]
        %v4112 = vld [vmem:[#allocation10 + $0x3e0] sm:$0xff]
        %v4113 = vld [vmem:[#allocation10 + $0x3e8] sm:$0xff]
        %v4114 = vld [vmem:[#allocation10 + $0x3f0] sm:$0xff]
        %v4115 = vld [vmem:[#allocation10 + $0x3f8] sm:$0xff]
        %v4116 = vpack.c.bf16 %v3964, %v3956
        %v4117 = vpack.c.bf16 %v3965, %v3957
        %v4118 = vpack.c.bf16 %v3966, %v3958
        %v4119 = vpack.c.bf16 %v3967, %v3959
        %v4120 = vpack.c.bf16 %v3968, %v3960
        %v4121 = vpack.c.bf16 %v3969, %v3961
        %v4122 = vpack.c.bf16 %v3970, %v3962
        %v4123 = vpack.c.bf16 %v3971, %v3963
        %v4124 = vpack.c.bf16 %v3980, %v3972
        %v4125 = vpack.c.bf16 %v3981, %v3973
        %v4126 = vpack.c.bf16 %v3982, %v3974
        %v4127 = vpack.c.bf16 %v3983, %v3975
        %v4128 = vpack.c.bf16 %v3984, %v3976
        %v4129 = vpack.c.bf16 %v3985, %v3977
        %v4130 = vpack.c.bf16 %v3986, %v3978
        %v4131 = vpack.c.bf16 %v3987, %v3979
        %v4132 = vld [vmem:[%s11] sm:$0x3]
        %v4134 = vlaneseq
        %v4135 = vshrl.u32 %v4134, 7
        %v4136 = vsub.s32 0, %v4135
        %v4137 = vrot.slane %v4132, %v4136
        %v4138 = vlaneseq
        %v4139 = vshrl.u32 %v4138, 7
        %v4140 = vsub.s32 1, %v4139
        %v4141 = vrot.slane %v4132, %v4140
        %v4272 = vunpack.c.l.b16 %v3988
        %v4273 = vunpack.c.h.b16 %v3988
        %v4274 = vunpack.c.l.b16 %v3989
        %v4275 = vunpack.c.h.b16 %v3989
        %v4276 = vunpack.c.l.b16 %v3990
        %v4277 = vunpack.c.h.b16 %v3990
        %v4278 = vunpack.c.l.b16 %v3991
        %v4279 = vunpack.c.h.b16 %v3991
        %v4280 = vunpack.c.l.b16 %v3992
        %v4281 = vunpack.c.h.b16 %v3992
        %v4282 = vunpack.c.l.b16 %v3993
        %v4283 = vunpack.c.h.b16 %v3993
        %v4284 = vunpack.c.l.b16 %v3994
        %v4285 = vunpack.c.h.b16 %v3994
        %v4286 = vunpack.c.l.b16 %v3995
        %v4287 = vunpack.c.h.b16 %v3995
        %v4288 = vunpack.c.l.b16 %v3996
        %v4289 = vunpack.c.h.b16 %v3996
        %v4290 = vunpack.c.l.b16 %v3997
        %v4291 = vunpack.c.h.b16 %v3997
        %v4292 = vunpack.c.l.b16 %v3998
        %v4293 = vunpack.c.h.b16 %v3998
        %v4294 = vunpack.c.l.b16 %v3999
        %v4295 = vunpack.c.h.b16 %v3999
        %v4296 = vunpack.c.l.b16 %v4000
        %v4297 = vunpack.c.h.b16 %v4000
        %v4298 = vunpack.c.l.b16 %v4001
        %v4299 = vunpack.c.h.b16 %v4001
        %v4300 = vunpack.c.l.b16 %v4002
        %v4301 = vunpack.c.h.b16 %v4002
        %v4302 = vunpack.c.l.b16 %v4003
        %v4303 = vunpack.c.h.b16 %v4003
        %v4304 = vunpack.c.l.b16 %v4004
        %v4305 = vunpack.c.h.b16 %v4004
        %v4306 = vunpack.c.l.b16 %v4005
        %v4307 = vunpack.c.h.b16 %v4005
        %v4308 = vunpack.c.l.b16 %v4006
        %v4309 = vunpack.c.h.b16 %v4006
        %v4310 = vunpack.c.l.b16 %v4007
        %v4311 = vunpack.c.h.b16 %v4007
        %v4312 = vunpack.c.l.b16 %v4008
        %v4313 = vunpack.c.h.b16 %v4008
        %v4314 = vunpack.c.l.b16 %v4009
        %v4315 = vunpack.c.h.b16 %v4009
        %v4316 = vunpack.c.l.b16 %v4010
        %v4317 = vunpack.c.h.b16 %v4010
        %v4318 = vunpack.c.l.b16 %v4011
        %v4319 = vunpack.c.h.b16 %v4011
        %v4320 = vunpack.c.l.b16 %v4012
        %v4321 = vunpack.c.h.b16 %v4012
        %v4322 = vunpack.c.l.b16 %v4013
        %v4323 = vunpack.c.h.b16 %v4013
        %v4324 = vunpack.c.l.b16 %v4014
        %v4325 = vunpack.c.h.b16 %v4014
        %v4326 = vunpack.c.l.b16 %v4015
        %v4327 = vunpack.c.h.b16 %v4015
        %v4328 = vunpack.c.l.b16 %v4016
        %v4329 = vunpack.c.h.b16 %v4016
        %v4330 = vunpack.c.l.b16 %v4017
        %v4331 = vunpack.c.h.b16 %v4017
        %v4332 = vunpack.c.l.b16 %v4018
        %v4333 = vunpack.c.h.b16 %v4018
        %v4334 = vunpack.c.l.b16 %v4019
        %v4335 = vunpack.c.h.b16 %v4019
        %v4336 = vunpack.c.l.b16 %v4020
        %v4337 = vunpack.c.h.b16 %v4020
        %v4338 = vunpack.c.l.b16 %v4021
        %v4339 = vunpack.c.h.b16 %v4021
        %v4340 = vunpack.c.l.b16 %v4022
        %v4341 = vunpack.c.h.b16 %v4022
        %v4342 = vunpack.c.l.b16 %v4023
        %v4343 = vunpack.c.h.b16 %v4023
        %v4344 = vunpack.c.l.b16 %v4024
        %v4345 = vunpack.c.h.b16 %v4024
        %v4346 = vunpack.c.l.b16 %v4025
        %v4347 = vunpack.c.h.b16 %v4025
        %v4348 = vunpack.c.l.b16 %v4026
        %v4349 = vunpack.c.h.b16 %v4026
        %v4350 = vunpack.c.l.b16 %v4027
        %v4351 = vunpack.c.h.b16 %v4027
        %v4352 = vunpack.c.l.b16 %v4028
        %v4353 = vunpack.c.h.b16 %v4028
        %v4354 = vunpack.c.l.b16 %v4029
        %v4355 = vunpack.c.h.b16 %v4029
        %v4356 = vunpack.c.l.b16 %v4030
        %v4357 = vunpack.c.h.b16 %v4030
        %v4358 = vunpack.c.l.b16 %v4031
        %v4359 = vunpack.c.h.b16 %v4031
        %v4360 = vunpack.c.l.b16 %v4032
        %v4361 = vunpack.c.h.b16 %v4032
        %v4362 = vunpack.c.l.b16 %v4033
        %v4363 = vunpack.c.h.b16 %v4033
        %v4364 = vunpack.c.l.b16 %v4034
        %v4365 = vunpack.c.h.b16 %v4034
        %v4366 = vunpack.c.l.b16 %v4035
        %v4367 = vunpack.c.h.b16 %v4035
        %v4368 = vunpack.c.l.b16 %v4036
        %v4369 = vunpack.c.h.b16 %v4036
        %v4370 = vunpack.c.l.b16 %v4037
        %v4371 = vunpack.c.h.b16 %v4037
        %v4372 = vunpack.c.l.b16 %v4038
        %v4373 = vunpack.c.h.b16 %v4038
        %v4374 = vunpack.c.l.b16 %v4039
        %v4375 = vunpack.c.h.b16 %v4039
        %v4376 = vunpack.c.l.b16 %v4040
        %v4377 = vunpack.c.h.b16 %v4040
        %v4378 = vunpack.c.l.b16 %v4041
        %v4379 = vunpack.c.h.b16 %v4041
        %v4380 = vunpack.c.l.b16 %v4042
        %v4381 = vunpack.c.h.b16 %v4042
        %v4382 = vunpack.c.l.b16 %v4043
        %v4383 = vunpack.c.h.b16 %v4043
        %v4384 = vunpack.c.l.b16 %v4044
        %v4385 = vunpack.c.h.b16 %v4044
        %v4386 = vunpack.c.l.b16 %v4045
        %v4387 = vunpack.c.h.b16 %v4045
        %v4388 = vunpack.c.l.b16 %v4046
        %v4389 = vunpack.c.h.b16 %v4046
        %v4390 = vunpack.c.l.b16 %v4047
        %v4391 = vunpack.c.h.b16 %v4047
        %v4392 = vunpack.c.l.b16 %v4048
        %v4393 = vunpack.c.h.b16 %v4048
        %v4394 = vunpack.c.l.b16 %v4049
        %v4395 = vunpack.c.h.b16 %v4049
        %v4396 = vunpack.c.l.b16 %v4050
        %v4397 = vunpack.c.h.b16 %v4050
        %v4398 = vunpack.c.l.b16 %v4051
        %v4399 = vunpack.c.h.b16 %v4051
        %v4400 = vunpack.c.l.b16 %v4052
        %v4401 = vunpack.c.h.b16 %v4052
        %v4402 = vunpack.c.l.b16 %v4053
        %v4403 = vunpack.c.h.b16 %v4053
        %v4404 = vunpack.c.l.b16 %v4054
        %v4405 = vunpack.c.h.b16 %v4054
        %v4406 = vunpack.c.l.b16 %v4055
        %v4407 = vunpack.c.h.b16 %v4055
        %v4408 = vunpack.c.l.b16 %v4056
        %v4409 = vunpack.c.h.b16 %v4056
        %v4410 = vunpack.c.l.b16 %v4057
        %v4411 = vunpack.c.h.b16 %v4057
        %v4412 = vunpack.c.l.b16 %v4058
        %v4413 = vunpack.c.h.b16 %v4058
        %v4414 = vunpack.c.l.b16 %v4059
        %v4415 = vunpack.c.h.b16 %v4059
        %v4416 = vunpack.c.l.b16 %v4060
        %v4417 = vunpack.c.h.b16 %v4060
        %v4418 = vunpack.c.l.b16 %v4061
        %v4419 = vunpack.c.h.b16 %v4061
        %v4420 = vunpack.c.l.b16 %v4062
        %v4421 = vunpack.c.h.b16 %v4062
        %v4422 = vunpack.c.l.b16 %v4063
        %v4423 = vunpack.c.h.b16 %v4063
        %v4424 = vunpack.c.l.b16 %v4064
        %v4425 = vunpack.c.h.b16 %v4064
        %v4426 = vunpack.c.l.b16 %v4065
        %v4427 = vunpack.c.h.b16 %v4065
        %v4428 = vunpack.c.l.b16 %v4066
        %v4429 = vunpack.c.h.b16 %v4066
        %v4430 = vunpack.c.l.b16 %v4067
        %v4431 = vunpack.c.h.b16 %v4067
        %v4432 = vunpack.c.l.b16 %v4068
        %v4433 = vunpack.c.h.b16 %v4068
        %v4434 = vunpack.c.l.b16 %v4069
        %v4435 = vunpack.c.h.b16 %v4069
        %v4436 = vunpack.c.l.b16 %v4070
        %v4437 = vunpack.c.h.b16 %v4070
        %v4438 = vunpack.c.l.b16 %v4071
        %v4439 = vunpack.c.h.b16 %v4071
        %v4440 = vunpack.c.l.b16 %v4072
        %v4441 = vunpack.c.h.b16 %v4072
        %v4442 = vunpack.c.l.b16 %v4073
        %v4443 = vunpack.c.h.b16 %v4073
        %v4444 = vunpack.c.l.b16 %v4074
        %v4445 = vunpack.c.h.b16 %v4074
        %v4446 = vunpack.c.l.b16 %v4075
        %v4447 = vunpack.c.h.b16 %v4075
        %v4448 = vunpack.c.l.b16 %v4076
        %v4449 = vunpack.c.h.b16 %v4076
        %v4450 = vunpack.c.l.b16 %v4077
        %v4451 = vunpack.c.h.b16 %v4077
        %v4452 = vunpack.c.l.b16 %v4078
        %v4453 = vunpack.c.h.b16 %v4078
        %v4454 = vunpack.c.l.b16 %v4079
        %v4455 = vunpack.c.h.b16 %v4079
        %v4456 = vunpack.c.l.b16 %v4080
        %v4457 = vunpack.c.h.b16 %v4080
        %v4458 = vunpack.c.l.b16 %v4081
        %v4459 = vunpack.c.h.b16 %v4081
        %v4460 = vunpack.c.l.b16 %v4082
        %v4461 = vunpack.c.h.b16 %v4082
        %v4462 = vunpack.c.l.b16 %v4083
        %v4463 = vunpack.c.h.b16 %v4083
        %v4464 = vunpack.c.l.b16 %v4084
        %v4465 = vunpack.c.h.b16 %v4084
        %v4466 = vunpack.c.l.b16 %v4085
        %v4467 = vunpack.c.h.b16 %v4085
        %v4468 = vunpack.c.l.b16 %v4086
        %v4469 = vunpack.c.h.b16 %v4086
        %v4470 = vunpack.c.l.b16 %v4087
        %v4471 = vunpack.c.h.b16 %v4087
        %v4472 = vunpack.c.l.b16 %v4088
        %v4473 = vunpack.c.h.b16 %v4088
        %v4474 = vunpack.c.l.b16 %v4089
        %v4475 = vunpack.c.h.b16 %v4089
        %v4476 = vunpack.c.l.b16 %v4090
        %v4477 = vunpack.c.h.b16 %v4090
        %v4478 = vunpack.c.l.b16 %v4091
        %v4479 = vunpack.c.h.b16 %v4091
        %v4480 = vunpack.c.l.b16 %v4092
        %v4481 = vunpack.c.h.b16 %v4092
        %v4482 = vunpack.c.l.b16 %v4093
        %v4483 = vunpack.c.h.b16 %v4093
        %v4484 = vunpack.c.l.b16 %v4094
        %v4485 = vunpack.c.h.b16 %v4094
        %v4486 = vunpack.c.l.b16 %v4095
        %v4487 = vunpack.c.h.b16 %v4095
        %v4488 = vunpack.c.l.b16 %v4096
        %v4489 = vunpack.c.h.b16 %v4096
        %v4490 = vunpack.c.l.b16 %v4097
        %v4491 = vunpack.c.h.b16 %v4097
        %v4492 = vunpack.c.l.b16 %v4098
        %v4493 = vunpack.c.h.b16 %v4098
        %v4494 = vunpack.c.l.b16 %v4099
        %v4495 = vunpack.c.h.b16 %v4099
        %v4496 = vunpack.c.l.b16 %v4100
        %v4497 = vunpack.c.h.b16 %v4100
        %v4498 = vunpack.c.l.b16 %v4101
        %v4499 = vunpack.c.h.b16 %v4101
        %v4500 = vunpack.c.l.b16 %v4102
        %v4501 = vunpack.c.h.b16 %v4102
        %v4502 = vunpack.c.l.b16 %v4103
        %v4503 = vunpack.c.h.b16 %v4103
        %v4504 = vunpack.c.l.b16 %v4104
        %v4505 = vunpack.c.h.b16 %v4104
        %v4506 = vunpack.c.l.b16 %v4105
        %v4507 = vunpack.c.h.b16 %v4105
        %v4508 = vunpack.c.l.b16 %v4106
        %v4509 = vunpack.c.h.b16 %v4106
        %v4510 = vunpack.c.l.b16 %v4107
        %v4511 = vunpack.c.h.b16 %v4107
        %v4512 = vunpack.c.l.b16 %v4108
        %v4513 = vunpack.c.h.b16 %v4108
        %v4514 = vunpack.c.l.b16 %v4109
        %v4515 = vunpack.c.h.b16 %v4109
        %v4516 = vunpack.c.l.b16 %v4110
        %v4517 = vunpack.c.h.b16 %v4110
        %v4518 = vunpack.c.l.b16 %v4111
        %v4519 = vunpack.c.h.b16 %v4111
        %v4520 = vunpack.c.l.b16 %v4112
        %v4521 = vunpack.c.h.b16 %v4112
        %v4522 = vunpack.c.l.b16 %v4113
        %v4523 = vunpack.c.h.b16 %v4113
        %v4524 = vunpack.c.l.b16 %v4114
        %v4525 = vunpack.c.h.b16 %v4114
        %v4526 = vunpack.c.l.b16 %v4115
        %v4527 = vunpack.c.h.b16 %v4115
        %v4528 = vpack.c.b16 %v4274, %v4272
        %v4529 = vpack.c.b16 %v4275, %v4273
        %v4530 = vpack.c.b16 %v4278, %v4276
        %v4531 = vpack.c.b16 %v4279, %v4277
        %v4532 = vpack.c.b16 %v4282, %v4280
        %v4533 = vpack.c.b16 %v4283, %v4281
        %v4534 = vpack.c.b16 %v4286, %v4284
        %v4535 = vpack.c.b16 %v4287, %v4285
        %v4536 = vpack.c.b16 %v4290, %v4288
        %v4537 = vpack.c.b16 %v4291, %v4289
        %v4538 = vpack.c.b16 %v4294, %v4292
        %v4539 = vpack.c.b16 %v4295, %v4293
        %v4540 = vpack.c.b16 %v4298, %v4296
        %v4541 = vpack.c.b16 %v4299, %v4297
        %v4542 = vpack.c.b16 %v4302, %v4300
        %v4543 = vpack.c.b16 %v4303, %v4301
        %v4544 = vpack.c.b16 %v4306, %v4304
        %v4545 = vpack.c.b16 %v4307, %v4305
        %v4546 = vpack.c.b16 %v4310, %v4308
        %v4547 = vpack.c.b16 %v4311, %v4309
        %v4548 = vpack.c.b16 %v4314, %v4312
        %v4549 = vpack.c.b16 %v4315, %v4313
        %v4550 = vpack.c.b16 %v4318, %v4316
        %v4551 = vpack.c.b16 %v4319, %v4317
        %v4552 = vpack.c.b16 %v4322, %v4320
        %v4553 = vpack.c.b16 %v4323, %v4321
        %v4554 = vpack.c.b16 %v4326, %v4324
        %v4555 = vpack.c.b16 %v4327, %v4325
        %v4556 = vpack.c.b16 %v4330, %v4328
        %v4557 = vpack.c.b16 %v4331, %v4329
        %v4558 = vpack.c.b16 %v4334, %v4332
        %v4559 = vpack.c.b16 %v4335, %v4333
        %v4560 = vpack.c.b16 %v4338, %v4336
        %v4561 = vpack.c.b16 %v4339, %v4337
        %v4562 = vpack.c.b16 %v4342, %v4340
        %v4563 = vpack.c.b16 %v4343, %v4341
        %v4564 = vpack.c.b16 %v4346, %v4344
        %v4565 = vpack.c.b16 %v4347, %v4345
        %v4566 = vpack.c.b16 %v4350, %v4348
        %v4567 = vpack.c.b16 %v4351, %v4349
        %v4568 = vpack.c.b16 %v4354, %v4352
        %v4569 = vpack.c.b16 %v4355, %v4353
        %v4570 = vpack.c.b16 %v4358, %v4356
        %v4571 = vpack.c.b16 %v4359, %v4357
        %v4572 = vpack.c.b16 %v4362, %v4360
        %v4573 = vpack.c.b16 %v4363, %v4361
        %v4574 = vpack.c.b16 %v4366, %v4364
        %v4575 = vpack.c.b16 %v4367, %v4365
        %v4576 = vpack.c.b16 %v4370, %v4368
        %v4577 = vpack.c.b16 %v4371, %v4369
        %v4578 = vpack.c.b16 %v4374, %v4372
        %v4579 = vpack.c.b16 %v4375, %v4373
        %v4580 = vpack.c.b16 %v4378, %v4376
        %v4581 = vpack.c.b16 %v4379, %v4377
        %v4582 = vpack.c.b16 %v4382, %v4380
        %v4583 = vpack.c.b16 %v4383, %v4381
        %v4584 = vpack.c.b16 %v4386, %v4384
        %v4585 = vpack.c.b16 %v4387, %v4385
        %v4586 = vpack.c.b16 %v4390, %v4388
        %v4587 = vpack.c.b16 %v4391, %v4389
        %v4588 = vpack.c.b16 %v4394, %v4392
        %v4589 = vpack.c.b16 %v4395, %v4393
        %v4590 = vpack.c.b16 %v4398, %v4396
        %v4591 = vpack.c.b16 %v4399, %v4397
        %v4592 = vpack.c.b16 %v4402, %v4400
        %v4593 = vpack.c.b16 %v4403, %v4401
        %v4594 = vpack.c.b16 %v4406, %v4404
        %v4595 = vpack.c.b16 %v4407, %v4405
        %v4596 = vpack.c.b16 %v4410, %v4408
        %v4597 = vpack.c.b16 %v4411, %v4409
        %v4598 = vpack.c.b16 %v4414, %v4412
        %v4599 = vpack.c.b16 %v4415, %v4413
        %v4600 = vpack.c.b16 %v4418, %v4416
        %v4601 = vpack.c.b16 %v4419, %v4417
        %v4602 = vpack.c.b16 %v4422, %v4420
        %v4603 = vpack.c.b16 %v4423, %v4421
        %v4604 = vpack.c.b16 %v4426, %v4424
        %v4605 = vpack.c.b16 %v4427, %v4425
        %v4606 = vpack.c.b16 %v4430, %v4428
        %v4607 = vpack.c.b16 %v4431, %v4429
        %v4608 = vpack.c.b16 %v4434, %v4432
        %v4609 = vpack.c.b16 %v4435, %v4433
        %v4610 = vpack.c.b16 %v4438, %v4436
        %v4611 = vpack.c.b16 %v4439, %v4437
        %v4612 = vpack.c.b16 %v4442, %v4440
        %v4613 = vpack.c.b16 %v4443, %v4441
        %v4614 = vpack.c.b16 %v4446, %v4444
        %v4615 = vpack.c.b16 %v4447, %v4445
        %v4616 = vpack.c.b16 %v4450, %v4448
        %v4617 = vpack.c.b16 %v4451, %v4449
        %v4618 = vpack.c.b16 %v4454, %v4452
        %v4619 = vpack.c.b16 %v4455, %v4453
        %v4620 = vpack.c.b16 %v4458, %v4456
        %v4621 = vpack.c.b16 %v4459, %v4457
        %v4622 = vpack.c.b16 %v4462, %v4460
        %v4623 = vpack.c.b16 %v4463, %v4461
        %v4624 = vpack.c.b16 %v4466, %v4464
        %v4625 = vpack.c.b16 %v4467, %v4465
        %v4626 = vpack.c.b16 %v4470, %v4468
        %v4627 = vpack.c.b16 %v4471, %v4469
        %v4628 = vpack.c.b16 %v4474, %v4472
        %v4629 = vpack.c.b16 %v4475, %v4473
        %v4630 = vpack.c.b16 %v4478, %v4476
        %v4631 = vpack.c.b16 %v4479, %v4477
        %v4632 = vpack.c.b16 %v4482, %v4480
        %v4633 = vpack.c.b16 %v4483, %v4481
        %v4634 = vpack.c.b16 %v4486, %v4484
        %v4635 = vpack.c.b16 %v4487, %v4485
        %v4636 = vpack.c.b16 %v4490, %v4488
        %v4637 = vpack.c.b16 %v4491, %v4489
        %v4638 = vpack.c.b16 %v4494, %v4492
        %v4639 = vpack.c.b16 %v4495, %v4493
        %v4640 = vpack.c.b16 %v4498, %v4496
        %v4641 = vpack.c.b16 %v4499, %v4497
        %v4642 = vpack.c.b16 %v4502, %v4500
        %v4643 = vpack.c.b16 %v4503, %v4501
        %v4644 = vpack.c.b16 %v4506, %v4504
        %v4645 = vpack.c.b16 %v4507, %v4505
        %v4646 = vpack.c.b16 %v4510, %v4508
        %v4647 = vpack.c.b16 %v4511, %v4509
        %v4648 = vpack.c.b16 %v4514, %v4512
        %v4649 = vpack.c.b16 %v4515, %v4513
        %v4650 = vpack.c.b16 %v4518, %v4516
        %v4651 = vpack.c.b16 %v4519, %v4517
        %v4652 = vpack.c.b16 %v4522, %v4520
        %v4653 = vpack.c.b16 %v4523, %v4521
        %v4654 = vpack.c.b16 %v4526, %v4524
        %v4655 = vpack.c.b16 %v4527, %v4525
        %4784 = vmatprep.subr.bf16.mxu0 %v4529
        %4785 = vmatpush1.bf16.msra.mxu0 %v4528
        %4786 = vmatprep.subr.bf16.mxu0 %v4531
        %4787 = vmatpush1.bf16.msra.mxu0 %v4530
        %4788 = vmatprep.subr.bf16.mxu0 %v4533
        %4789 = vmatpush1.bf16.msra.mxu0 %v4532
        %4790 = vmatprep.subr.bf16.mxu0 %v4535
        %4791 = vmatpush1.bf16.msra.mxu0 %v4534
        %4792 = vmatprep.subr.bf16.mxu0 %v4537
        %4793 = vmatpush1.bf16.msra.mxu0 %v4536
        %4794 = vmatprep.subr.bf16.mxu0 %v4539
        %4795 = vmatpush1.bf16.msra.mxu0 %v4538
        %4796 = vmatprep.subr.bf16.mxu0 %v4541
        %4797 = vmatpush1.bf16.msra.mxu0 %v4540
        %4798 = vmatprep.subr.bf16.mxu0 %v4543
        %4799 = vmatpush1.bf16.msra.mxu0 %v4542
        %4800 = vmatprep.subr.bf16.mxu0 %v4545
        %4801 = vmatpush1.bf16.msra.mxu0 %v4544
        %4802 = vmatprep.subr.bf16.mxu0 %v4547
        %4803 = vmatpush1.bf16.msra.mxu0 %v4546
        %4804 = vmatprep.subr.bf16.mxu0 %v4549
        %4805 = vmatpush1.bf16.msra.mxu0 %v4548
        %4806 = vmatprep.subr.bf16.mxu0 %v4551
        %4807 = vmatpush1.bf16.msra.mxu0 %v4550
        %4808 = vmatprep.subr.bf16.mxu0 %v4553
        %4809 = vmatpush1.bf16.msra.mxu0 %v4552
        %4810 = vmatprep.subr.bf16.mxu0 %v4555
        %4811 = vmatpush1.bf16.msra.mxu0 %v4554
        %4812 = vmatprep.subr.bf16.mxu0 %v4557
        %4813 = vmatpush1.bf16.msra.mxu0 %v4556
        %4814 = vmatprep.subr.bf16.mxu0 %v4559
        %4815 = vmatpush1.bf16.msra.mxu0 %v4558
        %4816 = vmatprep.mubr.bf16.mxu0 %v4117
        %4817 = vmatmul.mubr.bf16.gmra.mrb[0].mxu0 %v4116
        %v4818 = vpop.f32.mrb[0].mxu0
        %v4819 = vadd.f32 %v4137, %v4818
        %v4820 = vpop.f32.mrb[0].mxu0
        %v4821 = vadd.f32 %v4141, %v4820
        %v4822 = vpop.f32.mrb[0].mxu0
        %v4823 = vadd.f32 %v4137, %v4822
        %v4824 = vpop.f32.mrb[0].mxu0
        %v4825 = vadd.f32 %v4141, %v4824
        %4826 = vmatprep.mubr.bf16.mxu0 %v4125
        %4827 = vmatmul.mubr.bf16.gmra.mrb[0].mxu0 %v4124
        %v4828 = vpop.f32.mrb[0].mxu0
        %v4829 = vadd.f32 %v4137, %v4828
        %v4830 = vpop.f32.mrb[0].mxu0
        %v4831 = vadd.f32 %v4141, %v4830
        %v4832 = vpop.f32.mrb[0].mxu0
        %v4833 = vadd.f32 %v4137, %v4832
        %v4834 = vpop.f32.mrb[0].mxu0
        %v4835 = vadd.f32 %v4141, %v4834
        %4836 = vdwg.mxu0
        %4837 = vmatprep.subr.bf16.mxu0 %v4561
        %4838 = vmatpush1.bf16.msra.mxu0 %v4560
        %4839 = vmatprep.subr.bf16.mxu0 %v4563
        %4840 = vmatpush1.bf16.msra.mxu0 %v4562
        %4841 = vmatprep.subr.bf16.mxu0 %v4565
        %4842 = vmatpush1.bf16.msra.mxu0 %v4564
        %4843 = vmatprep.subr.bf16.mxu0 %v4567
        %4844 = vmatpush1.bf16.msra.mxu0 %v4566
        %4845 = vmatprep.subr.bf16.mxu0 %v4569
        %4846 = vmatpush1.bf16.msra.mxu0 %v4568
        %4847 = vmatprep.subr.bf16.mxu0 %v4571
        %4848 = vmatpush1.bf16.msra.mxu0 %v4570
        %4849 = vmatprep.subr.bf16.mxu0 %v4573
        %4850 = vmatpush1.bf16.msra.mxu0 %v4572
        %4851 = vmatprep.subr.bf16.mxu0 %v4575
        %4852 = vmatpush1.bf16.msra.mxu0 %v4574
        %4853 = vmatprep.subr.bf16.mxu0 %v4577
        %4854 = vmatpush1.bf16.msra.mxu0 %v4576
        %4855 = vmatprep.subr.bf16.mxu0 %v4579
        %4856 = vmatpush1.bf16.msra.mxu0 %v4578
        %4857 = vmatprep.subr.bf16.mxu0 %v4581
        %4858 = vmatpush1.bf16.msra.mxu0 %v4580
        %4859 = vmatprep.subr.bf16.mxu0 %v4583
        %4860 = vmatpush1.bf16.msra.mxu0 %v4582
        %4861 = vmatprep.subr.bf16.mxu0 %v4585
        %4862 = vmatpush1.bf16.msra.mxu0 %v4584
        %4863 = vmatprep.subr.bf16.mxu0 %v4587
        %4864 = vmatpush1.bf16.msra.mxu0 %v4586
        %4865 = vmatprep.subr.bf16.mxu0 %v4589
        %4866 = vmatpush1.bf16.msra.mxu0 %v4588
        %4867 = vmatprep.subr.bf16.mxu0 %v4591
        %4868 = vmatpush1.bf16.msra.mxu0 %v4590
        %4869 = vmatprep.mubr.bf16.mxu0 %v4119
        %4870 = vmatmul.mubr.bf16.gmra.mrb[0].mxu0 %v4118
        %v4871 = vpop.f32.mrb[0].mxu0
        %v4872 = vadd.f32 %v4819, %v4871
        %v4873 = vpop.f32.mrb[0].mxu0
        %v4874 = vadd.f32 %v4821, %v4873
        %v4875 = vpop.f32.mrb[0].mxu0
        %v4876 = vadd.f32 %v4823, %v4875
        %v4877 = vpop.f32.mrb[0].mxu0
        %v4878 = vadd.f32 %v4825, %v4877
        %4879 = vmatprep.mubr.bf16.mxu0 %v4127
        %4880 = vmatmul.mubr.bf16.gmra.mrb[0].mxu0 %v4126
        %v4881 = vpop.f32.mrb[0].mxu0
        %v4882 = vadd.f32 %v4829, %v4881
        %v4883 = vpop.f32.mrb[0].mxu0
        %v4884 = vadd.f32 %v4831, %v4883
        %v4885 = vpop.f32.mrb[0].mxu0
        %v4886 = vadd.f32 %v4833, %v4885
        %v4887 = vpop.f32.mrb[0].mxu0
        %v4888 = vadd.f32 %v4835, %v4887
        %4889 = vdwg.mxu0
        %4890 = vmatprep.subr.bf16.mxu0 %v4593
        %4891 = vmatpush1.bf16.msra.mxu0 %v4592
        %4892 = vmatprep.subr.bf16.mxu0 %v4595
        %4893 = vmatpush1.bf16.msra.mxu0 %v4594
        %4894 = vmatprep.subr.bf16.mxu0 %v4597
        %4895 = vmatpush1.bf16.msra.mxu0 %v4596
        %4896 = vmatprep.subr.bf16.mxu0 %v4599
        %4897 = vmatpush1.bf16.msra.mxu0 %v4598
        %4898 = vmatprep.subr.bf16.mxu0 %v4601
        %4899 = vmatpush1.bf16.msra.mxu0 %v4600
        %4900 = vmatprep.subr.bf16.mxu0 %v4603
        %4901 = vmatpush1.bf16.msra.mxu0 %v4602
        %4902 = vmatprep.subr.bf16.mxu0 %v4605
        %4903 = vmatpush1.bf16.msra.mxu0 %v4604
        %4904 = vmatprep.subr.bf16.mxu0 %v4607
        %4905 = vmatpush1.bf16.msra.mxu0 %v4606
        %4906 = vmatprep.subr.bf16.mxu0 %v4609
        %4907 = vmatpush1.bf16.msra.mxu0 %v4608
        %4908 = vmatprep.subr.bf16.mxu0 %v4611
        %4909 = vmatpush1.bf16.msra.mxu0 %v4610
        %4910 = vmatprep.subr.bf16.mxu0 %v4613
        %4911 = vmatpush1.bf16.msra.mxu0 %v4612
        %4912 = vmatprep.subr.bf16.mxu0 %v4615
        %4913 = vmatpush1.bf16.msra.mxu0 %v4614
        %4914 = vmatprep.subr.bf16.mxu0 %v4617
        %4915 = vmatpush1.bf16.msra.mxu0 %v4616
        %4916 = vmatprep.subr.bf16.mxu0 %v4619
        %4917 = vmatpush1.bf16.msra.mxu0 %v4618
        %4918 = vmatprep.subr.bf16.mxu0 %v4621
        %4919 = vmatpush1.bf16.msra.mxu0 %v4620
        %4920 = vmatprep.subr.bf16.mxu0 %v4623
        %4921 = vmatpush1.bf16.msra.mxu0 %v4622
        %4922 = vmatprep.mubr.bf16.mxu0 %v4121
        %4923 = vmatmul.mubr.bf16.gmra.mrb[0].mxu0 %v4120
        %v4924 = vpop.f32.mrb[0].mxu0
        %v4925 = vadd.f32 %v4872, %v4924
        %v4926 = vpop.f32.mrb[0].mxu0
        %v4927 = vadd.f32 %v4874, %v4926
        %v4928 = vpop.f32.mrb[0].mxu0
        %v4929 = vadd.f32 %v4876, %v4928
        %v4930 = vpop.f32.mrb[0].mxu0
        %v4931 = vadd.f32 %v4878, %v4930
        %4932 = vmatprep.mubr.bf16.mxu0 %v4129
        %4933 = vmatmul.mubr.bf16.gmra.mrb[0].mxu0 %v4128
        %v4934 = vpop.f32.mrb[0].mxu0
        %v4935 = vadd.f32 %v4882, %v4934
        %v4936 = vpop.f32.mrb[0].mxu0
        %v4937 = vadd.f32 %v4884, %v4936
        %v4938 = vpop.f32.mrb[0].mxu0
        %v4939 = vadd.f32 %v4886, %v4938
        %v4940 = vpop.f32.mrb[0].mxu0
        %v4941 = vadd.f32 %v4888, %v4940
        %4942 = vdwg.mxu0
        %4943 = vmatprep.subr.bf16.mxu0 %v4625
        %4944 = vmatpush1.bf16.msra.mxu0 %v4624
        %4945 = vmatprep.subr.bf16.mxu0 %v4627
        %4946 = vmatpush1.bf16.msra.mxu0 %v4626
        %4947 = vmatprep.subr.bf16.mxu0 %v4629
        %4948 = vmatpush1.bf16.msra.mxu0 %v4628
        %4949 = vmatprep.subr.bf16.mxu0 %v4631
        %4950 = vmatpush1.bf16.msra.mxu0 %v4630
        %4951 = vmatprep.subr.bf16.mxu0 %v4633
        %4952 = vmatpush1.bf16.msra.mxu0 %v4632
        %4953 = vmatprep.subr.bf16.mxu0 %v4635
        %4954 = vmatpush1.bf16.msra.mxu0 %v4634
        %4955 = vmatprep.subr.bf16.mxu0 %v4637
        %4956 = vmatpush1.bf16.msra.mxu0 %v4636
        %4957 = vmatprep.subr.bf16.mxu0 %v4639
        %4958 = vmatpush1.bf16.msra.mxu0 %v4638
        %4959 = vmatprep.subr.bf16.mxu0 %v4641
        %4960 = vmatpush1.bf16.msra.mxu0 %v4640
        %4961 = vmatprep.subr.bf16.mxu0 %v4643
        %4962 = vmatpush1.bf16.msra.mxu0 %v4642
        %4963 = vmatprep.subr.bf16.mxu0 %v4645
        %4964 = vmatpush1.bf16.msra.mxu0 %v4644
        %4965 = vmatprep.subr.bf16.mxu0 %v4647
        %4966 = vmatpush1.bf16.msra.mxu0 %v4646
        %4967 = vmatprep.subr.bf16.mxu0 %v4649
        %4968 = vmatpush1.bf16.msra.mxu0 %v4648
        %4969 = vmatprep.subr.bf16.mxu0 %v4651
        %4970 = vmatpush1.bf16.msra.mxu0 %v4650
        %4971 = vmatprep.subr.bf16.mxu0 %v4653
        %4972 = vmatpush1.bf16.msra.mxu0 %v4652
        %4973 = vmatprep.subr.bf16.mxu0 %v4655
        %4974 = vmatpush1.bf16.msra.mxu0 %v4654
        %4975 = vmatprep.mubr.bf16.mxu0 %v4123
        %4976 = vmatmul.mubr.bf16.gmra.mrb[0].mxu0 %v4122
        %v4977 = vpop.f32.mrb[0].mxu0
        %v4978 = vadd.f32 %v4925, %v4977
        %v4979 = vpop.f32.mrb[0].mxu0
        %v4980 = vadd.f32 %v4927, %v4979
        %v4981 = vpop.f32.mrb[0].mxu0
        %v4982 = vadd.f32 %v4929, %v4981
        %v4983 = vpop.f32.mrb[0].mxu0
        %v4984 = vadd.f32 %v4931, %v4983
        %4985 = vmatprep.mubr.bf16.mxu0 %v4131
        %4986 = vmatmul.mubr.bf16.gmra.mrb[0].mxu0 %v4130
        %v4987 = vpop.f32.mrb[0].mxu0
        %v4988 = vadd.f32 %v4935, %v4987
        %v4989 = vpop.f32.mrb[0].mxu0
        %v4990 = vadd.f32 %v4937, %v4989
        %v4991 = vpop.f32.mrb[0].mxu0
        %v4992 = vadd.f32 %v4939, %v4991
        %v4993 = vpop.f32.mrb[0].mxu0
        %v4994 = vadd.f32 %v4941, %v4993
        %4995 = vdwg.mxu0
        %v4996 = vmul.f32 %v4978, 0.5
        %v4997 = vmul.f32 %v4980, 0.5
        %v4998 = vmul.f32 %v4982, 0.5
        %v4999 = vmul.f32 %v4984, 0.5
        %v5000 = vmul.f32 %v4988, 0.5
        %v5001 = vmul.f32 %v4990, 0.5
        %v5002 = vmul.f32 %v4992, 0.5
        %v5003 = vmul.f32 %v4994, 0.5
        %v5004 = vmul.f32 %v4978, 0.70710677
        %v5005 = vmul.f32 %v4980, 0.70710677
        %v5006 = vmul.f32 %v4982, 0.70710677
        %v5007 = vmul.f32 %v4984, 0.70710677
        %v5008 = vmul.f32 %v4988, 0.70710677
        %v5009 = vmul.f32 %v4990, 0.70710677
        %v5010 = vmul.f32 %v4992, 0.70710677
        %v5011 = vmul.f32 %v4994, 0.70710677
        %v5012 = vand.u32 2147483647, %v5004
        %v5013 = vand.u32 2147483647, %v5005
        %v5014 = vand.u32 2147483647, %v5006
        %v5015 = vand.u32 2147483647, %v5007
        %v5016 = vand.u32 2147483647, %v5008
        %v5017 = vand.u32 2147483647, %v5009
        %v5018 = vand.u32 2147483647, %v5010
        %v5019 = vand.u32 2147483647, %v5011
        %v5020 = vmul.f32 %v5012, 0.3275911
        %v5021 = vmul.f32 %v5013, 0.3275911
        %v5022 = vmul.f32 %v5014, 0.3275911
        %v5023 = vmul.f32 %v5015, 0.3275911
        %v5024 = vmul.f32 %v5016, 0.3275911
        %v5025 = vmul.f32 %v5017, 0.3275911
        %v5026 = vmul.f32 %v5018, 0.3275911
        %v5027 = vmul.f32 %v5019, 0.3275911
        %v5028 = vadd.f32 %v5020, 1.0
        %v5029 = vadd.f32 %v5021, 1.0
        %v5030 = vadd.f32 %v5022, 1.0
        %v5031 = vadd.f32 %v5023, 1.0
        %v5032 = vadd.f32 %v5024, 1.0
        %v5033 = vadd.f32 %v5025, 1.0
        %v5034 = vadd.f32 %v5026, 1.0
        %v5035 = vadd.f32 %v5027, 1.0
        %v5036 = vrcp.pop %v5028
        %v5037 = vmul.f32 1.0, %v5036
        %v5038 = vrcp.pop %v5029
        %v5039 = vmul.f32 1.0, %v5038
        %v5040 = vrcp.pop %v5030
        %v5041 = vmul.f32 1.0, %v5040
        %v5042 = vrcp.pop %v5031
        %v5043 = vmul.f32 1.0, %v5042
        %v5044 = vrcp.pop %v5032
        %v5045 = vmul.f32 1.0, %v5044
        %v5046 = vrcp.pop %v5033
        %v5047 = vmul.f32 1.0, %v5046
        %v5048 = vrcp.pop %v5034
        %v5049 = vmul.f32 1.0, %v5048
        %v5050 = vrcp.pop %v5035
        %v5051 = vmul.f32 1.0, %v5050
        %v5052 = vmul.f32 %v5037, 1.0614054
        %v5053 = vmul.f32 %v5039, 1.0614054
        %v5054 = vmul.f32 %v5041, 1.0614054
        %v5055 = vmul.f32 %v5043, 1.0614054
        %v5056 = vmul.f32 %v5045, 1.0614054
        %v5057 = vmul.f32 %v5047, 1.0614054
        %v5058 = vmul.f32 %v5049, 1.0614054
        %v5059 = vmul.f32 %v5051, 1.0614054
        %v5060 = vadd.f32 %v5052, -1.4531521
        %v5061 = vadd.f32 %v5053, -1.4531521
        %v5062 = vadd.f32 %v5054, -1.4531521
        %v5063 = vadd.f32 %v5055, -1.4531521
        %v5064 = vadd.f32 %v5056, -1.4531521
        %v5065 = vadd.f32 %v5057, -1.4531521
        %v5066 = vadd.f32 %v5058, -1.4531521
        %v5067 = vadd.f32 %v5059, -1.4531521
        %v5068 = vmul.f32 %v5060, %v5037
        %v5069 = vmul.f32 %v5061, %v5039
        %v5070 = vmul.f32 %v5062, %v5041
        %v5071 = vmul.f32 %v5063, %v5043
        %v5072 = vmul.f32 %v5064, %v5045
        %v5073 = vmul.f32 %v5065, %v5047
        %v5074 = vmul.f32 %v5066, %v5049
        %v5075 = vmul.f32 %v5067, %v5051
        %v5076 = vadd.f32 %v5068, 1.4214138
        %v5077 = vadd.f32 %v5069, 1.4214138
        %v5078 = vadd.f32 %v5070, 1.4214138
        %v5079 = vadd.f32 %v5071, 1.4214138
        %v5080 = vadd.f32 %v5072, 1.4214138
        %v5081 = vadd.f32 %v5073, 1.4214138
        %v5082 = vadd.f32 %v5074, 1.4214138
        %v5083 = vadd.f32 %v5075, 1.4214138
        %v5084 = vmul.f32 %v5076, %v5037
        %v5085 = vmul.f32 %v5077, %v5039
        %v5086 = vmul.f32 %v5078, %v5041
        %v5087 = vmul.f32 %v5079, %v5043
        %v5088 = vmul.f32 %v5080, %v5045
        %v5089 = vmul.f32 %v5081, %v5047
        %v5090 = vmul.f32 %v5082, %v5049
        %v5091 = vmul.f32 %v5083, %v5051
        %v5092 = vadd.f32 %v5084, -0.28449672
        %v5093 = vadd.f32 %v5085, -0.28449672
        %v5094 = vadd.f32 %v5086, -0.28449672
        %v5095 = vadd.f32 %v5087, -0.28449672
        %v5096 = vadd.f32 %v5088, -0.28449672
        %v5097 = vadd.f32 %v5089, -0.28449672
        %v5098 = vadd.f32 %v5090, -0.28449672
        %v5099 = vadd.f32 %v5091, -0.28449672
        %v5100 = vmul.f32 %v5092, %v5037
        %v5101 = vmul.f32 %v5093, %v5039
        %v5102 = vmul.f32 %v5094, %v5041
        %v5103 = vmul.f32 %v5095, %v5043
        %v5104 = vmul.f32 %v5096, %v5045
        %v5105 = vmul.f32 %v5097, %v5047
        %v5106 = vmul.f32 %v5098, %v5049
        %v5107 = vmul.f32 %v5099, %v5051
        %v5108 = vadd.f32 %v5100, 0.2548296
        %v5109 = vadd.f32 %v5101, 0.2548296
        %v5110 = vadd.f32 %v5102, 0.2548296
        %v5111 = vadd.f32 %v5103, 0.2548296
        %v5112 = vadd.f32 %v5104, 0.2548296
        %v5113 = vadd.f32 %v5105, 0.2548296
        %v5114 = vadd.f32 %v5106, 0.2548296
        %v5115 = vadd.f32 %v5107, 0.2548296
        %v5116 = vmul.f32 %v5108, %v5037
        %v5117 = vmul.f32 %v5109, %v5039
        %v5118 = vmul.f32 %v5110, %v5041
        %v5119 = vmul.f32 %v5111, %v5043
        %v5120 = vmul.f32 %v5112, %v5045
        %v5121 = vmul.f32 %v5113, %v5047
        %v5122 = vmul.f32 %v5114, %v5049
        %v5123 = vmul.f32 %v5115, %v5051
        %v5124 = vsub.f32 0.0, %v5012
        %v5125 = vsub.f32 0.0, %v5013
        %v5126 = vsub.f32 0.0, %v5014
        %v5127 = vsub.f32 0.0, %v5015
        %v5128 = vsub.f32 0.0, %v5016
        %v5129 = vsub.f32 0.0, %v5017
        %v5130 = vsub.f32 0.0, %v5018
        %v5131 = vsub.f32 0.0, %v5019
        %v5132 = vmul.f32 %v5124, %v5012
        %v5133 = vmul.f32 %v5125, %v5013
        %v5134 = vmul.f32 %v5126, %v5014
        %v5135 = vmul.f32 %v5127, %v5015
        %v5136 = vmul.f32 %v5128, %v5016
        %v5137 = vmul.f32 %v5129, %v5017
        %v5138 = vmul.f32 %v5130, %v5018
        %v5139 = vmul.f32 %v5131, %v5019
        %v5140 = vmul.f32 %v5132, 1.442695
        %v5141 = vpow.pop %v5140
        %v5142 = vmul.f32 %v5133, 1.442695
        %v5143 = vpow.pop %v5142
        %v5144 = vmul.f32 %v5134, 1.442695
        %v5145 = vpow.pop %v5144
        %v5146 = vmul.f32 %v5135, 1.442695
        %v5147 = vpow.pop %v5146
        %v5148 = vmul.f32 %v5136, 1.442695
        %v5149 = vpow.pop %v5148
        %v5150 = vmul.f32 %v5137, 1.442695
        %v5151 = vpow.pop %v5150
        %v5152 = vmul.f32 %v5138, 1.442695
        %v5153 = vpow.pop %v5152
        %v5154 = vmul.f32 %v5139, 1.442695
        %v5155 = vpow.pop %v5154
        %v5156 = vmul.f32 %v5116, %v5141
        %v5157 = vmul.f32 %v5117, %v5143
        %v5158 = vmul.f32 %v5118, %v5145
        %v5159 = vmul.f32 %v5119, %v5147
        %v5160 = vmul.f32 %v5120, %v5149
        %v5161 = vmul.f32 %v5121, %v5151
        %v5162 = vmul.f32 %v5122, %v5153
        %v5163 = vmul.f32 %v5123, %v5155
        %v5164 = vsub.f32 1.0, %v5156
        %v5165 = vsub.f32 1.0, %v5157
        %v5166 = vsub.f32 1.0, %v5158
        %v5167 = vsub.f32 1.0, %v5159
        %v5168 = vsub.f32 1.0, %v5160
        %v5169 = vsub.f32 1.0, %v5161
        %v5170 = vsub.f32 1.0, %v5162
        %v5171 = vsub.f32 1.0, %v5163
        %vm5172 = vcmp.lt.f32.partialorder %v5004, 0.0
        %vm5173 = vcmp.lt.f32.partialorder %v5005, 0.0
        %vm5174 = vcmp.lt.f32.partialorder %v5006, 0.0
        %vm5175 = vcmp.lt.f32.partialorder %v5007, 0.0
        %vm5176 = vcmp.lt.f32.partialorder %v5008, 0.0
        %vm5177 = vcmp.lt.f32.partialorder %v5009, 0.0
        %vm5178 = vcmp.lt.f32.partialorder %v5010, 0.0
        %vm5179 = vcmp.lt.f32.partialorder %v5011, 0.0
        %v5180 = vsub.f32 0.0, %v5164
        %v5181 = vsub.f32 0.0, %v5165
        %v5182 = vsub.f32 0.0, %v5166
        %v5183 = vsub.f32 0.0, %v5167
        %v5184 = vsub.f32 0.0, %v5168
        %v5185 = vsub.f32 0.0, %v5169
        %v5186 = vsub.f32 0.0, %v5170
        %v5187 = vsub.f32 0.0, %v5171
        %v5188 = vsel %vm5172, %v5180, %v5164
        %v5189 = vsel %vm5173, %v5181, %v5165
        %v5190 = vsel %vm5174, %v5182, %v5166
        %v5191 = vsel %vm5175, %v5183, %v5167
        %v5192 = vsel %vm5176, %v5184, %v5168
        %v5193 = vsel %vm5177, %v5185, %v5169
        %v5194 = vsel %vm5178, %v5186, %v5170
        %v5195 = vsel %vm5179, %v5187, %v5171
        %v5196 = vadd.f32 %v5188, 1.0
        %v5197 = vadd.f32 %v5189, 1.0
        %v5198 = vadd.f32 %v5190, 1.0
        %v5199 = vadd.f32 %v5191, 1.0
        %v5200 = vadd.f32 %v5192, 1.0
        %v5201 = vadd.f32 %v5193, 1.0
        %v5202 = vadd.f32 %v5194, 1.0
        %v5203 = vadd.f32 %v5195, 1.0
        %v5204 = vmul.f32 %v4996, %v5196
        %v5205 = vmul.f32 %v4997, %v5197
        %v5206 = vmul.f32 %v4998, %v5198
        %v5207 = vmul.f32 %v4999, %v5199
        %v5208 = vmul.f32 %v5000, %v5200
        %v5209 = vmul.f32 %v5001, %v5201
        %v5210 = vmul.f32 %v5002, %v5202
        %v5211 = vmul.f32 %v5003, %v5203
        %v5212 = vadd.f32 %v1986, %v5204
        %v5213 = vadd.f32 %v1987, %v5205
        %v5214 = vadd.f32 %v1988, %v5206
        %v5215 = vadd.f32 %v1989, %v5207
        %v5216 = vadd.f32 %v1990, %v5208
        %v5217 = vadd.f32 %v1991, %v5209
        %v5218 = vadd.f32 %v1992, %v5210
        %v5219 = vadd.f32 %v1993, %v5211
        %5220 = vst [vmem:[%s489] sm:$0xff] %v5212
        %5221 = vst [vmem:[%s489 + $0x8] sm:$0xff] %v5213
        %5222 = vst [vmem:[%s489 + $0x10] sm:$0xff] %v5214
        %5223 = vst [vmem:[%s489 + $0x18] sm:$0xff] %v5215
        %5224 = vst [vmem:[%s489 + $0x20] sm:$0xff] %v5216
        %5225 = vst [vmem:[%s489 + $0x28] sm:$0xff] %v5217
        %5226 = vst [vmem:[%s489 + $0x30] sm:$0xff] %v5218
        %5227 = vst [vmem:[%s489 + $0x38] sm:$0xff] %v5219
        %s5228 = sand.u32 %s296, 1
        %s5229 = scalar_lea.sflag [#allocation4], %s5228
        %s5230 = sand.u32 %s296, 1
        %s5231 = smul.addr %s5230, 64
        %s5232 = scalar_lea.vmem [#allocation11], %s5231
        // Predicated region
        $region89: #{tpu_custom_call.1} parent=67 // pred_check
          %p5233 = pneg %p306
        $region90: #{tpu_custom_call.1} parent=67 // pred_check_branch
          %5235 = sbr.rel (%p5233) target = $region92
        $region91: #{tpu_custom_call.1} parent=67 // pred_region
          %s5237 = ssub.s32 1024, 1024
          %5238 = vsyncadd %s5229, %s5237
          %s5239 = smul.addr %s31, 8
          %s5240 = smul.addr %s5239, 128
          %s5241 = scalar_lea.hbm %s12, %s5240
          %s5242 = sshll.u32 %s5232, 4
          %s5243 = int_to_ptr.vmem [resolvable:$true] %s5242
          %5248 = dma.vmem_to_hbm [thread:$0]  %s5243, 1024, %s5241, %s5229, 256, 256, 16
        $region92: #{tpu_custom_call.1} parent=67 // pred_fallthru
          _
      $region68: #{tpu_custom_call.1} parent=5 // pred_fallthru
        _
      %p5249 = scmp.le.s32.totalorder 2, %s26
      // Predicated region
      $region93: #{tpu_custom_call.1} parent=5 // pred_check
        %p5250 = pneg %p5249
      $region94: #{tpu_custom_call.1} parent=5 // pred_check_branch
        %5252 = sbr.rel (%p5250) target = $region96
      $region95: #{tpu_custom_call.1} parent=5 // pred_region
        %s5253 = ssub.s32 %s26, 2
        // Predicated region
        $region97: #{tpu_custom_call.1} parent=95 // pred_check
          %p5254 = pneg %p312
        $region98: #{tpu_custom_call.1} parent=95 // pred_check_branch
          %5256 = sbr.rel (%p5254) target = $region100
        $region99: #{tpu_custom_call.1} parent=95 // pred_region
          %s5257 = sand.u32 %s297, 1
          %s5258 = scalar_lea.sflag [#allocation4], %s5257
          %s5259 = sand.u32 %s297, 1
          %s5260 = smul.addr %s5259, 64
          %s5261 = scalar_lea.vmem [#allocation11], %s5260
          %5262 = dma.done %s5258, 1024
        $region100: #{tpu_custom_call.1} parent=95 // pred_fallthru
          _
      $region96: #{tpu_custom_call.1} parent=5 // pred_fallthru
        _
    $region6: #{tpu_custom_call.1} parent=1 // loop_footer
      %s30 = sadd.s32 1, %s26
    $region7: #{tpu_custom_call.1} parent=1 // loop_footer_branch
      %25 = sbr.rel target = $region3
    $region8: #{tpu_custom_call.1} parent=1 // loop_exit
      _
    %5263 = vsyncpa [#allocation3], 1
    %s5264 = scalar_lea.sflag [#allocation3], 1
    %5265 = vsyncpa %s5264, 1
    %5266 = vsyncpa [#allocation6], 1
    %5267 = vsyncpa [#allocation9], 1
    %5268 = vsyncpa [#allocation4], 1
    %s5269 = scalar_lea.sflag [#allocation4], 1
    %5270 = vsyncpa %s5269, 1

</llo_original>
